<compile_context>
chip_gen: v7x
topology: tpu7x:2x2x1
jax: 0.10.0
libtpu: 0.0.40
codegen_flags: <defaults>
</compile_context>

<pallas_src>
import jax
import jax.numpy as jnp
from jax.experimental import pallas as pl
from jax.experimental.pallas import tpu as pltpu


def _sigmoid(z):
    # logistic(x) == 0.5 * (tanh(x/2) + 1): one tanh EUP push + cheap VPU ops.
    return 0.5 * jnp.tanh(0.5 * z) + 0.5


def _make_kernel(T, Tc, B, Hp):
    """Builds the kernel with static T / Tc / B / Hp closed over."""
    G = 4 * Hp
    needs_mask = (T % Tc) != 0

    def kernel(x_ref,        # (B, Tc, D)   bf16/f32  (per-chunk, pipelined)
               w_ih_ref,     # (D, 4*Hp)               (resident: constant index)
               w_hh_ref,     # (Hp, 4*Hp)              (resident)
               b_ref,        # (1, 4*Hp)    f32        (b_ih + b_hh, per-gate padded)
               w_fc_ref,     # (Hp, C)
               b_fc_ref,     # (1, C)       f32
               out_ref,      # (B, C)       f32
               h_sc,         # (B, Hp)      f32 scratch, persists across chunks
               c_sc):        # (B, Hp)      f32 scratch
        chunk = pl.program_id(0)

        @pl.when(chunk == 0)
        def _init():
            h_sc[...] = jnp.zeros_like(h_sc)
            c_sc[...] = jnp.zeros_like(c_sc)

        # ---- input projection for the whole chunk, hoisted out of the loop ----
        x_blk = x_ref[...]                                    # (B, Tc, D)
        D = x_blk.shape[-1]
        xproj = jnp.dot(x_blk.reshape(B * Tc, D), w_ih_ref[...],
                        preferred_element_type=jnp.float32)   # one big MXU matmul
        xproj = xproj.reshape(B, Tc, G) + b_ref[...]          # bias folded in once
        # Static per-step slices; they do not depend on h/c (off the critical path).
        x_steps = [xproj[:, s, :] for s in range(Tc)]         # each (B, 4*Hp) f32

        # ---- recurrence: invariant loads hoisted, loop fully unrolled ----
        w_hh = w_hh_ref[...]
        h = h_sc[...]
        c = c_sc[...]
        for s in range(Tc):
            gates = x_steps[s] + jnp.dot(h.astype(w_hh.dtype), w_hh,
                                         preferred_element_type=jnp.float32)
            # Lane-aligned gate slices (each slot is Hp = multiple of 128 lanes).
            i_g = _sigmoid(gates[:, 0 * Hp:1 * Hp])
            f_g = _sigmoid(gates[:, 1 * Hp:2 * Hp])
            g_g = jnp.tanh(gates[:, 2 * Hp:3 * Hp])
            o_g = _sigmoid(gates[:, 3 * Hp:4 * Hp])
            c_new = f_g * c + i_g * g_g
            h_new = o_g * jnp.tanh(c_new)
            if needs_mask:
                valid = (chunk * Tc + s) < T
                c = jnp.where(valid, c_new, c)
                h = jnp.where(valid, h_new, h)
            else:
                c, h = c_new, h_new
        h_sc[...] = h
        c_sc[...] = c

        # ---- fc + sigmoid on the last hidden state ----
        @pl.when(chunk == pl.num_programs(0) - 1)
        def _finalize():
            logits = jnp.dot(h.astype(w_fc_ref.dtype), w_fc_ref[...],
                             preferred_element_type=jnp.float32) + b_fc_ref[...]
            out_ref[...] = _sigmoid(logits)

    return kernel


def lstm_net_forward(x, params, *, time_chunk=16, matmul_dtype=jnp.bfloat16):
    """x: (B, T, D) float32 (batch_first). Returns (B, num_classes) float32."""
    B, T, D = x.shape
    H = params["w_hh"].shape[1]
    C = params["w_fc"].shape[0]
    f32 = jnp.float32

    # Lane-align each gate: pad H up to a multiple of 128.  Zero padding is exact:
    # padded gate columns give sigmoid(0)/tanh(0), which keep padded h/c lanes at 0.
    Hp = ((H + 127) // 128) * 128
    G = 4 * Hp

    # Time-chunk granularity follows the sublane packing of the matmul dtype
    # (8 for f32, 16 for bf16, 32 for 8-bit), so the x BlockSpec stays tile-aligned.
    sub = 32 // jnp.dtype(matmul_dtype).itemsize
    Tc = max(sub, sub * (int(time_chunk) // sub))
    n_chunks = -(-T // Tc)
    T_pad = n_chunks * Tc

    def pad_gate_cols(w):                       # (R, 4H) -> (R, 4*Hp), per-gate pad
        R = w.shape[0]
        w4 = w.reshape(R, 4, H)
        w4 = jnp.pad(w4, ((0, 0), (0, 0), (0, Hp - H)))
        return w4.reshape(R, G)

    # Weights pre-transposed to (in, out) layouts; matmul operands cast to bf16,
    # biases / state stay f32.
    w_ih_t = pad_gate_cols(params["w_ih"].T.astype(f32)).astype(matmul_dtype)      # (D, 4Hp)
    w_hh_t = pad_gate_cols(
        jnp.pad(params["w_hh"].T.astype(f32), ((0, Hp - H), (0, 0)))
    ).astype(matmul_dtype)                                                          # (Hp, 4Hp)
    b = pad_gate_cols((params["b_ih"] + params["b_hh"]).astype(f32).reshape(1, 4 * H))  # (1, 4Hp)
    w_fc_t = jnp.pad(params["w_fc"].T.astype(f32),
                     ((0, Hp - H), (0, 0))).astype(matmul_dtype)                    # (Hp, C)
    b_fc = params["b_fc"].astype(f32).reshape(1, C)

    x_p = x.astype(matmul_dtype)
    if T_pad != T:
        x_p = jnp.pad(x_p, ((0, 0), (0, T_pad - T), (0, 0)))   # tail masked in-kernel

    kernel = _make_kernel(T, Tc, B, Hp)

    grid_spec = pltpu.PrefetchScalarGridSpec(
        num_scalar_prefetch=0,
        grid=(n_chunks,),
        in_specs=[
            pl.BlockSpec((B, Tc, D), lambda t: (0, t, 0)),     # x: chunked over T
            pl.BlockSpec((D, G), lambda t: (0, 0)),            # W_ih^T
            pl.BlockSpec((Hp, G), lambda t: (0, 0)),           # W_hh^T
            pl.BlockSpec((1, G), lambda t: (0, 0)),            # b_ih + b_hh
            pl.BlockSpec((Hp, C), lambda t: (0, 0)),            # W_fc^T
            pl.BlockSpec((1, C), lambda t: (0, 0)),             # b_fc
        ],
        out_specs=pl.BlockSpec((B, C), lambda t: (0, 0)),
        scratch_shapes=[
            pltpu.VMEM((B, Hp), jnp.float32),   # h state (persists across chunks)
            pltpu.VMEM((B, Hp), jnp.float32),   # c state
        ],
    )

    return pl.pallas_call(
        kernel,
        out_shape=jax.ShapeDtypeStruct((B, C), jnp.float32),
        grid_spec=grid_spec,
        compiler_params=pltpu.CompilerParams(
            dimension_semantics=("arbitrary",)),   # recurrence over T is serial
    )(x_p, w_ih_t, w_hh_t, b, w_fc_t, b_fc)


def _lstm_ref(x, params):
    """Pure-JAX f32 reference (mirrors the PyTorch Net forward)."""
    B, T, _ = x.shape
    H = params["w_hh"].shape[1]
    w_ih_t, w_hh_t = params["w_ih"].T, params["w_hh"].T
    b = params["b_ih"] + params["b_hh"]
    h = jnp.zeros((B, H), jnp.float32)
    c = jnp.zeros((B, H), jnp.float32)
    for t in range(T):
        g = x[:, t, :] @ w_ih_t + h @ w_hh_t + b
        i = jax.nn.sigmoid(g[:, :H])
        f = jax.nn.sigmoid(g[:, H:2 * H])
        gg = jnp.tanh(g[:, 2 * H:3 * H])
        o = jax.nn.sigmoid(g[:, 3 * H:])
        c = f * c + i * gg
        h = o * jnp.tanh(c)
    return jax.nn.sigmoid(h @ params["w_fc"].T + params["b_fc"])


def init_params(key, input_size, hidden_size, num_classes):
    """Deterministic init mirroring PyTorch's uniform(-1/sqrt(H), 1/sqrt(H))."""
    ks = jax.random.split(key, 6)
    bound = 1.0 / jnp.sqrt(jnp.float32(hidden_size))
    u = lambda k, shape: jax.random.uniform(k, shape, jnp.float32, -bound, bound)
    return {
        "w_ih": u(ks[0], (4 * hidden_size, input_size)),
        "w_hh": u(ks[1], (4 * hidden_size, hidden_size)),
        "b_ih": u(ks[2], (4 * hidden_size,)),
        "b_hh": u(ks[3], (4 * hidden_size,)),
        "w_fc": u(ks[4], (num_classes, hidden_size)),
        "b_fc": u(ks[5], (num_classes,)),
    }


if __name__ == "__main__":
    B, T, D, H, C = 2, 8, 16, 32, 4   # batch, seq, input_size, hidden_size, num_classes

    key = jax.random.PRNGKey(0)
    k_x, k_p = jax.random.split(key)
    x = jax.random.normal(k_x, (B, T, D), dtype=jnp.float32)
    params = init_params(k_p, D, H, C)

    out = jax.block_until_ready(lstm_net_forward(x, params))
    assert out.shape == (B, C) and out.dtype == jnp.float32

    ref = _lstm_ref(x, params)
    err = float(jnp.max(jnp.abs(out - ref)))
    assert err < 5e-2, f"max |out - ref| = {err}"

    print("KERNEL_OK")
</pallas_src>

<mosaic_0001>
module attributes {stable_mosaic.version = 11 : i64} {
  func.func @kernel(%arg0: i32, %arg1: memref<2x16x16xbf16, #tpu.memory_space<vmem>>, %arg2: memref<16x512xbf16, #tpu.memory_space<vmem>>, %arg3: memref<128x512xbf16, #tpu.memory_space<vmem>>, %arg4: memref<1x512xf32, #tpu.memory_space<vmem>>, %arg5: memref<128x4xbf16, #tpu.memory_space<vmem>>, %arg6: memref<1x4xf32, #tpu.memory_space<vmem>>, %arg7: memref<2x4xf32, #tpu.memory_space<vmem>>, %arg8: memref<2x128xf32, #tpu.memory_space<vmem>>, %arg9: memref<2x128xf32, #tpu.memory_space<vmem>>) attributes {dimension_semantics = [#tpu.dimension_semantics<arbitrary>], iteration_bounds = array<i64: 1>, scalar_prefetch = 0 : i64, scratch_operands = 2 : i64, tpu.core_type = #tpu.core_type<tc>, window_params = [{transform_indices = @transform_0, window_bounds = array<i64: 2, 16, 16>}, {pipeline_mode = #tpu.pipeline_mode<synchronous>, transform_indices = @transform_1, window_bounds = array<i64: 16, 512>}, {pipeline_mode = #tpu.pipeline_mode<synchronous>, transform_indices = @transform_2, window_bounds = array<i64: 128, 512>}, {pipeline_mode = #tpu.pipeline_mode<synchronous>, transform_indices = @transform_3, window_bounds = array<i64: 1, 512>}, {pipeline_mode = #tpu.pipeline_mode<synchronous>, transform_indices = @transform_4, window_bounds = array<i64: 128, 4>}, {pipeline_mode = #tpu.pipeline_mode<synchronous>, transform_indices = @transform_5, window_bounds = array<i64: 1, 4>}, {pipeline_mode = #tpu.pipeline_mode<synchronous>, transform_indices = @transform_6, window_bounds = array<i64: 2, 4>}]} {
    %c0_i32 = arith.constant 0 : i32
    %0 = arith.cmpi eq, %arg0, %c0_i32 : i32
    %1 = arith.extui %0 : i1 to i32
    %c0_i32_0 = arith.constant 0 : i32
    %2 = arith.cmpi ne, %1, %c0_i32_0 : i32
    scf.if %2 {
      %cst_211 = arith.constant 0.000000e+00 : f32
      %676 = vector.broadcast %cst_211 : f32 to vector<2x128xf32>
      %c0_212 = arith.constant 0 : index
      %c0_213 = arith.constant 0 : index
      %677 = vector.load %arg8[%c0_212, %c0_213] : memref<2x128xf32, #tpu.memory_space<vmem>>, vector<2x128xf32>
      tpu.vector_store %arg8[%c0_212, %c0_213], %676 {strides = array<i32>} : memref<2x128xf32, #tpu.memory_space<vmem>>, vector<2x128xf32>,
      %cst_214 = arith.constant 0.000000e+00 : f32
      %678 = vector.broadcast %cst_214 : f32 to vector<2x128xf32>
      %c0_215 = arith.constant 0 : index
      %c0_216 = arith.constant 0 : index
      %679 = vector.load %arg9[%c0_215, %c0_216] : memref<2x128xf32, #tpu.memory_space<vmem>>, vector<2x128xf32>
      tpu.vector_store %arg9[%c0_215, %c0_216], %678 {strides = array<i32>} : memref<2x128xf32, #tpu.memory_space<vmem>>, vector<2x128xf32>,
    } else {
    }
    %c0 = arith.constant 0 : index
    %c0_1 = arith.constant 0 : index
    %c0_2 = arith.constant 0 : index
    %3 = vector.load %arg1[%c0, %c0_1, %c0_2] : memref<2x16x16xbf16, #tpu.memory_space<vmem>>, vector<2x16x16xbf16>
    %4 = vector.shape_cast %3 : vector<2x16x16xbf16> to vector<32x16xbf16>
    %c0_3 = arith.constant 0 : index
    %c0_4 = arith.constant 0 : index
    %5 = vector.load %arg2[%c0_3, %c0_4] : memref<16x512xbf16, #tpu.memory_space<vmem>>, vector<16x512xbf16>
    %cst = arith.constant dense<0.000000e+00> : vector<32x512xf32>
    %6 = tpu.matmul %4, %5, %cst {dimension_numbers = #tpu.dot_dimension_numbers<[1], [0], [0], [1], [0, 0, 1, 1], [], []>} : vector<32x16xbf16>, vector<16x512xbf16>, vector<32x512xf32> -> vector<32x512xf32>
    %7 = vector.shape_cast %6 : vector<32x512xf32> to vector<2x16x512xf32>
    %c0_5 = arith.constant 0 : index
    %c0_6 = arith.constant 0 : index
    %8 = vector.load %arg4[%c0_5, %c0_6] : memref<1x512xf32, #tpu.memory_space<vmem>>, vector<1x512xf32>
    %9 = vector.shape_cast %8 : vector<1x512xf32> to vector<1x1x512xf32>
    %10 = vector.broadcast %9 : vector<1x1x512xf32> to vector<2x16x512xf32>
    %11 = arith.addf %7, %10 : vector<2x16x512xf32>
    %12 = vector.extract_strided_slice %11 {offsets = [0, 0, 0], sizes = [2, 1, 512], strides = [1, 1, 1]} : vector<2x16x512xf32> to vector<2x1x512xf32>
    %13 = vector.shape_cast %12 : vector<2x1x512xf32> to vector<2x512xf32>
    %14 = vector.extract_strided_slice %11 {offsets = [0, 1, 0], sizes = [2, 1, 512], strides = [1, 1, 1]} : vector<2x16x512xf32> to vector<2x1x512xf32>
    %15 = vector.shape_cast %14 : vector<2x1x512xf32> to vector<2x512xf32>
    %16 = vector.extract_strided_slice %11 {offsets = [0, 2, 0], sizes = [2, 1, 512], strides = [1, 1, 1]} : vector<2x16x512xf32> to vector<2x1x512xf32>
    %17 = vector.shape_cast %16 : vector<2x1x512xf32> to vector<2x512xf32>
    %18 = vector.extract_strided_slice %11 {offsets = [0, 3, 0], sizes = [2, 1, 512], strides = [1, 1, 1]} : vector<2x16x512xf32> to vector<2x1x512xf32>
    %19 = vector.shape_cast %18 : vector<2x1x512xf32> to vector<2x512xf32>
    %20 = vector.extract_strided_slice %11 {offsets = [0, 4, 0], sizes = [2, 1, 512], strides = [1, 1, 1]} : vector<2x16x512xf32> to vector<2x1x512xf32>
    %21 = vector.shape_cast %20 : vector<2x1x512xf32> to vector<2x512xf32>
    %22 = vector.extract_strided_slice %11 {offsets = [0, 5, 0], sizes = [2, 1, 512], strides = [1, 1, 1]} : vector<2x16x512xf32> to vector<2x1x512xf32>
    %23 = vector.shape_cast %22 : vector<2x1x512xf32> to vector<2x512xf32>
    %24 = vector.extract_strided_slice %11 {offsets = [0, 6, 0], sizes = [2, 1, 512], strides = [1, 1, 1]} : vector<2x16x512xf32> to vector<2x1x512xf32>
    %25 = vector.shape_cast %24 : vector<2x1x512xf32> to vector<2x512xf32>
    %26 = vector.extract_strided_slice %11 {offsets = [0, 7, 0], sizes = [2, 1, 512], strides = [1, 1, 1]} : vector<2x16x512xf32> to vector<2x1x512xf32>
    %27 = vector.shape_cast %26 : vector<2x1x512xf32> to vector<2x512xf32>
    %28 = vector.extract_strided_slice %11 {offsets = [0, 8, 0], sizes = [2, 1, 512], strides = [1, 1, 1]} : vector<2x16x512xf32> to vector<2x1x512xf32>
    %29 = vector.shape_cast %28 : vector<2x1x512xf32> to vector<2x512xf32>
    %30 = vector.extract_strided_slice %11 {offsets = [0, 9, 0], sizes = [2, 1, 512], strides = [1, 1, 1]} : vector<2x16x512xf32> to vector<2x1x512xf32>
    %31 = vector.shape_cast %30 : vector<2x1x512xf32> to vector<2x512xf32>
    %32 = vector.extract_strided_slice %11 {offsets = [0, 10, 0], sizes = [2, 1, 512], strides = [1, 1, 1]} : vector<2x16x512xf32> to vector<2x1x512xf32>
    %33 = vector.shape_cast %32 : vector<2x1x512xf32> to vector<2x512xf32>
    %34 = vector.extract_strided_slice %11 {offsets = [0, 11, 0], sizes = [2, 1, 512], strides = [1, 1, 1]} : vector<2x16x512xf32> to vector<2x1x512xf32>
    %35 = vector.shape_cast %34 : vector<2x1x512xf32> to vector<2x512xf32>
    %36 = vector.extract_strided_slice %11 {offsets = [0, 12, 0], sizes = [2, 1, 512], strides = [1, 1, 1]} : vector<2x16x512xf32> to vector<2x1x512xf32>
    %37 = vector.shape_cast %36 : vector<2x1x512xf32> to vector<2x512xf32>
    %38 = vector.extract_strided_slice %11 {offsets = [0, 13, 0], sizes = [2, 1, 512], strides = [1, 1, 1]} : vector<2x16x512xf32> to vector<2x1x512xf32>
    %39 = vector.shape_cast %38 : vector<2x1x512xf32> to vector<2x512xf32>
    %40 = vector.extract_strided_slice %11 {offsets = [0, 14, 0], sizes = [2, 1, 512], strides = [1, 1, 1]} : vector<2x16x512xf32> to vector<2x1x512xf32>
    %41 = vector.shape_cast %40 : vector<2x1x512xf32> to vector<2x512xf32>
    %42 = vector.extract_strided_slice %11 {offsets = [0, 15, 0], sizes = [2, 1, 512], strides = [1, 1, 1]} : vector<2x16x512xf32> to vector<2x1x512xf32>
    %43 = vector.shape_cast %42 : vector<2x1x512xf32> to vector<2x512xf32>
    %c0_7 = arith.constant 0 : index
    %c0_8 = arith.constant 0 : index
    %44 = vector.load %arg3[%c0_7, %c0_8] : memref<128x512xbf16, #tpu.memory_space<vmem>>, vector<128x512xbf16>
    %c0_9 = arith.constant 0 : index
    %c0_10 = arith.constant 0 : index
    %45 = vector.load %arg8[%c0_9, %c0_10] : memref<2x128xf32, #tpu.memory_space<vmem>>, vector<2x128xf32>
    %c0_11 = arith.constant 0 : index
    %c0_12 = arith.constant 0 : index
    %46 = vector.load %arg9[%c0_11, %c0_12] : memref<2x128xf32, #tpu.memory_space<vmem>>, vector<2x128xf32>
    %47 = arith.truncf %45 : vector<2x128xf32> to vector<2x128xbf16>
    %cst_13 = arith.constant dense<0.000000e+00> : vector<2x512xf32>
    %48 = tpu.matmul %47, %44, %cst_13 {dimension_numbers = #tpu.dot_dimension_numbers<[1], [0], [0], [1], [0, 0, 1, 1], [], []>} : vector<2x128xbf16>, vector<128x512xbf16>, vector<2x512xf32> -> vector<2x512xf32>
    %49 = arith.addf %13, %48 : vector<2x512xf32>
    %50 = vector.extract_strided_slice %49 {offsets = [0, 0], sizes = [2, 128], strides = [1, 1]} : vector<2x512xf32> to vector<2x128xf32>
    %cst_14 = arith.constant 5.000000e-01 : f32
    %51 = vector.broadcast %cst_14 : f32 to vector<2x128xf32>
    %52 = arith.mulf %51, %50 : vector<2x128xf32>
    %53 = math.tanh %52 : vector<2x128xf32>
    %cst_15 = arith.constant 5.000000e-01 : f32
    %54 = vector.broadcast %cst_15 : f32 to vector<2x128xf32>
    %55 = arith.mulf %54, %53 : vector<2x128xf32>
    %cst_16 = arith.constant 5.000000e-01 : f32
    %56 = vector.broadcast %cst_16 : f32 to vector<2x128xf32>
    %57 = arith.addf %55, %56 : vector<2x128xf32>
    %58 = vector.extract_strided_slice %49 {offsets = [0, 128], sizes = [2, 128], strides = [1, 1]} : vector<2x512xf32> to vector<2x128xf32>
    %cst_17 = arith.constant 5.000000e-01 : f32
    %59 = vector.broadcast %cst_17 : f32 to vector<2x128xf32>
    %60 = arith.mulf %59, %58 : vector<2x128xf32>
    %61 = math.tanh %60 : vector<2x128xf32>
    %cst_18 = arith.constant 5.000000e-01 : f32
    %62 = vector.broadcast %cst_18 : f32 to vector<2x128xf32>
    %63 = arith.mulf %62, %61 : vector<2x128xf32>
    %cst_19 = arith.constant 5.000000e-01 : f32
    %64 = vector.broadcast %cst_19 : f32 to vector<2x128xf32>
    %65 = arith.addf %63, %64 : vector<2x128xf32>
    %66 = vector.extract_strided_slice %49 {offsets = [0, 256], sizes = [2, 128], strides = [1, 1]} : vector<2x512xf32> to vector<2x128xf32>
    %67 = math.tanh %66 : vector<2x128xf32>
    %68 = vector.extract_strided_slice %49 {offsets = [0, 384], sizes = [2, 128], strides = [1, 1]} : vector<2x512xf32> to vector<2x128xf32>
    %cst_20 = arith.constant 5.000000e-01 : f32
    %69 = vector.broadcast %cst_20 : f32 to vector<2x128xf32>
    %70 = arith.mulf %69, %68 : vector<2x128xf32>
    %71 = math.tanh %70 : vector<2x128xf32>
    %cst_21 = arith.constant 5.000000e-01 : f32
    %72 = vector.broadcast %cst_21 : f32 to vector<2x128xf32>
    %73 = arith.mulf %72, %71 : vector<2x128xf32>
    %cst_22 = arith.constant 5.000000e-01 : f32
    %74 = vector.broadcast %cst_22 : f32 to vector<2x128xf32>
    %75 = arith.addf %73, %74 : vector<2x128xf32>
    %76 = arith.mulf %65, %46 : vector<2x128xf32>
    %77 = arith.mulf %57, %67 : vector<2x128xf32>
    %78 = arith.addf %76, %77 : vector<2x128xf32>
    %79 = math.tanh %78 : vector<2x128xf32>
    %80 = arith.mulf %75, %79 : vector<2x128xf32>
    %c16_i32 = arith.constant 16 : i32
    %81 = arith.muli %arg0, %c16_i32 : i32
    %c0_i32_23 = arith.constant 0 : i32
    %82 = arith.addi %81, %c0_i32_23 : i32
    %c8_i32 = arith.constant 8 : i32
    %83 = arith.cmpi slt, %82, %c8_i32 : i32
    %84 = arith.select %83, %78, %46 : vector<2x128xf32>
    %85 = arith.select %83, %80, %45 : vector<2x128xf32>
    %86 = arith.truncf %85 : vector<2x128xf32> to vector<2x128xbf16>
    %cst_24 = arith.constant dense<0.000000e+00> : vector<2x512xf32>
    %87 = tpu.matmul %86, %44, %cst_24 {dimension_numbers = #tpu.dot_dimension_numbers<[1], [0], [0], [1], [0, 0, 1, 1], [], []>} : vector<2x128xbf16>, vector<128x512xbf16>, vector<2x512xf32> -> vector<2x512xf32>
    %88 = arith.addf %15, %87 : vector<2x512xf32>
    %89 = vector.extract_strided_slice %88 {offsets = [0, 0], sizes = [2, 128], strides = [1, 1]} : vector<2x512xf32> to vector<2x128xf32>
    %cst_25 = arith.constant 5.000000e-01 : f32
    %90 = vector.broadcast %cst_25 : f32 to vector<2x128xf32>
    %91 = arith.mulf %90, %89 : vector<2x128xf32>
    %92 = math.tanh %91 : vector<2x128xf32>
    %cst_26 = arith.constant 5.000000e-01 : f32
    %93 = vector.broadcast %cst_26 : f32 to vector<2x128xf32>
    %94 = arith.mulf %93, %92 : vector<2x128xf32>
    %cst_27 = arith.constant 5.000000e-01 : f32
    %95 = vector.broadcast %cst_27 : f32 to vector<2x128xf32>
    %96 = arith.addf %94, %95 : vector<2x128xf32>
    %97 = vector.extract_strided_slice %88 {offsets = [0, 128], sizes = [2, 128], strides = [1, 1]} : vector<2x512xf32> to vector<2x128xf32>
    %cst_28 = arith.constant 5.000000e-01 : f32
    %98 = vector.broadcast %cst_28 : f32 to vector<2x128xf32>
    %99 = arith.mulf %98, %97 : vector<2x128xf32>
    %100 = math.tanh %99 : vector<2x128xf32>
    %cst_29 = arith.constant 5.000000e-01 : f32
    %101 = vector.broadcast %cst_29 : f32 to vector<2x128xf32>
    %102 = arith.mulf %101, %100 : vector<2x128xf32>
    %cst_30 = arith.constant 5.000000e-01 : f32
    %103 = vector.broadcast %cst_30 : f32 to vector<2x128xf32>
    %104 = arith.addf %102, %103 : vector<2x128xf32>
    %105 = vector.extract_strided_slice %88 {offsets = [0, 256], sizes = [2, 128], strides = [1, 1]} : vector<2x512xf32> to vector<2x128xf32>
    %106 = math.tanh %105 : vector<2x128xf32>
    %107 = vector.extract_strided_slice %88 {offsets = [0, 384], sizes = [2, 128], strides = [1, 1]} : vector<2x512xf32> to vector<2x128xf32>
    %cst_31 = arith.constant 5.000000e-01 : f32
    %108 = vector.broadcast %cst_31 : f32 to vector<2x128xf32>
    %109 = arith.mulf %108, %107 : vector<2x128xf32>
    %110 = math.tanh %109 : vector<2x128xf32>
    %cst_32 = arith.constant 5.000000e-01 : f32
    %111 = vector.broadcast %cst_32 : f32 to vector<2x128xf32>
    %112 = arith.mulf %111, %110 : vector<2x128xf32>
    %cst_33 = arith.constant 5.000000e-01 : f32
    %113 = vector.broadcast %cst_33 : f32 to vector<2x128xf32>
    %114 = arith.addf %112, %113 : vector<2x128xf32>
    %115 = arith.mulf %104, %84 : vector<2x128xf32>
    %116 = arith.mulf %96, %106 : vector<2x128xf32>
    %117 = arith.addf %115, %116 : vector<2x128xf32>
    %118 = math.tanh %117 : vector<2x128xf32>
    %119 = arith.mulf %114, %118 : vector<2x128xf32>
    %c16_i32_34 = arith.constant 16 : i32
    %120 = arith.muli %arg0, %c16_i32_34 : i32
    %c1_i32 = arith.constant 1 : i32
    %121 = arith.addi %120, %c1_i32 : i32
    %c8_i32_35 = arith.constant 8 : i32
    %122 = arith.cmpi slt, %121, %c8_i32_35 : i32
    %123 = arith.select %122, %117, %84 : vector<2x128xf32>
    %124 = arith.select %122, %119, %85 : vector<2x128xf32>
    %125 = arith.truncf %124 : vector<2x128xf32> to vector<2x128xbf16>
    %cst_36 = arith.constant dense<0.000000e+00> : vector<2x512xf32>
    %126 = tpu.matmul %125, %44, %cst_36 {dimension_numbers = #tpu.dot_dimension_numbers<[1], [0], [0], [1], [0, 0, 1, 1], [], []>} : vector<2x128xbf16>, vector<128x512xbf16>, vector<2x512xf32> -> vector<2x512xf32>
    %127 = arith.addf %17, %126 : vector<2x512xf32>
    %128 = vector.extract_strided_slice %127 {offsets = [0, 0], sizes = [2, 128], strides = [1, 1]} : vector<2x512xf32> to vector<2x128xf32>
    %cst_37 = arith.constant 5.000000e-01 : f32
    %129 = vector.broadcast %cst_37 : f32 to vector<2x128xf32>
    %130 = arith.mulf %129, %128 : vector<2x128xf32>
    %131 = math.tanh %130 : vector<2x128xf32>
    %cst_38 = arith.constant 5.000000e-01 : f32
    %132 = vector.broadcast %cst_38 : f32 to vector<2x128xf32>
    %133 = arith.mulf %132, %131 : vector<2x128xf32>
    %cst_39 = arith.constant 5.000000e-01 : f32
    %134 = vector.broadcast %cst_39 : f32 to vector<2x128xf32>
    %135 = arith.addf %133, %134 : vector<2x128xf32>
    %136 = vector.extract_strided_slice %127 {offsets = [0, 128], sizes = [2, 128], strides = [1, 1]} : vector<2x512xf32> to vector<2x128xf32>
    %cst_40 = arith.constant 5.000000e-01 : f32
    %137 = vector.broadcast %cst_40 : f32 to vector<2x128xf32>
    %138 = arith.mulf %137, %136 : vector<2x128xf32>
    %139 = math.tanh %138 : vector<2x128xf32>
    %cst_41 = arith.constant 5.000000e-01 : f32
    %140 = vector.broadcast %cst_41 : f32 to vector<2x128xf32>
    %141 = arith.mulf %140, %139 : vector<2x128xf32>
    %cst_42 = arith.constant 5.000000e-01 : f32
    %142 = vector.broadcast %cst_42 : f32 to vector<2x128xf32>
    %143 = arith.addf %141, %142 : vector<2x128xf32>
    %144 = vector.extract_strided_slice %127 {offsets = [0, 256], sizes = [2, 128], strides = [1, 1]} : vector<2x512xf32> to vector<2x128xf32>
    %145 = math.tanh %144 : vector<2x128xf32>
    %146 = vector.extract_strided_slice %127 {offsets = [0, 384], sizes = [2, 128], strides = [1, 1]} : vector<2x512xf32> to vector<2x128xf32>
    %cst_43 = arith.constant 5.000000e-01 : f32
    %147 = vector.broadcast %cst_43 : f32 to vector<2x128xf32>
    %148 = arith.mulf %147, %146 : vector<2x128xf32>
    %149 = math.tanh %148 : vector<2x128xf32>
    %cst_44 = arith.constant 5.000000e-01 : f32
    %150 = vector.broadcast %cst_44 : f32 to vector<2x128xf32>
    %151 = arith.mulf %150, %149 : vector<2x128xf32>
    %cst_45 = arith.constant 5.000000e-01 : f32
    %152 = vector.broadcast %cst_45 : f32 to vector<2x128xf32>
    %153 = arith.addf %151, %152 : vector<2x128xf32>
    %154 = arith.mulf %143, %123 : vector<2x128xf32>
    %155 = arith.mulf %135, %145 : vector<2x128xf32>
    %156 = arith.addf %154, %155 : vector<2x128xf32>
    %157 = math.tanh %156 : vector<2x128xf32>
    %158 = arith.mulf %153, %157 : vector<2x128xf32>
    %c16_i32_46 = arith.constant 16 : i32
    %159 = arith.muli %arg0, %c16_i32_46 : i32
    %c2_i32 = arith.constant 2 : i32
    %160 = arith.addi %159, %c2_i32 : i32
    %c8_i32_47 = arith.constant 8 : i32
    %161 = arith.cmpi slt, %160, %c8_i32_47 : i32
    %162 = arith.select %161, %156, %123 : vector<2x128xf32>
    %163 = arith.select %161, %158, %124 : vector<2x128xf32>
    %164 = arith.truncf %163 : vector<2x128xf32> to vector<2x128xbf16>
    %cst_48 = arith.constant dense<0.000000e+00> : vector<2x512xf32>
    %165 = tpu.matmul %164, %44, %cst_48 {dimension_numbers = #tpu.dot_dimension_numbers<[1], [0], [0], [1], [0, 0, 1, 1], [], []>} : vector<2x128xbf16>, vector<128x512xbf16>, vector<2x512xf32> -> vector<2x512xf32>
    %166 = arith.addf %19, %165 : vector<2x512xf32>
    %167 = vector.extract_strided_slice %166 {offsets = [0, 0], sizes = [2, 128], strides = [1, 1]} : vector<2x512xf32> to vector<2x128xf32>
    %cst_49 = arith.constant 5.000000e-01 : f32
    %168 = vector.broadcast %cst_49 : f32 to vector<2x128xf32>
    %169 = arith.mulf %168, %167 : vector<2x128xf32>
    %170 = math.tanh %169 : vector<2x128xf32>
    %cst_50 = arith.constant 5.000000e-01 : f32
    %171 = vector.broadcast %cst_50 : f32 to vector<2x128xf32>
    %172 = arith.mulf %171, %170 : vector<2x128xf32>
    %cst_51 = arith.constant 5.000000e-01 : f32
    %173 = vector.broadcast %cst_51 : f32 to vector<2x128xf32>
    %174 = arith.addf %172, %173 : vector<2x128xf32>
    %175 = vector.extract_strided_slice %166 {offsets = [0, 128], sizes = [2, 128], strides = [1, 1]} : vector<2x512xf32> to vector<2x128xf32>
    %cst_52 = arith.constant 5.000000e-01 : f32
    %176 = vector.broadcast %cst_52 : f32 to vector<2x128xf32>
    %177 = arith.mulf %176, %175 : vector<2x128xf32>
    %178 = math.tanh %177 : vector<2x128xf32>
    %cst_53 = arith.constant 5.000000e-01 : f32
    %179 = vector.broadcast %cst_53 : f32 to vector<2x128xf32>
    %180 = arith.mulf %179, %178 : vector<2x128xf32>
    %cst_54 = arith.constant 5.000000e-01 : f32
    %181 = vector.broadcast %cst_54 : f32 to vector<2x128xf32>
    %182 = arith.addf %180, %181 : vector<2x128xf32>
    %183 = vector.extract_strided_slice %166 {offsets = [0, 256], sizes = [2, 128], strides = [1, 1]} : vector<2x512xf32> to vector<2x128xf32>
    %184 = math.tanh %183 : vector<2x128xf32>
    %185 = vector.extract_strided_slice %166 {offsets = [0, 384], sizes = [2, 128], strides = [1, 1]} : vector<2x512xf32> to vector<2x128xf32>
    %cst_55 = arith.constant 5.000000e-01 : f32
    %186 = vector.broadcast %cst_55 : f32 to vector<2x128xf32>
    %187 = arith.mulf %186, %185 : vector<2x128xf32>
    %188 = math.tanh %187 : vector<2x128xf32>
    %cst_56 = arith.constant 5.000000e-01 : f32
    %189 = vector.broadcast %cst_56 : f32 to vector<2x128xf32>
    %190 = arith.mulf %189, %188 : vector<2x128xf32>
    %cst_57 = arith.constant 5.000000e-01 : f32
    %191 = vector.broadcast %cst_57 : f32 to vector<2x128xf32>
    %192 = arith.addf %190, %191 : vector<2x128xf32>
    %193 = arith.mulf %182, %162 : vector<2x128xf32>
    %194 = arith.mulf %174, %184 : vector<2x128xf32>
    %195 = arith.addf %193, %194 : vector<2x128xf32>
    %196 = math.tanh %195 : vector<2x128xf32>
    %197 = arith.mulf %192, %196 : vector<2x128xf32>
    %c16_i32_58 = arith.constant 16 : i32
    %198 = arith.muli %arg0, %c16_i32_58 : i32
    %c3_i32 = arith.constant 3 : i32
    %199 = arith.addi %198, %c3_i32 : i32
    %c8_i32_59 = arith.constant 8 : i32
    %200 = arith.cmpi slt, %199, %c8_i32_59 : i32
    %201 = arith.select %200, %195, %162 : vector<2x128xf32>
    %202 = arith.select %200, %197, %163 : vector<2x128xf32>
    %203 = arith.truncf %202 : vector<2x128xf32> to vector<2x128xbf16>
    %cst_60 = arith.constant dense<0.000000e+00> : vector<2x512xf32>
    %204 = tpu.matmul %203, %44, %cst_60 {dimension_numbers = #tpu.dot_dimension_numbers<[1], [0], [0], [1], [0, 0, 1, 1], [], []>} : vector<2x128xbf16>, vector<128x512xbf16>, vector<2x512xf32> -> vector<2x512xf32>
    %205 = arith.addf %21, %204 : vector<2x512xf32>
    %206 = vector.extract_strided_slice %205 {offsets = [0, 0], sizes = [2, 128], strides = [1, 1]} : vector<2x512xf32> to vector<2x128xf32>
    %cst_61 = arith.constant 5.000000e-01 : f32
    %207 = vector.broadcast %cst_61 : f32 to vector<2x128xf32>
    %208 = arith.mulf %207, %206 : vector<2x128xf32>
    %209 = math.tanh %208 : vector<2x128xf32>
    %cst_62 = arith.constant 5.000000e-01 : f32
    %210 = vector.broadcast %cst_62 : f32 to vector<2x128xf32>
    %211 = arith.mulf %210, %209 : vector<2x128xf32>
    %cst_63 = arith.constant 5.000000e-01 : f32
    %212 = vector.broadcast %cst_63 : f32 to vector<2x128xf32>
    %213 = arith.addf %211, %212 : vector<2x128xf32>
    %214 = vector.extract_strided_slice %205 {offsets = [0, 128], sizes = [2, 128], strides = [1, 1]} : vector<2x512xf32> to vector<2x128xf32>
    %cst_64 = arith.constant 5.000000e-01 : f32
    %215 = vector.broadcast %cst_64 : f32 to vector<2x128xf32>
    %216 = arith.mulf %215, %214 : vector<2x128xf32>
    %217 = math.tanh %216 : vector<2x128xf32>
    %cst_65 = arith.constant 5.000000e-01 : f32
    %218 = vector.broadcast %cst_65 : f32 to vector<2x128xf32>
    %219 = arith.mulf %218, %217 : vector<2x128xf32>
    %cst_66 = arith.constant 5.000000e-01 : f32
    %220 = vector.broadcast %cst_66 : f32 to vector<2x128xf32>
    %221 = arith.addf %219, %220 : vector<2x128xf32>
    %222 = vector.extract_strided_slice %205 {offsets = [0, 256], sizes = [2, 128], strides = [1, 1]} : vector<2x512xf32> to vector<2x128xf32>
    %223 = math.tanh %222 : vector<2x128xf32>
    %224 = vector.extract_strided_slice %205 {offsets = [0, 384], sizes = [2, 128], strides = [1, 1]} : vector<2x512xf32> to vector<2x128xf32>
    %cst_67 = arith.constant 5.000000e-01 : f32
    %225 = vector.broadcast %cst_67 : f32 to vector<2x128xf32>
    %226 = arith.mulf %225, %224 : vector<2x128xf32>
    %227 = math.tanh %226 : vector<2x128xf32>
    %cst_68 = arith.constant 5.000000e-01 : f32
    %228 = vector.broadcast %cst_68 : f32 to vector<2x128xf32>
    %229 = arith.mulf %228, %227 : vector<2x128xf32>
    %cst_69 = arith.constant 5.000000e-01 : f32
    %230 = vector.broadcast %cst_69 : f32 to vector<2x128xf32>
    %231 = arith.addf %229, %230 : vector<2x128xf32>
    %232 = arith.mulf %221, %201 : vector<2x128xf32>
    %233 = arith.mulf %213, %223 : vector<2x128xf32>
    %234 = arith.addf %232, %233 : vector<2x128xf32>
    %235 = math.tanh %234 : vector<2x128xf32>
    %236 = arith.mulf %231, %235 : vector<2x128xf32>
    %c16_i32_70 = arith.constant 16 : i32
    %237 = arith.muli %arg0, %c16_i32_70 : i32
    %c4_i32 = arith.constant 4 : i32
    %238 = arith.addi %237, %c4_i32 : i32
    %c8_i32_71 = arith.constant 8 : i32
    %239 = arith.cmpi slt, %238, %c8_i32_71 : i32
    %240 = arith.select %239, %234, %201 : vector<2x128xf32>
    %241 = arith.select %239, %236, %202 : vector<2x128xf32>
    %242 = arith.truncf %241 : vector<2x128xf32> to vector<2x128xbf16>
    %cst_72 = arith.constant dense<0.000000e+00> : vector<2x512xf32>
    %243 = tpu.matmul %242, %44, %cst_72 {dimension_numbers = #tpu.dot_dimension_numbers<[1], [0], [0], [1], [0, 0, 1, 1], [], []>} : vector<2x128xbf16>, vector<128x512xbf16>, vector<2x512xf32> -> vector<2x512xf32>
    %244 = arith.addf %23, %243 : vector<2x512xf32>
    %245 = vector.extract_strided_slice %244 {offsets = [0, 0], sizes = [2, 128], strides = [1, 1]} : vector<2x512xf32> to vector<2x128xf32>
    %cst_73 = arith.constant 5.000000e-01 : f32
    %246 = vector.broadcast %cst_73 : f32 to vector<2x128xf32>
    %247 = arith.mulf %246, %245 : vector<2x128xf32>
    %248 = math.tanh %247 : vector<2x128xf32>
    %cst_74 = arith.constant 5.000000e-01 : f32
    %249 = vector.broadcast %cst_74 : f32 to vector<2x128xf32>
    %250 = arith.mulf %249, %248 : vector<2x128xf32>
    %cst_75 = arith.constant 5.000000e-01 : f32
    %251 = vector.broadcast %cst_75 : f32 to vector<2x128xf32>
    %252 = arith.addf %250, %251 : vector<2x128xf32>
    %253 = vector.extract_strided_slice %244 {offsets = [0, 128], sizes = [2, 128], strides = [1, 1]} : vector<2x512xf32> to vector<2x128xf32>
    %cst_76 = arith.constant 5.000000e-01 : f32
    %254 = vector.broadcast %cst_76 : f32 to vector<2x128xf32>
    %255 = arith.mulf %254, %253 : vector<2x128xf32>
    %256 = math.tanh %255 : vector<2x128xf32>
    %cst_77 = arith.constant 5.000000e-01 : f32
    %257 = vector.broadcast %cst_77 : f32 to vector<2x128xf32>
    %258 = arith.mulf %257, %256 : vector<2x128xf32>
    %cst_78 = arith.constant 5.000000e-01 : f32
    %259 = vector.broadcast %cst_78 : f32 to vector<2x128xf32>
    %260 = arith.addf %258, %259 : vector<2x128xf32>
    %261 = vector.extract_strided_slice %244 {offsets = [0, 256], sizes = [2, 128], strides = [1, 1]} : vector<2x512xf32> to vector<2x128xf32>
    %262 = math.tanh %261 : vector<2x128xf32>
    %263 = vector.extract_strided_slice %244 {offsets = [0, 384], sizes = [2, 128], strides = [1, 1]} : vector<2x512xf32> to vector<2x128xf32>
    %cst_79 = arith.constant 5.000000e-01 : f32
    %264 = vector.broadcast %cst_79 : f32 to vector<2x128xf32>
    %265 = arith.mulf %264, %263 : vector<2x128xf32>
    %266 = math.tanh %265 : vector<2x128xf32>
    %cst_80 = arith.constant 5.000000e-01 : f32
    %267 = vector.broadcast %cst_80 : f32 to vector<2x128xf32>
    %268 = arith.mulf %267, %266 : vector<2x128xf32>
    %cst_81 = arith.constant 5.000000e-01 : f32
    %269 = vector.broadcast %cst_81 : f32 to vector<2x128xf32>
    %270 = arith.addf %268, %269 : vector<2x128xf32>
    %271 = arith.mulf %260, %240 : vector<2x128xf32>
    %272 = arith.mulf %252, %262 : vector<2x128xf32>
    %273 = arith.addf %271, %272 : vector<2x128xf32>
    %274 = math.tanh %273 : vector<2x128xf32>
    %275 = arith.mulf %270, %274 : vector<2x128xf32>
    %c16_i32_82 = arith.constant 16 : i32
    %276 = arith.muli %arg0, %c16_i32_82 : i32
    %c5_i32 = arith.constant 5 : i32
    %277 = arith.addi %276, %c5_i32 : i32
    %c8_i32_83 = arith.constant 8 : i32
    %278 = arith.cmpi slt, %277, %c8_i32_83 : i32
    %279 = arith.select %278, %273, %240 : vector<2x128xf32>
    %280 = arith.select %278, %275, %241 : vector<2x128xf32>
    %281 = arith.truncf %280 : vector<2x128xf32> to vector<2x128xbf16>
    %cst_84 = arith.constant dense<0.000000e+00> : vector<2x512xf32>
    %282 = tpu.matmul %281, %44, %cst_84 {dimension_numbers = #tpu.dot_dimension_numbers<[1], [0], [0], [1], [0, 0, 1, 1], [], []>} : vector<2x128xbf16>, vector<128x512xbf16>, vector<2x512xf32> -> vector<2x512xf32>
    %283 = arith.addf %25, %282 : vector<2x512xf32>
    %284 = vector.extract_strided_slice %283 {offsets = [0, 0], sizes = [2, 128], strides = [1, 1]} : vector<2x512xf32> to vector<2x128xf32>
    %cst_85 = arith.constant 5.000000e-01 : f32
    %285 = vector.broadcast %cst_85 : f32 to vector<2x128xf32>
    %286 = arith.mulf %285, %284 : vector<2x128xf32>
    %287 = math.tanh %286 : vector<2x128xf32>
    %cst_86 = arith.constant 5.000000e-01 : f32
    %288 = vector.broadcast %cst_86 : f32 to vector<2x128xf32>
    %289 = arith.mulf %288, %287 : vector<2x128xf32>
    %cst_87 = arith.constant 5.000000e-01 : f32
    %290 = vector.broadcast %cst_87 : f32 to vector<2x128xf32>
    %291 = arith.addf %289, %290 : vector<2x128xf32>
    %292 = vector.extract_strided_slice %283 {offsets = [0, 128], sizes = [2, 128], strides = [1, 1]} : vector<2x512xf32> to vector<2x128xf32>
    %cst_88 = arith.constant 5.000000e-01 : f32
    %293 = vector.broadcast %cst_88 : f32 to vector<2x128xf32>
    %294 = arith.mulf %293, %292 : vector<2x128xf32>
    %295 = math.tanh %294 : vector<2x128xf32>
    %cst_89 = arith.constant 5.000000e-01 : f32
    %296 = vector.broadcast %cst_89 : f32 to vector<2x128xf32>
    %297 = arith.mulf %296, %295 : vector<2x128xf32>
    %cst_90 = arith.constant 5.000000e-01 : f32
    %298 = vector.broadcast %cst_90 : f32 to vector<2x128xf32>
    %299 = arith.addf %297, %298 : vector<2x128xf32>
    %300 = vector.extract_strided_slice %283 {offsets = [0, 256], sizes = [2, 128], strides = [1, 1]} : vector<2x512xf32> to vector<2x128xf32>
    %301 = math.tanh %300 : vector<2x128xf32>
    %302 = vector.extract_strided_slice %283 {offsets = [0, 384], sizes = [2, 128], strides = [1, 1]} : vector<2x512xf32> to vector<2x128xf32>
    %cst_91 = arith.constant 5.000000e-01 : f32
    %303 = vector.broadcast %cst_91 : f32 to vector<2x128xf32>
    %304 = arith.mulf %303, %302 : vector<2x128xf32>
    %305 = math.tanh %304 : vector<2x128xf32>
    %cst_92 = arith.constant 5.000000e-01 : f32
    %306 = vector.broadcast %cst_92 : f32 to vector<2x128xf32>
    %307 = arith.mulf %306, %305 : vector<2x128xf32>
    %cst_93 = arith.constant 5.000000e-01 : f32
    %308 = vector.broadcast %cst_93 : f32 to vector<2x128xf32>
    %309 = arith.addf %307, %308 : vector<2x128xf32>
    %310 = arith.mulf %299, %279 : vector<2x128xf32>
    %311 = arith.mulf %291, %301 : vector<2x128xf32>
    %312 = arith.addf %310, %311 : vector<2x128xf32>
    %313 = math.tanh %312 : vector<2x128xf32>
    %314 = arith.mulf %309, %313 : vector<2x128xf32>
    %c16_i32_94 = arith.constant 16 : i32
    %315 = arith.muli %arg0, %c16_i32_94 : i32
    %c6_i32 = arith.constant 6 : i32
    %316 = arith.addi %315, %c6_i32 : i32
    %c8_i32_95 = arith.constant 8 : i32
    %317 = arith.cmpi slt, %316, %c8_i32_95 : i32
    %318 = arith.select %317, %312, %279 : vector<2x128xf32>
    %319 = arith.select %317, %314, %280 : vector<2x128xf32>
    %320 = arith.truncf %319 : vector<2x128xf32> to vector<2x128xbf16>
    %cst_96 = arith.constant dense<0.000000e+00> : vector<2x512xf32>
    %321 = tpu.matmul %320, %44, %cst_96 {dimension_numbers = #tpu.dot_dimension_numbers<[1], [0], [0], [1], [0, 0, 1, 1], [], []>} : vector<2x128xbf16>, vector<128x512xbf16>, vector<2x512xf32> -> vector<2x512xf32>
    %322 = arith.addf %27, %321 : vector<2x512xf32>
    %323 = vector.extract_strided_slice %322 {offsets = [0, 0], sizes = [2, 128], strides = [1, 1]} : vector<2x512xf32> to vector<2x128xf32>
    %cst_97 = arith.constant 5.000000e-01 : f32
    %324 = vector.broadcast %cst_97 : f32 to vector<2x128xf32>
    %325 = arith.mulf %324, %323 : vector<2x128xf32>
    %326 = math.tanh %325 : vector<2x128xf32>
    %cst_98 = arith.constant 5.000000e-01 : f32
    %327 = vector.broadcast %cst_98 : f32 to vector<2x128xf32>
    %328 = arith.mulf %327, %326 : vector<2x128xf32>
    %cst_99 = arith.constant 5.000000e-01 : f32
    %329 = vector.broadcast %cst_99 : f32 to vector<2x128xf32>
    %330 = arith.addf %328, %329 : vector<2x128xf32>
    %331 = vector.extract_strided_slice %322 {offsets = [0, 128], sizes = [2, 128], strides = [1, 1]} : vector<2x512xf32> to vector<2x128xf32>
    %cst_100 = arith.constant 5.000000e-01 : f32
    %332 = vector.broadcast %cst_100 : f32 to vector<2x128xf32>
    %333 = arith.mulf %332, %331 : vector<2x128xf32>
    %334 = math.tanh %333 : vector<2x128xf32>
    %cst_101 = arith.constant 5.000000e-01 : f32
    %335 = vector.broadcast %cst_101 : f32 to vector<2x128xf32>
    %336 = arith.mulf %335, %334 : vector<2x128xf32>
    %cst_102 = arith.constant 5.000000e-01 : f32
    %337 = vector.broadcast %cst_102 : f32 to vector<2x128xf32>
    %338 = arith.addf %336, %337 : vector<2x128xf32>
    %339 = vector.extract_strided_slice %322 {offsets = [0, 256], sizes = [2, 128], strides = [1, 1]} : vector<2x512xf32> to vector<2x128xf32>
    %340 = math.tanh %339 : vector<2x128xf32>
    %341 = vector.extract_strided_slice %322 {offsets = [0, 384], sizes = [2, 128], strides = [1, 1]} : vector<2x512xf32> to vector<2x128xf32>
    %cst_103 = arith.constant 5.000000e-01 : f32
    %342 = vector.broadcast %cst_103 : f32 to vector<2x128xf32>
    %343 = arith.mulf %342, %341 : vector<2x128xf32>
    %344 = math.tanh %343 : vector<2x128xf32>
    %cst_104 = arith.constant 5.000000e-01 : f32
    %345 = vector.broadcast %cst_104 : f32 to vector<2x128xf32>
    %346 = arith.mulf %345, %344 : vector<2x128xf32>
    %cst_105 = arith.constant 5.000000e-01 : f32
    %347 = vector.broadcast %cst_105 : f32 to vector<2x128xf32>
    %348 = arith.addf %346, %347 : vector<2x128xf32>
    %349 = arith.mulf %338, %318 : vector<2x128xf32>
    %350 = arith.mulf %330, %340 : vector<2x128xf32>
    %351 = arith.addf %349, %350 : vector<2x128xf32>
    %352 = math.tanh %351 : vector<2x128xf32>
    %353 = arith.mulf %348, %352 : vector<2x128xf32>
    %c16_i32_106 = arith.constant 16 : i32
    %354 = arith.muli %arg0, %c16_i32_106 : i32
    %c7_i32 = arith.constant 7 : i32
    %355 = arith.addi %354, %c7_i32 : i32
    %c8_i32_107 = arith.constant 8 : i32
    %356 = arith.cmpi slt, %355, %c8_i32_107 : i32
    %357 = arith.select %356, %351, %318 : vector<2x128xf32>
    %358 = arith.select %356, %353, %319 : vector<2x128xf32>
    %359 = arith.truncf %358 : vector<2x128xf32> to vector<2x128xbf16>
    %cst_108 = arith.constant dense<0.000000e+00> : vector<2x512xf32>
    %360 = tpu.matmul %359, %44, %cst_108 {dimension_numbers = #tpu.dot_dimension_numbers<[1], [0], [0], [1], [0, 0, 1, 1], [], []>} : vector<2x128xbf16>, vector<128x512xbf16>, vector<2x512xf32> -> vector<2x512xf32>
    %361 = arith.addf %29, %360 : vector<2x512xf32>
    %362 = vector.extract_strided_slice %361 {offsets = [0, 0], sizes = [2, 128], strides = [1, 1]} : vector<2x512xf32> to vector<2x128xf32>
    %cst_109 = arith.constant 5.000000e-01 : f32
    %363 = vector.broadcast %cst_109 : f32 to vector<2x128xf32>
    %364 = arith.mulf %363, %362 : vector<2x128xf32>
    %365 = math.tanh %364 : vector<2x128xf32>
    %cst_110 = arith.constant 5.000000e-01 : f32
    %366 = vector.broadcast %cst_110 : f32 to vector<2x128xf32>
    %367 = arith.mulf %366, %365 : vector<2x128xf32>
    %cst_111 = arith.constant 5.000000e-01 : f32
    %368 = vector.broadcast %cst_111 : f32 to vector<2x128xf32>
    %369 = arith.addf %367, %368 : vector<2x128xf32>
    %370 = vector.extract_strided_slice %361 {offsets = [0, 128], sizes = [2, 128], strides = [1, 1]} : vector<2x512xf32> to vector<2x128xf32>
    %cst_112 = arith.constant 5.000000e-01 : f32
    %371 = vector.broadcast %cst_112 : f32 to vector<2x128xf32>
    %372 = arith.mulf %371, %370 : vector<2x128xf32>
    %373 = math.tanh %372 : vector<2x128xf32>
    %cst_113 = arith.constant 5.000000e-01 : f32
    %374 = vector.broadcast %cst_113 : f32 to vector<2x128xf32>
    %375 = arith.mulf %374, %373 : vector<2x128xf32>
    %cst_114 = arith.constant 5.000000e-01 : f32
    %376 = vector.broadcast %cst_114 : f32 to vector<2x128xf32>
    %377 = arith.addf %375, %376 : vector<2x128xf32>
    %378 = vector.extract_strided_slice %361 {offsets = [0, 256], sizes = [2, 128], strides = [1, 1]} : vector<2x512xf32> to vector<2x128xf32>
    %379 = math.tanh %378 : vector<2x128xf32>
    %380 = vector.extract_strided_slice %361 {offsets = [0, 384], sizes = [2, 128], strides = [1, 1]} : vector<2x512xf32> to vector<2x128xf32>
    %cst_115 = arith.constant 5.000000e-01 : f32
    %381 = vector.broadcast %cst_115 : f32 to vector<2x128xf32>
    %382 = arith.mulf %381, %380 : vector<2x128xf32>
    %383 = math.tanh %382 : vector<2x128xf32>
    %cst_116 = arith.constant 5.000000e-01 : f32
    %384 = vector.broadcast %cst_116 : f32 to vector<2x128xf32>
    %385 = arith.mulf %384, %383 : vector<2x128xf32>
    %cst_117 = arith.constant 5.000000e-01 : f32
    %386 = vector.broadcast %cst_117 : f32 to vector<2x128xf32>
    %387 = arith.addf %385, %386 : vector<2x128xf32>
    %388 = arith.mulf %377, %357 : vector<2x128xf32>
    %389 = arith.mulf %369, %379 : vector<2x128xf32>
    %390 = arith.addf %388, %389 : vector<2x128xf32>
    %391 = math.tanh %390 : vector<2x128xf32>
    %392 = arith.mulf %387, %391 : vector<2x128xf32>
    %c16_i32_118 = arith.constant 16 : i32
    %393 = arith.muli %arg0, %c16_i32_118 : i32
    %c8_i32_119 = arith.constant 8 : i32
    %394 = arith.addi %393, %c8_i32_119 : i32
    %c8_i32_120 = arith.constant 8 : i32
    %395 = arith.cmpi slt, %394, %c8_i32_120 : i32
    %396 = arith.select %395, %390, %357 : vector<2x128xf32>
    %397 = arith.select %395, %392, %358 : vector<2x128xf32>
    %398 = arith.truncf %397 : vector<2x128xf32> to vector<2x128xbf16>
    %cst_121 = arith.constant dense<0.000000e+00> : vector<2x512xf32>
    %399 = tpu.matmul %398, %44, %cst_121 {dimension_numbers = #tpu.dot_dimension_numbers<[1], [0], [0], [1], [0, 0, 1, 1], [], []>} : vector<2x128xbf16>, vector<128x512xbf16>, vector<2x512xf32> -> vector<2x512xf32>
    %400 = arith.addf %31, %399 : vector<2x512xf32>
    %401 = vector.extract_strided_slice %400 {offsets = [0, 0], sizes = [2, 128], strides = [1, 1]} : vector<2x512xf32> to vector<2x128xf32>
    %cst_122 = arith.constant 5.000000e-01 : f32
    %402 = vector.broadcast %cst_122 : f32 to vector<2x128xf32>
    %403 = arith.mulf %402, %401 : vector<2x128xf32>
    %404 = math.tanh %403 : vector<2x128xf32>
    %cst_123 = arith.constant 5.000000e-01 : f32
    %405 = vector.broadcast %cst_123 : f32 to vector<2x128xf32>
    %406 = arith.mulf %405, %404 : vector<2x128xf32>
    %cst_124 = arith.constant 5.000000e-01 : f32
    %407 = vector.broadcast %cst_124 : f32 to vector<2x128xf32>
    %408 = arith.addf %406, %407 : vector<2x128xf32>
    %409 = vector.extract_strided_slice %400 {offsets = [0, 128], sizes = [2, 128], strides = [1, 1]} : vector<2x512xf32> to vector<2x128xf32>
    %cst_125 = arith.constant 5.000000e-01 : f32
    %410 = vector.broadcast %cst_125 : f32 to vector<2x128xf32>
    %411 = arith.mulf %410, %409 : vector<2x128xf32>
    %412 = math.tanh %411 : vector<2x128xf32>
    %cst_126 = arith.constant 5.000000e-01 : f32
    %413 = vector.broadcast %cst_126 : f32 to vector<2x128xf32>
    %414 = arith.mulf %413, %412 : vector<2x128xf32>
    %cst_127 = arith.constant 5.000000e-01 : f32
    %415 = vector.broadcast %cst_127 : f32 to vector<2x128xf32>
    %416 = arith.addf %414, %415 : vector<2x128xf32>
    %417 = vector.extract_strided_slice %400 {offsets = [0, 256], sizes = [2, 128], strides = [1, 1]} : vector<2x512xf32> to vector<2x128xf32>
    %418 = math.tanh %417 : vector<2x128xf32>
    %419 = vector.extract_strided_slice %400 {offsets = [0, 384], sizes = [2, 128], strides = [1, 1]} : vector<2x512xf32> to vector<2x128xf32>
    %cst_128 = arith.constant 5.000000e-01 : f32
    %420 = vector.broadcast %cst_128 : f32 to vector<2x128xf32>
    %421 = arith.mulf %420, %419 : vector<2x128xf32>
    %422 = math.tanh %421 : vector<2x128xf32>
    %cst_129 = arith.constant 5.000000e-01 : f32
    %423 = vector.broadcast %cst_129 : f32 to vector<2x128xf32>
    %424 = arith.mulf %423, %422 : vector<2x128xf32>
    %cst_130 = arith.constant 5.000000e-01 : f32
    %425 = vector.broadcast %cst_130 : f32 to vector<2x128xf32>
    %426 = arith.addf %424, %425 : vector<2x128xf32>
    %427 = arith.mulf %416, %396 : vector<2x128xf32>
    %428 = arith.mulf %408, %418 : vector<2x128xf32>
    %429 = arith.addf %427, %428 : vector<2x128xf32>
    %430 = math.tanh %429 : vector<2x128xf32>
    %431 = arith.mulf %426, %430 : vector<2x128xf32>
    %c16_i32_131 = arith.constant 16 : i32
    %432 = arith.muli %arg0, %c16_i32_131 : i32
    %c9_i32 = arith.constant 9 : i32
    %433 = arith.addi %432, %c9_i32 : i32
    %c8_i32_132 = arith.constant 8 : i32
    %434 = arith.cmpi slt, %433, %c8_i32_132 : i32
    %435 = arith.select %434, %429, %396 : vector<2x128xf32>
    %436 = arith.select %434, %431, %397 : vector<2x128xf32>
    %437 = arith.truncf %436 : vector<2x128xf32> to vector<2x128xbf16>
    %cst_133 = arith.constant dense<0.000000e+00> : vector<2x512xf32>
    %438 = tpu.matmul %437, %44, %cst_133 {dimension_numbers = #tpu.dot_dimension_numbers<[1], [0], [0], [1], [0, 0, 1, 1], [], []>} : vector<2x128xbf16>, vector<128x512xbf16>, vector<2x512xf32> -> vector<2x512xf32>
    %439 = arith.addf %33, %438 : vector<2x512xf32>
    %440 = vector.extract_strided_slice %439 {offsets = [0, 0], sizes = [2, 128], strides = [1, 1]} : vector<2x512xf32> to vector<2x128xf32>
    %cst_134 = arith.constant 5.000000e-01 : f32
    %441 = vector.broadcast %cst_134 : f32 to vector<2x128xf32>
    %442 = arith.mulf %441, %440 : vector<2x128xf32>
    %443 = math.tanh %442 : vector<2x128xf32>
    %cst_135 = arith.constant 5.000000e-01 : f32
    %444 = vector.broadcast %cst_135 : f32 to vector<2x128xf32>
    %445 = arith.mulf %444, %443 : vector<2x128xf32>
    %cst_136 = arith.constant 5.000000e-01 : f32
    %446 = vector.broadcast %cst_136 : f32 to vector<2x128xf32>
    %447 = arith.addf %445, %446 : vector<2x128xf32>
    %448 = vector.extract_strided_slice %439 {offsets = [0, 128], sizes = [2, 128], strides = [1, 1]} : vector<2x512xf32> to vector<2x128xf32>
    %cst_137 = arith.constant 5.000000e-01 : f32
    %449 = vector.broadcast %cst_137 : f32 to vector<2x128xf32>
    %450 = arith.mulf %449, %448 : vector<2x128xf32>
    %451 = math.tanh %450 : vector<2x128xf32>
    %cst_138 = arith.constant 5.000000e-01 : f32
    %452 = vector.broadcast %cst_138 : f32 to vector<2x128xf32>
    %453 = arith.mulf %452, %451 : vector<2x128xf32>
    %cst_139 = arith.constant 5.000000e-01 : f32
    %454 = vector.broadcast %cst_139 : f32 to vector<2x128xf32>
    %455 = arith.addf %453, %454 : vector<2x128xf32>
    %456 = vector.extract_strided_slice %439 {offsets = [0, 256], sizes = [2, 128], strides = [1, 1]} : vector<2x512xf32> to vector<2x128xf32>
    %457 = math.tanh %456 : vector<2x128xf32>
    %458 = vector.extract_strided_slice %439 {offsets = [0, 384], sizes = [2, 128], strides = [1, 1]} : vector<2x512xf32> to vector<2x128xf32>
    %cst_140 = arith.constant 5.000000e-01 : f32
    %459 = vector.broadcast %cst_140 : f32 to vector<2x128xf32>
    %460 = arith.mulf %459, %458 : vector<2x128xf32>
    %461 = math.tanh %460 : vector<2x128xf32>
    %cst_141 = arith.constant 5.000000e-01 : f32
    %462 = vector.broadcast %cst_141 : f32 to vector<2x128xf32>
    %463 = arith.mulf %462, %461 : vector<2x128xf32>
    %cst_142 = arith.constant 5.000000e-01 : f32
    %464 = vector.broadcast %cst_142 : f32 to vector<2x128xf32>
    %465 = arith.addf %463, %464 : vector<2x128xf32>
    %466 = arith.mulf %455, %435 : vector<2x128xf32>
    %467 = arith.mulf %447, %457 : vector<2x128xf32>
    %468 = arith.addf %466, %467 : vector<2x128xf32>
    %469 = math.tanh %468 : vector<2x128xf32>
    %470 = arith.mulf %465, %469 : vector<2x128xf32>
    %c16_i32_143 = arith.constant 16 : i32
    %471 = arith.muli %arg0, %c16_i32_143 : i32
    %c10_i32 = arith.constant 10 : i32
    %472 = arith.addi %471, %c10_i32 : i32
    %c8_i32_144 = arith.constant 8 : i32
    %473 = arith.cmpi slt, %472, %c8_i32_144 : i32
    %474 = arith.select %473, %468, %435 : vector<2x128xf32>
    %475 = arith.select %473, %470, %436 : vector<2x128xf32>
    %476 = arith.truncf %475 : vector<2x128xf32> to vector<2x128xbf16>
    %cst_145 = arith.constant dense<0.000000e+00> : vector<2x512xf32>
    %477 = tpu.matmul %476, %44, %cst_145 {dimension_numbers = #tpu.dot_dimension_numbers<[1], [0], [0], [1], [0, 0, 1, 1], [], []>} : vector<2x128xbf16>, vector<128x512xbf16>, vector<2x512xf32> -> vector<2x512xf32>
    %478 = arith.addf %35, %477 : vector<2x512xf32>
    %479 = vector.extract_strided_slice %478 {offsets = [0, 0], sizes = [2, 128], strides = [1, 1]} : vector<2x512xf32> to vector<2x128xf32>
    %cst_146 = arith.constant 5.000000e-01 : f32
    %480 = vector.broadcast %cst_146 : f32 to vector<2x128xf32>
    %481 = arith.mulf %480, %479 : vector<2x128xf32>
    %482 = math.tanh %481 : vector<2x128xf32>
    %cst_147 = arith.constant 5.000000e-01 : f32
    %483 = vector.broadcast %cst_147 : f32 to vector<2x128xf32>
    %484 = arith.mulf %483, %482 : vector<2x128xf32>
    %cst_148 = arith.constant 5.000000e-01 : f32
    %485 = vector.broadcast %cst_148 : f32 to vector<2x128xf32>
    %486 = arith.addf %484, %485 : vector<2x128xf32>
    %487 = vector.extract_strided_slice %478 {offsets = [0, 128], sizes = [2, 128], strides = [1, 1]} : vector<2x512xf32> to vector<2x128xf32>
    %cst_149 = arith.constant 5.000000e-01 : f32
    %488 = vector.broadcast %cst_149 : f32 to vector<2x128xf32>
    %489 = arith.mulf %488, %487 : vector<2x128xf32>
    %490 = math.tanh %489 : vector<2x128xf32>
    %cst_150 = arith.constant 5.000000e-01 : f32
    %491 = vector.broadcast %cst_150 : f32 to vector<2x128xf32>
    %492 = arith.mulf %491, %490 : vector<2x128xf32>
    %cst_151 = arith.constant 5.000000e-01 : f32
    %493 = vector.broadcast %cst_151 : f32 to vector<2x128xf32>
    %494 = arith.addf %492, %493 : vector<2x128xf32>
    %495 = vector.extract_strided_slice %478 {offsets = [0, 256], sizes = [2, 128], strides = [1, 1]} : vector<2x512xf32> to vector<2x128xf32>
    %496 = math.tanh %495 : vector<2x128xf32>
    %497 = vector.extract_strided_slice %478 {offsets = [0, 384], sizes = [2, 128], strides = [1, 1]} : vector<2x512xf32> to vector<2x128xf32>
    %cst_152 = arith.constant 5.000000e-01 : f32
    %498 = vector.broadcast %cst_152 : f32 to vector<2x128xf32>
    %499 = arith.mulf %498, %497 : vector<2x128xf32>
    %500 = math.tanh %499 : vector<2x128xf32>
    %cst_153 = arith.constant 5.000000e-01 : f32
    %501 = vector.broadcast %cst_153 : f32 to vector<2x128xf32>
    %502 = arith.mulf %501, %500 : vector<2x128xf32>
    %cst_154 = arith.constant 5.000000e-01 : f32
    %503 = vector.broadcast %cst_154 : f32 to vector<2x128xf32>
    %504 = arith.addf %502, %503 : vector<2x128xf32>
    %505 = arith.mulf %494, %474 : vector<2x128xf32>
    %506 = arith.mulf %486, %496 : vector<2x128xf32>
    %507 = arith.addf %505, %506 : vector<2x128xf32>
    %508 = math.tanh %507 : vector<2x128xf32>
    %509 = arith.mulf %504, %508 : vector<2x128xf32>
    %c16_i32_155 = arith.constant 16 : i32
    %510 = arith.muli %arg0, %c16_i32_155 : i32
    %c11_i32 = arith.constant 11 : i32
    %511 = arith.addi %510, %c11_i32 : i32
    %c8_i32_156 = arith.constant 8 : i32
    %512 = arith.cmpi slt, %511, %c8_i32_156 : i32
    %513 = arith.select %512, %507, %474 : vector<2x128xf32>
    %514 = arith.select %512, %509, %475 : vector<2x128xf32>
    %515 = arith.truncf %514 : vector<2x128xf32> to vector<2x128xbf16>
    %cst_157 = arith.constant dense<0.000000e+00> : vector<2x512xf32>
    %516 = tpu.matmul %515, %44, %cst_157 {dimension_numbers = #tpu.dot_dimension_numbers<[1], [0], [0], [1], [0, 0, 1, 1], [], []>} : vector<2x128xbf16>, vector<128x512xbf16>, vector<2x512xf32> -> vector<2x512xf32>
    %517 = arith.addf %37, %516 : vector<2x512xf32>
    %518 = vector.extract_strided_slice %517 {offsets = [0, 0], sizes = [2, 128], strides = [1, 1]} : vector<2x512xf32> to vector<2x128xf32>
    %cst_158 = arith.constant 5.000000e-01 : f32
    %519 = vector.broadcast %cst_158 : f32 to vector<2x128xf32>
    %520 = arith.mulf %519, %518 : vector<2x128xf32>
    %521 = math.tanh %520 : vector<2x128xf32>
    %cst_159 = arith.constant 5.000000e-01 : f32
    %522 = vector.broadcast %cst_159 : f32 to vector<2x128xf32>
    %523 = arith.mulf %522, %521 : vector<2x128xf32>
    %cst_160 = arith.constant 5.000000e-01 : f32
    %524 = vector.broadcast %cst_160 : f32 to vector<2x128xf32>
    %525 = arith.addf %523, %524 : vector<2x128xf32>
    %526 = vector.extract_strided_slice %517 {offsets = [0, 128], sizes = [2, 128], strides = [1, 1]} : vector<2x512xf32> to vector<2x128xf32>
    %cst_161 = arith.constant 5.000000e-01 : f32
    %527 = vector.broadcast %cst_161 : f32 to vector<2x128xf32>
    %528 = arith.mulf %527, %526 : vector<2x128xf32>
    %529 = math.tanh %528 : vector<2x128xf32>
    %cst_162 = arith.constant 5.000000e-01 : f32
    %530 = vector.broadcast %cst_162 : f32 to vector<2x128xf32>
    %531 = arith.mulf %530, %529 : vector<2x128xf32>
    %cst_163 = arith.constant 5.000000e-01 : f32
    %532 = vector.broadcast %cst_163 : f32 to vector<2x128xf32>
    %533 = arith.addf %531, %532 : vector<2x128xf32>
    %534 = vector.extract_strided_slice %517 {offsets = [0, 256], sizes = [2, 128], strides = [1, 1]} : vector<2x512xf32> to vector<2x128xf32>
    %535 = math.tanh %534 : vector<2x128xf32>
    %536 = vector.extract_strided_slice %517 {offsets = [0, 384], sizes = [2, 128], strides = [1, 1]} : vector<2x512xf32> to vector<2x128xf32>
    %cst_164 = arith.constant 5.000000e-01 : f32
    %537 = vector.broadcast %cst_164 : f32 to vector<2x128xf32>
    %538 = arith.mulf %537, %536 : vector<2x128xf32>
    %539 = math.tanh %538 : vector<2x128xf32>
    %cst_165 = arith.constant 5.000000e-01 : f32
    %540 = vector.broadcast %cst_165 : f32 to vector<2x128xf32>
    %541 = arith.mulf %540, %539 : vector<2x128xf32>
    %cst_166 = arith.constant 5.000000e-01 : f32
    %542 = vector.broadcast %cst_166 : f32 to vector<2x128xf32>
    %543 = arith.addf %541, %542 : vector<2x128xf32>
    %544 = arith.mulf %533, %513 : vector<2x128xf32>
    %545 = arith.mulf %525, %535 : vector<2x128xf32>
    %546 = arith.addf %544, %545 : vector<2x128xf32>
    %547 = math.tanh %546 : vector<2x128xf32>
    %548 = arith.mulf %543, %547 : vector<2x128xf32>
    %c16_i32_167 = arith.constant 16 : i32
    %549 = arith.muli %arg0, %c16_i32_167 : i32
    %c12_i32 = arith.constant 12 : i32
    %550 = arith.addi %549, %c12_i32 : i32
    %c8_i32_168 = arith.constant 8 : i32
    %551 = arith.cmpi slt, %550, %c8_i32_168 : i32
    %552 = arith.select %551, %546, %513 : vector<2x128xf32>
    %553 = arith.select %551, %548, %514 : vector<2x128xf32>
    %554 = arith.truncf %553 : vector<2x128xf32> to vector<2x128xbf16>
    %cst_169 = arith.constant dense<0.000000e+00> : vector<2x512xf32>
    %555 = tpu.matmul %554, %44, %cst_169 {dimension_numbers = #tpu.dot_dimension_numbers<[1], [0], [0], [1], [0, 0, 1, 1], [], []>} : vector<2x128xbf16>, vector<128x512xbf16>, vector<2x512xf32> -> vector<2x512xf32>
    %556 = arith.addf %39, %555 : vector<2x512xf32>
    %557 = vector.extract_strided_slice %556 {offsets = [0, 0], sizes = [2, 128], strides = [1, 1]} : vector<2x512xf32> to vector<2x128xf32>
    %cst_170 = arith.constant 5.000000e-01 : f32
    %558 = vector.broadcast %cst_170 : f32 to vector<2x128xf32>
    %559 = arith.mulf %558, %557 : vector<2x128xf32>
    %560 = math.tanh %559 : vector<2x128xf32>
    %cst_171 = arith.constant 5.000000e-01 : f32
    %561 = vector.broadcast %cst_171 : f32 to vector<2x128xf32>
    %562 = arith.mulf %561, %560 : vector<2x128xf32>
    %cst_172 = arith.constant 5.000000e-01 : f32
    %563 = vector.broadcast %cst_172 : f32 to vector<2x128xf32>
    %564 = arith.addf %562, %563 : vector<2x128xf32>
    %565 = vector.extract_strided_slice %556 {offsets = [0, 128], sizes = [2, 128], strides = [1, 1]} : vector<2x512xf32> to vector<2x128xf32>
    %cst_173 = arith.constant 5.000000e-01 : f32
    %566 = vector.broadcast %cst_173 : f32 to vector<2x128xf32>
    %567 = arith.mulf %566, %565 : vector<2x128xf32>
    %568 = math.tanh %567 : vector<2x128xf32>
    %cst_174 = arith.constant 5.000000e-01 : f32
    %569 = vector.broadcast %cst_174 : f32 to vector<2x128xf32>
    %570 = arith.mulf %569, %568 : vector<2x128xf32>
    %cst_175 = arith.constant 5.000000e-01 : f32
    %571 = vector.broadcast %cst_175 : f32 to vector<2x128xf32>
    %572 = arith.addf %570, %571 : vector<2x128xf32>
    %573 = vector.extract_strided_slice %556 {offsets = [0, 256], sizes = [2, 128], strides = [1, 1]} : vector<2x512xf32> to vector<2x128xf32>
    %574 = math.tanh %573 : vector<2x128xf32>
    %575 = vector.extract_strided_slice %556 {offsets = [0, 384], sizes = [2, 128], strides = [1, 1]} : vector<2x512xf32> to vector<2x128xf32>
    %cst_176 = arith.constant 5.000000e-01 : f32
    %576 = vector.broadcast %cst_176 : f32 to vector<2x128xf32>
    %577 = arith.mulf %576, %575 : vector<2x128xf32>
    %578 = math.tanh %577 : vector<2x128xf32>
    %cst_177 = arith.constant 5.000000e-01 : f32
    %579 = vector.broadcast %cst_177 : f32 to vector<2x128xf32>
    %580 = arith.mulf %579, %578 : vector<2x128xf32>
    %cst_178 = arith.constant 5.000000e-01 : f32
    %581 = vector.broadcast %cst_178 : f32 to vector<2x128xf32>
    %582 = arith.addf %580, %581 : vector<2x128xf32>
    %583 = arith.mulf %572, %552 : vector<2x128xf32>
    %584 = arith.mulf %564, %574 : vector<2x128xf32>
    %585 = arith.addf %583, %584 : vector<2x128xf32>
    %586 = math.tanh %585 : vector<2x128xf32>
    %587 = arith.mulf %582, %586 : vector<2x128xf32>
    %c16_i32_179 = arith.constant 16 : i32
    %588 = arith.muli %arg0, %c16_i32_179 : i32
    %c13_i32 = arith.constant 13 : i32
    %589 = arith.addi %588, %c13_i32 : i32
    %c8_i32_180 = arith.constant 8 : i32
    %590 = arith.cmpi slt, %589, %c8_i32_180 : i32
    %591 = arith.select %590, %585, %552 : vector<2x128xf32>
    %592 = arith.select %590, %587, %553 : vector<2x128xf32>
    %593 = arith.truncf %592 : vector<2x128xf32> to vector<2x128xbf16>
    %cst_181 = arith.constant dense<0.000000e+00> : vector<2x512xf32>
    %594 = tpu.matmul %593, %44, %cst_181 {dimension_numbers = #tpu.dot_dimension_numbers<[1], [0], [0], [1], [0, 0, 1, 1], [], []>} : vector<2x128xbf16>, vector<128x512xbf16>, vector<2x512xf32> -> vector<2x512xf32>
    %595 = arith.addf %41, %594 : vector<2x512xf32>
    %596 = vector.extract_strided_slice %595 {offsets = [0, 0], sizes = [2, 128], strides = [1, 1]} : vector<2x512xf32> to vector<2x128xf32>
    %cst_182 = arith.constant 5.000000e-01 : f32
    %597 = vector.broadcast %cst_182 : f32 to vector<2x128xf32>
    %598 = arith.mulf %597, %596 : vector<2x128xf32>
    %599 = math.tanh %598 : vector<2x128xf32>
    %cst_183 = arith.constant 5.000000e-01 : f32
    %600 = vector.broadcast %cst_183 : f32 to vector<2x128xf32>
    %601 = arith.mulf %600, %599 : vector<2x128xf32>
    %cst_184 = arith.constant 5.000000e-01 : f32
    %602 = vector.broadcast %cst_184 : f32 to vector<2x128xf32>
    %603 = arith.addf %601, %602 : vector<2x128xf32>
    %604 = vector.extract_strided_slice %595 {offsets = [0, 128], sizes = [2, 128], strides = [1, 1]} : vector<2x512xf32> to vector<2x128xf32>
    %cst_185 = arith.constant 5.000000e-01 : f32
    %605 = vector.broadcast %cst_185 : f32 to vector<2x128xf32>
    %606 = arith.mulf %605, %604 : vector<2x128xf32>
    %607 = math.tanh %606 : vector<2x128xf32>
    %cst_186 = arith.constant 5.000000e-01 : f32
    %608 = vector.broadcast %cst_186 : f32 to vector<2x128xf32>
    %609 = arith.mulf %608, %607 : vector<2x128xf32>
    %cst_187 = arith.constant 5.000000e-01 : f32
    %610 = vector.broadcast %cst_187 : f32 to vector<2x128xf32>
    %611 = arith.addf %609, %610 : vector<2x128xf32>
    %612 = vector.extract_strided_slice %595 {offsets = [0, 256], sizes = [2, 128], strides = [1, 1]} : vector<2x512xf32> to vector<2x128xf32>
    %613 = math.tanh %612 : vector<2x128xf32>
    %614 = vector.extract_strided_slice %595 {offsets = [0, 384], sizes = [2, 128], strides = [1, 1]} : vector<2x512xf32> to vector<2x128xf32>
    %cst_188 = arith.constant 5.000000e-01 : f32
    %615 = vector.broadcast %cst_188 : f32 to vector<2x128xf32>
    %616 = arith.mulf %615, %614 : vector<2x128xf32>
    %617 = math.tanh %616 : vector<2x128xf32>
    %cst_189 = arith.constant 5.000000e-01 : f32
    %618 = vector.broadcast %cst_189 : f32 to vector<2x128xf32>
    %619 = arith.mulf %618, %617 : vector<2x128xf32>
    %cst_190 = arith.constant 5.000000e-01 : f32
    %620 = vector.broadcast %cst_190 : f32 to vector<2x128xf32>
    %621 = arith.addf %619, %620 : vector<2x128xf32>
    %622 = arith.mulf %611, %591 : vector<2x128xf32>
    %623 = arith.mulf %603, %613 : vector<2x128xf32>
    %624 = arith.addf %622, %623 : vector<2x128xf32>
    %625 = math.tanh %624 : vector<2x128xf32>
    %626 = arith.mulf %621, %625 : vector<2x128xf32>
    %c16_i32_191 = arith.constant 16 : i32
    %627 = arith.muli %arg0, %c16_i32_191 : i32
    %c14_i32 = arith.constant 14 : i32
    %628 = arith.addi %627, %c14_i32 : i32
    %c8_i32_192 = arith.constant 8 : i32
    %629 = arith.cmpi slt, %628, %c8_i32_192 : i32
    %630 = arith.select %629, %624, %591 : vector<2x128xf32>
    %631 = arith.select %629, %626, %592 : vector<2x128xf32>
    %632 = arith.truncf %631 : vector<2x128xf32> to vector<2x128xbf16>
    %cst_193 = arith.constant dense<0.000000e+00> : vector<2x512xf32>
    %633 = tpu.matmul %632, %44, %cst_193 {dimension_numbers = #tpu.dot_dimension_numbers<[1], [0], [0], [1], [0, 0, 1, 1], [], []>} : vector<2x128xbf16>, vector<128x512xbf16>, vector<2x512xf32> -> vector<2x512xf32>
    %634 = arith.addf %43, %633 : vector<2x512xf32>
    %635 = vector.extract_strided_slice %634 {offsets = [0, 0], sizes = [2, 128], strides = [1, 1]} : vector<2x512xf32> to vector<2x128xf32>
    %cst_194 = arith.constant 5.000000e-01 : f32
    %636 = vector.broadcast %cst_194 : f32 to vector<2x128xf32>
    %637 = arith.mulf %636, %635 : vector<2x128xf32>
    %638 = math.tanh %637 : vector<2x128xf32>
    %cst_195 = arith.constant 5.000000e-01 : f32
    %639 = vector.broadcast %cst_195 : f32 to vector<2x128xf32>
    %640 = arith.mulf %639, %638 : vector<2x128xf32>
    %cst_196 = arith.constant 5.000000e-01 : f32
    %641 = vector.broadcast %cst_196 : f32 to vector<2x128xf32>
    %642 = arith.addf %640, %641 : vector<2x128xf32>
    %643 = vector.extract_strided_slice %634 {offsets = [0, 128], sizes = [2, 128], strides = [1, 1]} : vector<2x512xf32> to vector<2x128xf32>
    %cst_197 = arith.constant 5.000000e-01 : f32
    %644 = vector.broadcast %cst_197 : f32 to vector<2x128xf32>
    %645 = arith.mulf %644, %643 : vector<2x128xf32>
    %646 = math.tanh %645 : vector<2x128xf32>
    %cst_198 = arith.constant 5.000000e-01 : f32
    %647 = vector.broadcast %cst_198 : f32 to vector<2x128xf32>
    %648 = arith.mulf %647, %646 : vector<2x128xf32>
    %cst_199 = arith.constant 5.000000e-01 : f32
    %649 = vector.broadcast %cst_199 : f32 to vector<2x128xf32>
    %650 = arith.addf %648, %649 : vector<2x128xf32>
    %651 = vector.extract_strided_slice %634 {offsets = [0, 256], sizes = [2, 128], strides = [1, 1]} : vector<2x512xf32> to vector<2x128xf32>
    %652 = math.tanh %651 : vector<2x128xf32>
    %653 = vector.extract_strided_slice %634 {offsets = [0, 384], sizes = [2, 128], strides = [1, 1]} : vector<2x512xf32> to vector<2x128xf32>
    %cst_200 = arith.constant 5.000000e-01 : f32
    %654 = vector.broadcast %cst_200 : f32 to vector<2x128xf32>
    %655 = arith.mulf %654, %653 : vector<2x128xf32>
    %656 = math.tanh %655 : vector<2x128xf32>
    %cst_201 = arith.constant 5.000000e-01 : f32
    %657 = vector.broadcast %cst_201 : f32 to vector<2x128xf32>
    %658 = arith.mulf %657, %656 : vector<2x128xf32>
    %cst_202 = arith.constant 5.000000e-01 : f32
    %659 = vector.broadcast %cst_202 : f32 to vector<2x128xf32>
    %660 = arith.addf %658, %659 : vector<2x128xf32>
    %661 = arith.mulf %650, %630 : vector<2x128xf32>
    %662 = arith.mulf %642, %652 : vector<2x128xf32>
    %663 = arith.addf %661, %662 : vector<2x128xf32>
    %664 = math.tanh %663 : vector<2x128xf32>
    %665 = arith.mulf %660, %664 : vector<2x128xf32>
    %c16_i32_203 = arith.constant 16 : i32
    %666 = arith.muli %arg0, %c16_i32_203 : i32
    %c15_i32 = arith.constant 15 : i32
    %667 = arith.addi %666, %c15_i32 : i32
    %c8_i32_204 = arith.constant 8 : i32
    %668 = arith.cmpi slt, %667, %c8_i32_204 : i32
    %669 = arith.select %668, %663, %630 : vector<2x128xf32>
    %670 = arith.select %668, %665, %631 : vector<2x128xf32>
    %c0_205 = arith.constant 0 : index
    %c0_206 = arith.constant 0 : index
    %671 = vector.load %arg8[%c0_205, %c0_206] : memref<2x128xf32, #tpu.memory_space<vmem>>, vector<2x128xf32>
    tpu.vector_store %arg8[%c0_205, %c0_206], %670 {strides = array<i32>} : memref<2x128xf32, #tpu.memory_space<vmem>>, vector<2x128xf32>,
    %c0_207 = arith.constant 0 : index
    %c0_208 = arith.constant 0 : index
    %672 = vector.load %arg9[%c0_207, %c0_208] : memref<2x128xf32, #tpu.memory_space<vmem>>, vector<2x128xf32>
    tpu.vector_store %arg9[%c0_207, %c0_208], %669 {strides = array<i32>} : memref<2x128xf32, #tpu.memory_space<vmem>>, vector<2x128xf32>,
    %c0_i32_209 = arith.constant 0 : i32
    %673 = arith.cmpi eq, %arg0, %c0_i32_209 : i32
    %674 = arith.extui %673 : i1 to i32
    %c0_i32_210 = arith.constant 0 : i32
    %675 = arith.cmpi ne, %674, %c0_i32_210 : i32
    scf.if %675 {
      %676 = arith.truncf %670 : vector<2x128xf32> to vector<2x128xbf16>
      %c0_211 = arith.constant 0 : index
      %c0_212 = arith.constant 0 : index
      %677 = vector.load %arg5[%c0_211, %c0_212] : memref<128x4xbf16, #tpu.memory_space<vmem>>, vector<128x4xbf16>
      %cst_213 = arith.constant dense<0.000000e+00> : vector<2x4xf32>
      %678 = tpu.matmul %676, %677, %cst_213 {dimension_numbers = #tpu.dot_dimension_numbers<[1], [0], [0], [1], [0, 0, 1, 1], [], []>} : vector<2x128xbf16>, vector<128x4xbf16>, vector<2x4xf32> -> vector<2x4xf32>
      %c0_214 = arith.constant 0 : index
      %c0_215 = arith.constant 0 : index
      %679 = vector.load %arg6[%c0_214, %c0_215] : memref<1x4xf32, #tpu.memory_space<vmem>>, vector<1x4xf32>
      %680 = vector.broadcast %679 : vector<1x4xf32> to vector<2x4xf32>
      %681 = arith.addf %678, %680 : vector<2x4xf32>
      %cst_216 = arith.constant 5.000000e-01 : f32
      %682 = vector.broadcast %cst_216 : f32 to vector<2x4xf32>
      %683 = arith.mulf %682, %681 : vector<2x4xf32>
      %684 = math.tanh %683 : vector<2x4xf32>
      %cst_217 = arith.constant 5.000000e-01 : f32
      %685 = vector.broadcast %cst_217 : f32 to vector<2x4xf32>
      %686 = arith.mulf %685, %684 : vector<2x4xf32>
      %cst_218 = arith.constant 5.000000e-01 : f32
      %687 = vector.broadcast %cst_218 : f32 to vector<2x4xf32>
      %688 = arith.addf %686, %687 : vector<2x4xf32>
      %c0_219 = arith.constant 0 : index
      %c0_220 = arith.constant 0 : index
      %689 = vector.load %arg7[%c0_219, %c0_220] : memref<2x4xf32, #tpu.memory_space<vmem>>, vector<2x4xf32>
      tpu.vector_store %arg7[%c0_219, %c0_220], %688 {strides = array<i32>} : memref<2x4xf32, #tpu.memory_space<vmem>>, vector<2x4xf32>,
    } else {
    }
    return
  }
  func.func @transform_0(%arg0: i32) -> (i32, i32, i32) {
    %c0_i32 = arith.constant 0 : i32
    %c0_i32_0 = arith.constant 0 : i32
    %c0_i32_1 = arith.constant 0 : i32
    return %c0_i32, %arg0, %c0_i32_0 : i32, i32, i32
  }
  func.func @transform_1(%arg0: i32) -> (i32, i32) {
    %c0_i32 = arith.constant 0 : i32
    %c0_i32_0 = arith.constant 0 : i32
    %c0_i32_1 = arith.constant 0 : i32
    return %c0_i32, %c0_i32_0 : i32, i32
  }
  func.func @transform_2(%arg0: i32) -> (i32, i32) {
    %c0_i32 = arith.constant 0 : i32
    %c0_i32_0 = arith.constant 0 : i32
    %c0_i32_1 = arith.constant 0 : i32
    return %c0_i32, %c0_i32_0 : i32, i32
  }
  func.func @transform_3(%arg0: i32) -> (i32, i32) {
    %c0_i32 = arith.constant 0 : i32
    %c0_i32_0 = arith.constant 0 : i32
    %c0_i32_1 = arith.constant 0 : i32
    return %c0_i32, %c0_i32_0 : i32, i32
  }
  func.func @transform_4(%arg0: i32) -> (i32, i32) {
    %c0_i32 = arith.constant 0 : i32
    %c0_i32_0 = arith.constant 0 : i32
    %c0_i32_1 = arith.constant 0 : i32
    return %c0_i32, %c0_i32_0 : i32, i32
  }
  func.func @transform_5(%arg0: i32) -> (i32, i32) {
    %c0_i32 = arith.constant 0 : i32
    %c0_i32_0 = arith.constant 0 : i32
    %c0_i32_1 = arith.constant 0 : i32
    return %c0_i32, %c0_i32_0 : i32, i32
  }
  func.func @transform_6(%arg0: i32) -> (i32, i32) {
    %c0_i32 = arith.constant 0 : i32
    %c0_i32_0 = arith.constant 0 : i32
    %c0_i32_1 = arith.constant 0 : i32
    return %c0_i32, %c0_i32_0 : i32, i32
  }
}

</mosaic_0001>

<llo_original>
// kernel: tpu_custom_call.1
$region0: #{tpu_custom_call.1}
  #allocation0 [shape = 'u32[]', space=smem, size = 0x4, offset = 0x4, fixed_abs, tag = 'smem constant byte address 0x4 - core index']
  #allocation1 [shape = 'u32[144,128]{1,0:T(1,128)}', space=vmem, size = 0x12000, scoped, tag = 'internal scratch']
  #allocation2 [shape = 'f32[2,128]{1,0:T(2,128)}', space=vmem, size = 0x400, scoped, tag = 'scratch operand']
  #allocation3 [shape = 'f32[2,128]{1,0:T(2,128)}', space=vmem, size = 0x400, scoped, tag = 'scratch operand']
  %s0 = inlined_call_operand.vmem [shape: bf16[2,16,16], index: 0, kind: input, shape index: {}]
  %s1 = inlined_call_operand.vmem [shape: bf16[16,512], index: 1, kind: input, shape index: {}]
  %s2 = inlined_call_operand.hbm [shape: bf16[128,512], index: 2, kind: input, shape index: {}]
  %s3 = inlined_call_operand.vmem [shape: f32[1,512], index: 3, kind: input, shape index: {}]
  %s4 = inlined_call_operand.vmem [shape: bf16[128,4], index: 4, kind: input, shape index: {}]
  %s5 = inlined_call_operand.vmem [shape: f32[1,4], index: 5, kind: input, shape index: {}]
  %s6 = inlined_call_operand.hbm [shape: f32[2,4], index: 6, kind: output, shape index: {}]
  %s7 = sld [smem:[#allocation0]]
  $region46: #{tpu_custom_call.1} parent=0
    _
  %s9 = ssub.s32 1, %s7
  %s10 = scalar_select 0, %s9, %s7
  $region1: #{tpu_custom_call.1} parent=0
    #allocation4 [shape = 'u8[131072]{0}', space=vmem, size = 0x20000, scoped, tag = 'input window, operand 2, single buffered']
    #allocation5 [shape = 's32[1]{0}', space=sflag, size = 0x4, scoped, tag = 'scoped memory for tpu_custom_call.1']
    #allocation6 [shape = 's32[1]{0}', space=sflag, size = 0x4, scoped, tag = 'scoped memory for tpu_custom_call.1']
    #allocation7 [shape = 'u8[1024]{0}', space=vmem, size = 0x400, scoped, tag = 'output window, operand 0, single buffered']
    %11 = vsyncpa [#allocation5], 0
    %12 = vsyncpa [#allocation6], 0
    // Predicated region
    $region2: #{tpu_custom_call.1} parent=1 // pred_check
      _
    $region3: #{tpu_custom_call.1} parent=1 // pred_check_branch
      %14 = sbr.rel (0) target = $region5
    $region4: #{tpu_custom_call.1} parent=1 // pred_region
      _
    $region5: #{tpu_custom_call.1} parent=1 // pred_fallthru
      _
    // Predicated region
    $region6: #{tpu_custom_call.1} parent=1 // pred_check
      _
    $region7: #{tpu_custom_call.1} parent=1 // pred_check_branch
      %16 = sbr.rel (0) target = $region9
    $region8: #{tpu_custom_call.1} parent=1 // pred_region
      _
    $region9: #{tpu_custom_call.1} parent=1 // pred_fallthru
      _
    // Predicated region
    $region10: #{tpu_custom_call.1} parent=1 // pred_check
      _
    $region11: #{tpu_custom_call.1} parent=1 // pred_check_branch
      %18 = sbr.rel (0) target = $region13
    $region12: #{tpu_custom_call.1} parent=1 // pred_region
      %s20 = ssub.s32 4096, 4096
      %21 = vsyncadd [#allocation5], %s20
      %s22 = sshll.u32 [#allocation4], 4
      %s23 = int_to_ptr.vmem [resolvable:$true] %s22
      %28 = dma.hbm_to_vmem [thread:$0]  %s2, 4096, %s23, [#allocation5], 256, 256, 16
    $region13: #{tpu_custom_call.1} parent=1 // pred_fallthru
      _
    // Predicated region
    $region14: #{tpu_custom_call.1} parent=1 // pred_check
      _
    $region15: #{tpu_custom_call.1} parent=1 // pred_check_branch
      %30 = sbr.rel (0) target = $region17
    $region16: #{tpu_custom_call.1} parent=1 // pred_region
      _
    $region17: #{tpu_custom_call.1} parent=1 // pred_fallthru
      _
    // Predicated region
    $region18: #{tpu_custom_call.1} parent=1 // pred_check
      _
    $region19: #{tpu_custom_call.1} parent=1 // pred_check_branch
      %32 = sbr.rel (0) target = $region21
    $region20: #{tpu_custom_call.1} parent=1 // pred_region
      _
    $region21: #{tpu_custom_call.1} parent=1 // pred_fallthru
      _
    // Predicated region
    $region22: #{tpu_custom_call.1} parent=1 // pred_check
      _
    $region23: #{tpu_custom_call.1} parent=1 // pred_check_branch
      %34 = sbr.rel (0) target = $region25
    $region24: #{tpu_custom_call.1} parent=1 // pred_region
      _
    $region25: #{tpu_custom_call.1} parent=1 // pred_fallthru
      _
    // Predicated region
    $region26: #{tpu_custom_call.1} parent=1 // pred_check
      _
    $region27: #{tpu_custom_call.1} parent=1 // pred_check_branch
      %36 = sbr.rel (0) target = $region29
    $region28: #{tpu_custom_call.1} parent=1 // pred_region
      %37 = dma.done [#allocation5], 4096
    $region29: #{tpu_custom_call.1} parent=1 // pred_fallthru
      _
    %p39 = scmp.eq.s32.totalorder 0, 0
    // Predicated region
    $region30: #{tpu_custom_call.1} parent=1 // pred_check
      %p40 = pneg %p39
    $region31: #{tpu_custom_call.1} parent=1 // pred_check_branch
      %42 = sbr.rel (%p40) target = $region33
    $region32: #{tpu_custom_call.1} parent=1 // pred_region
      %43 = vst [vmem:[#allocation2] sm:$0x3] 0.0
      %44 = vst [vmem:[#allocation3] sm:$0x3] 0.0
    $region33: #{tpu_custom_call.1} parent=1 // pred_fallthru
      _
    %v45 = vld [vmem:[%s0] sm:$0xf]
    %v46 = vld [vmem:[%s0 + $0x4] sm:$0xf]
    %v47 = vld [vmem:[%s0 + $0x8] sm:$0xf]
    %v48 = vld [vmem:[%s0 + $0xc] sm:$0xf]
    %v49 = vld [vmem:[%s1] sm:$0xff]
    %v50 = vld [vmem:[%s1 + $0x8] sm:$0xff]
    %v51 = vld [vmem:[%s1 + $0x10] sm:$0xff]
    %v52 = vld [vmem:[%s1 + $0x18] sm:$0xff]
    %v57 = vunpack.c.l.b16 %v45
    %v58 = vunpack.c.l.b16 %v46
    %v59 = vunpack.c.l.b16 %v47
    %v60 = vunpack.c.l.b16 %v48
    %v61 = vpack.c.b16 %v58, %v57
    %v62 = vpack.c.b16 %v60, %v59
    %v67 = vunpack.c.l.b16 %v49
    %v68 = vunpack.c.h.b16 %v49
    %v69 = vunpack.c.l.b16 %v50
    %v70 = vunpack.c.h.b16 %v50
    %v71 = vunpack.c.l.b16 %v51
    %v72 = vunpack.c.h.b16 %v51
    %v73 = vunpack.c.l.b16 %v52
    %v74 = vunpack.c.h.b16 %v52
    %v75 = vpack.c.b16 %v71, %v67
    %v76 = vpack.c.b16 %v72, %v68
    %v77 = vpack.c.b16 %v73, %v69
    %v78 = vpack.c.b16 %v74, %v70
    %vm83 = vcmask 130048
    %v85 = vsel %vm83, %v61, 0
    %v88 = vsel %vm83, %v62, 0
    %90 = vmatprep.subr.bf16.mxu0 %v76
    %91 = vmatpush1.bf16.msra.mxu0 %v75
    %92 = vmatprep.subr.bf16.mxu0 0
    %93 = vmatpush1.bf16.msra.mxu0 0
    %94 = vmatprep.subr.bf16.mxu0 0
    %95 = vmatpush1.bf16.msra.mxu0 0
    %96 = vmatprep.subr.bf16.mxu0 0
    %97 = vmatpush1.bf16.msra.mxu0 0
    %98 = vmatprep.subr.bf16.mxu0 0
    %99 = vmatpush1.bf16.msra.mxu0 0
    %100 = vmatprep.subr.bf16.mxu0 0
    %101 = vmatpush1.bf16.msra.mxu0 0
    %102 = vmatprep.subr.bf16.mxu0 0
    %103 = vmatpush1.bf16.msra.mxu0 0
    %104 = vmatprep.subr.bf16.mxu0 0
    %105 = vmatpush1.bf16.msra.mxu0 0
    %106 = vmatprep.subr.bf16.mxu0 0
    %107 = vmatpush1.bf16.msra.mxu0 0
    %108 = vmatprep.subr.bf16.mxu0 0
    %109 = vmatpush1.bf16.msra.mxu0 0
    %110 = vmatprep.subr.bf16.mxu0 0
    %111 = vmatpush1.bf16.msra.mxu0 0
    %112 = vmatprep.subr.bf16.mxu0 0
    %113 = vmatpush1.bf16.msra.mxu0 0
    %114 = vmatprep.subr.bf16.mxu0 0
    %115 = vmatpush1.bf16.msra.mxu0 0
    %116 = vmatprep.subr.bf16.mxu0 0
    %117 = vmatpush1.bf16.msra.mxu0 0
    %118 = vmatprep.subr.bf16.mxu0 0
    %119 = vmatpush1.bf16.msra.mxu0 0
    %120 = vmatprep.subr.bf16.mxu0 0
    %121 = vmatpush1.bf16.msra.mxu0 0
    %122 = vmatprep.mubr.bf16.mxu0 0
    %123 = vmatmul.mubr.bf16.gmra.mrb[0].mxu0 %v85
    %v124 = vpop.f32.mrb[0].mxu0
    %v125 = vadd.f32 0.0, %v124
    %v126 = vpop.f32.mrb[0].mxu0
    %v127 = vadd.f32 0.0, %v126
    %v128 = vpop.f32.mrb[0].mxu0
    %v129 = vadd.f32 0.0, %v128
    %v130 = vpop.f32.mrb[0].mxu0
    %v131 = vadd.f32 0.0, %v130
    %132 = vmatprep.mubr.bf16.mxu0 0
    %133 = vmatmul.mubr.bf16.gmra.mrb[0].mxu0 %v88
    %v134 = vpop.f32.mrb[0].mxu0
    %v135 = vadd.f32 0.0, %v134
    %v136 = vpop.f32.mrb[0].mxu0
    %v137 = vadd.f32 0.0, %v136
    %v138 = vpop.f32.mrb[0].mxu0
    %v139 = vadd.f32 0.0, %v138
    %v140 = vpop.f32.mrb[0].mxu0
    %v141 = vadd.f32 0.0, %v140
    %142 = vdwg.mxu0
    %143 = vmatprep.subr.bf16.mxu0 %v78
    %144 = vmatpush1.bf16.msra.mxu0 %v77
    %145 = vmatprep.subr.bf16.mxu0 0
    %146 = vmatpush1.bf16.msra.mxu0 0
    %147 = vmatprep.subr.bf16.mxu0 0
    %148 = vmatpush1.bf16.msra.mxu0 0
    %149 = vmatprep.subr.bf16.mxu0 0
    %150 = vmatpush1.bf16.msra.mxu0 0
    %151 = vmatprep.subr.bf16.mxu0 0
    %152 = vmatpush1.bf16.msra.mxu0 0
    %153 = vmatprep.subr.bf16.mxu0 0
    %154 = vmatpush1.bf16.msra.mxu0 0
    %155 = vmatprep.subr.bf16.mxu0 0
    %156 = vmatpush1.bf16.msra.mxu0 0
    %157 = vmatprep.subr.bf16.mxu0 0
    %158 = vmatpush1.bf16.msra.mxu0 0
    %159 = vmatprep.subr.bf16.mxu0 0
    %160 = vmatpush1.bf16.msra.mxu0 0
    %161 = vmatprep.subr.bf16.mxu0 0
    %162 = vmatpush1.bf16.msra.mxu0 0
    %163 = vmatprep.subr.bf16.mxu0 0
    %164 = vmatpush1.bf16.msra.mxu0 0
    %165 = vmatprep.subr.bf16.mxu0 0
    %166 = vmatpush1.bf16.msra.mxu0 0
    %167 = vmatprep.subr.bf16.mxu0 0
    %168 = vmatpush1.bf16.msra.mxu0 0
    %169 = vmatprep.subr.bf16.mxu0 0
    %170 = vmatpush1.bf16.msra.mxu0 0
    %171 = vmatprep.subr.bf16.mxu0 0
    %172 = vmatpush1.bf16.msra.mxu0 0
    %173 = vmatprep.subr.bf16.mxu0 0
    %174 = vmatpush1.bf16.msra.mxu0 0
    %175 = vmatprep.mubr.bf16.mxu0 0
    %176 = vmatmul.mubr.bf16.gmra.mrb[0].mxu0 %v85
    %v177 = vpop.f32.mrb[0].mxu0
    %v178 = vadd.f32 0.0, %v177
    %v179 = vpop.f32.mrb[0].mxu0
    %v180 = vadd.f32 0.0, %v179
    %v181 = vpop.f32.mrb[0].mxu0
    %v182 = vadd.f32 0.0, %v181
    %v183 = vpop.f32.mrb[0].mxu0
    %v184 = vadd.f32 0.0, %v183
    %185 = vmatprep.mubr.bf16.mxu0 0
    %186 = vmatmul.mubr.bf16.gmra.mrb[0].mxu0 %v88
    %v187 = vpop.f32.mrb[0].mxu0
    %v188 = vadd.f32 0.0, %v187
    %v189 = vpop.f32.mrb[0].mxu0
    %v190 = vadd.f32 0.0, %v189
    %v191 = vpop.f32.mrb[0].mxu0
    %v192 = vadd.f32 0.0, %v191
    %v193 = vpop.f32.mrb[0].mxu0
    %v194 = vadd.f32 0.0, %v193
    %195 = vdwg.mxu0
    %v196 = vld [vmem:[%s3] sm:$0xf]
    %v198 = vlaneseq
    %v199 = vshrl.u32 %v198, 7
    %v200 = vsub.s32 0, %v199
    %v201 = vrot.slane %v196, %v200
    %v202 = vlaneseq
    %v203 = vshrl.u32 %v202, 7
    %v204 = vsub.s32 1, %v203
    %v205 = vrot.slane %v196, %v204
    %v206 = vlaneseq
    %v207 = vshrl.u32 %v206, 7
    %v208 = vsub.s32 2, %v207
    %v209 = vrot.slane %v196, %v208
    %v210 = vlaneseq
    %v211 = vshrl.u32 %v210, 7
    %v212 = vsub.s32 3, %v211
    %v213 = vrot.slane %v196, %v212
    %v218 = vadd.f32 %v125, %v201
    %v219 = vadd.f32 %v127, %v205
    %v220 = vadd.f32 %v178, %v209
    %v221 = vadd.f32 %v180, %v213
    %v222 = vadd.f32 %v129, %v201
    %v223 = vadd.f32 %v131, %v205
    %v224 = vadd.f32 %v182, %v209
    %v225 = vadd.f32 %v184, %v213
    %v226 = vadd.f32 %v135, %v201
    %v227 = vadd.f32 %v137, %v205
    %v228 = vadd.f32 %v188, %v209
    %v229 = vadd.f32 %v190, %v213
    %v230 = vadd.f32 %v139, %v201
    %v231 = vadd.f32 %v141, %v205
    %v232 = vadd.f32 %v192, %v209
    %v233 = vadd.f32 %v194, %v213
    %v234 = vld [vmem:[#allocation4] sm:$0xff]
    %v235 = vld [vmem:[#allocation4 + $0x8] sm:$0xff]
    %v236 = vld [vmem:[#allocation4 + $0x10] sm:$0xff]
    %v237 = vld [vmem:[#allocation4 + $0x18] sm:$0xff]
    %v238 = vld [vmem:[#allocation4 + $0x20] sm:$0xff]
    %v239 = vld [vmem:[#allocation4 + $0x28] sm:$0xff]
    %v240 = vld [vmem:[#allocation4 + $0x30] sm:$0xff]
    %v241 = vld [vmem:[#allocation4 + $0x38] sm:$0xff]
    %v242 = vld [vmem:[#allocation4 + $0x40] sm:$0xff]
    %v243 = vld [vmem:[#allocation4 + $0x48] sm:$0xff]
    %v244 = vld [vmem:[#allocation4 + $0x50] sm:$0xff]
    %v245 = vld [vmem:[#allocation4 + $0x58] sm:$0xff]
    %v246 = vld [vmem:[#allocation4 + $0x60] sm:$0xff]
    %v247 = vld [vmem:[#allocation4 + $0x68] sm:$0xff]
    %v248 = vld [vmem:[#allocation4 + $0x70] sm:$0xff]
    %v249 = vld [vmem:[#allocation4 + $0x78] sm:$0xff]
    %v250 = vld [vmem:[#allocation4 + $0x80] sm:$0xff]
    %v251 = vld [vmem:[#allocation4 + $0x88] sm:$0xff]
    %v252 = vld [vmem:[#allocation4 + $0x90] sm:$0xff]
    %v253 = vld [vmem:[#allocation4 + $0x98] sm:$0xff]
    %v254 = vld [vmem:[#allocation4 + $0xa0] sm:$0xff]
    %v255 = vld [vmem:[#allocation4 + $0xa8] sm:$0xff]
    %v256 = vld [vmem:[#allocation4 + $0xb0] sm:$0xff]
    %v257 = vld [vmem:[#allocation4 + $0xb8] sm:$0xff]
    %v258 = vld [vmem:[#allocation4 + $0xc0] sm:$0xff]
    %v259 = vld [vmem:[#allocation4 + $0xc8] sm:$0xff]
    %v260 = vld [vmem:[#allocation4 + $0xd0] sm:$0xff]
    %v261 = vld [vmem:[#allocation4 + $0xd8] sm:$0xff]
    %v262 = vld [vmem:[#allocation4 + $0xe0] sm:$0xff]
    %v263 = vld [vmem:[#allocation4 + $0xe8] sm:$0xff]
    %v264 = vld [vmem:[#allocation4 + $0xf0] sm:$0xff]
    %v265 = vld [vmem:[#allocation4 + $0xf8] sm:$0xff]
    %v266 = vld [vmem:[#allocation2] sm:$0x3]
    %v267 = vld [vmem:[#allocation3] sm:$0x3]
    %v268 = vpack.c.bf16 %v266, %v266
    %v301 = vunpack.c.l.b16 %v234
    %v302 = vunpack.c.h.b16 %v234
    %v303 = vunpack.c.l.b16 %v235
    %v304 = vunpack.c.h.b16 %v235
    %v305 = vunpack.c.l.b16 %v236
    %v306 = vunpack.c.h.b16 %v236
    %v307 = vunpack.c.l.b16 %v237
    %v308 = vunpack.c.h.b16 %v237
    %v309 = vunpack.c.l.b16 %v238
    %v310 = vunpack.c.h.b16 %v238
    %v311 = vunpack.c.l.b16 %v239
    %v312 = vunpack.c.h.b16 %v239
    %v313 = vunpack.c.l.b16 %v240
    %v314 = vunpack.c.h.b16 %v240
    %v315 = vunpack.c.l.b16 %v241
    %v316 = vunpack.c.h.b16 %v241
    %v317 = vunpack.c.l.b16 %v242
    %v318 = vunpack.c.h.b16 %v242
    %v319 = vunpack.c.l.b16 %v243
    %v320 = vunpack.c.h.b16 %v243
    %v321 = vunpack.c.l.b16 %v244
    %v322 = vunpack.c.h.b16 %v244
    %v323 = vunpack.c.l.b16 %v245
    %v324 = vunpack.c.h.b16 %v245
    %v325 = vunpack.c.l.b16 %v246
    %v326 = vunpack.c.h.b16 %v246
    %v327 = vunpack.c.l.b16 %v247
    %v328 = vunpack.c.h.b16 %v247
    %v329 = vunpack.c.l.b16 %v248
    %v330 = vunpack.c.h.b16 %v248
    %v331 = vunpack.c.l.b16 %v249
    %v332 = vunpack.c.h.b16 %v249
    %v333 = vunpack.c.l.b16 %v250
    %v334 = vunpack.c.h.b16 %v250
    %v335 = vunpack.c.l.b16 %v251
    %v336 = vunpack.c.h.b16 %v251
    %v337 = vunpack.c.l.b16 %v252
    %v338 = vunpack.c.h.b16 %v252
    %v339 = vunpack.c.l.b16 %v253
    %v340 = vunpack.c.h.b16 %v253
    %v341 = vunpack.c.l.b16 %v254
    %v342 = vunpack.c.h.b16 %v254
    %v343 = vunpack.c.l.b16 %v255
    %v344 = vunpack.c.h.b16 %v255
    %v345 = vunpack.c.l.b16 %v256
    %v346 = vunpack.c.h.b16 %v256
    %v347 = vunpack.c.l.b16 %v257
    %v348 = vunpack.c.h.b16 %v257
    %v349 = vunpack.c.l.b16 %v258
    %v350 = vunpack.c.h.b16 %v258
    %v351 = vunpack.c.l.b16 %v259
    %v352 = vunpack.c.h.b16 %v259
    %v353 = vunpack.c.l.b16 %v260
    %v354 = vunpack.c.h.b16 %v260
    %v355 = vunpack.c.l.b16 %v261
    %v356 = vunpack.c.h.b16 %v261
    %v357 = vunpack.c.l.b16 %v262
    %v358 = vunpack.c.h.b16 %v262
    %v359 = vunpack.c.l.b16 %v263
    %v360 = vunpack.c.h.b16 %v263
    %v361 = vunpack.c.l.b16 %v264
    %v362 = vunpack.c.h.b16 %v264
    %v363 = vunpack.c.l.b16 %v265
    %v364 = vunpack.c.h.b16 %v265
    %v365 = vpack.c.b16 %v305, %v301
    %v366 = vpack.c.b16 %v306, %v302
    %v367 = vpack.c.b16 %v307, %v303
    %v368 = vpack.c.b16 %v308, %v304
    %v369 = vpack.c.b16 %v313, %v309
    %v370 = vpack.c.b16 %v314, %v310
    %v371 = vpack.c.b16 %v315, %v311
    %v372 = vpack.c.b16 %v316, %v312
    %v373 = vpack.c.b16 %v321, %v317
    %v374 = vpack.c.b16 %v322, %v318
    %v375 = vpack.c.b16 %v323, %v319
    %v376 = vpack.c.b16 %v324, %v320
    %v377 = vpack.c.b16 %v329, %v325
    %v378 = vpack.c.b16 %v330, %v326
    %v379 = vpack.c.b16 %v331, %v327
    %v380 = vpack.c.b16 %v332, %v328
    %v381 = vpack.c.b16 %v337, %v333
    %v382 = vpack.c.b16 %v338, %v334
    %v383 = vpack.c.b16 %v339, %v335
    %v384 = vpack.c.b16 %v340, %v336
    %v385 = vpack.c.b16 %v345, %v341
    %v386 = vpack.c.b16 %v346, %v342
    %v387 = vpack.c.b16 %v347, %v343
    %v388 = vpack.c.b16 %v348, %v344
    %v389 = vpack.c.b16 %v353, %v349
    %v390 = vpack.c.b16 %v354, %v350
    %v391 = vpack.c.b16 %v355, %v351
    %v392 = vpack.c.b16 %v356, %v352
    %v393 = vpack.c.b16 %v361, %v357
    %v394 = vpack.c.b16 %v362, %v358
    %v395 = vpack.c.b16 %v363, %v359
    %v396 = vpack.c.b16 %v364, %v360
    %429 = vmatprep.subr.bf16.mxu0 %v366
    %430 = vmatpush1.bf16.msra.mxu0 %v365
    %431 = vmatprep.subr.bf16.mxu0 %v370
    %432 = vmatpush1.bf16.msra.mxu0 %v369
    %433 = vmatprep.subr.bf16.mxu0 %v374
    %434 = vmatpush1.bf16.msra.mxu0 %v373
    %435 = vmatprep.subr.bf16.mxu0 %v378
    %436 = vmatpush1.bf16.msra.mxu0 %v377
    %437 = vmatprep.subr.bf16.mxu0 %v382
    %438 = vmatpush1.bf16.msra.mxu0 %v381
    %439 = vmatprep.subr.bf16.mxu0 %v386
    %440 = vmatpush1.bf16.msra.mxu0 %v385
    %441 = vmatprep.subr.bf16.mxu0 %v390
    %442 = vmatpush1.bf16.msra.mxu0 %v389
    %443 = vmatprep.subr.bf16.mxu0 %v394
    %444 = vmatpush1.bf16.msra.mxu0 %v393
    %445 = vmatprep.subr.bf16.mxu0 0
    %446 = vmatpush1.bf16.msra.mxu0 0
    %447 = vmatprep.subr.bf16.mxu0 0
    %448 = vmatpush1.bf16.msra.mxu0 0
    %449 = vmatprep.subr.bf16.mxu0 0
    %450 = vmatpush1.bf16.msra.mxu0 0
    %451 = vmatprep.subr.bf16.mxu0 0
    %452 = vmatpush1.bf16.msra.mxu0 0
    %453 = vmatprep.subr.bf16.mxu0 0
    %454 = vmatpush1.bf16.msra.mxu0 0
    %455 = vmatprep.subr.bf16.mxu0 0
    %456 = vmatpush1.bf16.msra.mxu0 0
    %457 = vmatprep.subr.bf16.mxu0 0
    %458 = vmatpush1.bf16.msra.mxu0 0
    %459 = vmatprep.subr.bf16.mxu0 0
    %460 = vmatpush1.bf16.msra.mxu0 0
    %461 = vmatprep.mubr.bf16.mxu0 0
    %462 = vmatmul.mubr.bf16.gmra.mrb[0].mxu0 %v268
    %v463 = vpop.f32.mrb[0].mxu0
    %v464 = vadd.f32 0.0, %v463
    %v465 = vpop.f32.mrb[0].mxu0
    %v466 = vadd.f32 0.0, %v465
    %v467 = vpop.f32.mrb[0].mxu0
    %v468 = vpop.f32.mrb[0].mxu0
    %469 = vdwg.mxu0
    %470 = vmatprep.subr.bf16.mxu0 %v368
    %471 = vmatpush1.bf16.msra.mxu0 %v367
    %472 = vmatprep.subr.bf16.mxu0 %v372
    %473 = vmatpush1.bf16.msra.mxu0 %v371
    %474 = vmatprep.subr.bf16.mxu0 %v376
    %475 = vmatpush1.bf16.msra.mxu0 %v375
    %476 = vmatprep.subr.bf16.mxu0 %v380
    %477 = vmatpush1.bf16.msra.mxu0 %v379
    %478 = vmatprep.subr.bf16.mxu0 %v384
    %479 = vmatpush1.bf16.msra.mxu0 %v383
    %480 = vmatprep.subr.bf16.mxu0 %v388
    %481 = vmatpush1.bf16.msra.mxu0 %v387
    %482 = vmatprep.subr.bf16.mxu0 %v392
    %483 = vmatpush1.bf16.msra.mxu0 %v391
    %484 = vmatprep.subr.bf16.mxu0 %v396
    %485 = vmatpush1.bf16.msra.mxu0 %v395
    %486 = vmatprep.subr.bf16.mxu0 0
    %487 = vmatpush1.bf16.msra.mxu0 0
    %488 = vmatprep.subr.bf16.mxu0 0
    %489 = vmatpush1.bf16.msra.mxu0 0
    %490 = vmatprep.subr.bf16.mxu0 0
    %491 = vmatpush1.bf16.msra.mxu0 0
    %492 = vmatprep.subr.bf16.mxu0 0
    %493 = vmatpush1.bf16.msra.mxu0 0
    %494 = vmatprep.subr.bf16.mxu0 0
    %495 = vmatpush1.bf16.msra.mxu0 0
    %496 = vmatprep.subr.bf16.mxu0 0
    %497 = vmatpush1.bf16.msra.mxu0 0
    %498 = vmatprep.subr.bf16.mxu0 0
    %499 = vmatpush1.bf16.msra.mxu0 0
    %500 = vmatprep.subr.bf16.mxu0 0
    %501 = vmatpush1.bf16.msra.mxu0 0
    %502 = vmatprep.mubr.bf16.mxu0 0
    %503 = vmatmul.mubr.bf16.gmra.mrb[0].mxu0 %v268
    %v504 = vpop.f32.mrb[0].mxu0
    %v505 = vadd.f32 0.0, %v504
    %v506 = vpop.f32.mrb[0].mxu0
    %v507 = vadd.f32 0.0, %v506
    %v508 = vpop.f32.mrb[0].mxu0
    %v509 = vpop.f32.mrb[0].mxu0
    %510 = vdwg.mxu0
    %v515 = vrot.slane %v464, 1
    %v516 = vrot.slane %v466, 1
    %v517 = vrot.slane %v505, 1
    %v518 = vrot.slane %v507, 1
    %v527 = vadd.f32 %v218, %v464
    %v528 = vadd.f32 %v219, %v466
    %v529 = vadd.f32 %v220, %v505
    %v530 = vadd.f32 %v221, %v507
    %v531 = vadd.f32 %v226, %v515
    %v532 = vadd.f32 %v227, %v516
    %v533 = vadd.f32 %v228, %v517
    %v534 = vadd.f32 %v229, %v518
    %v535 = vmul.f32 %v527, 0.5
    %v536 = vmul.f32 %v531, 0.5
    %v537 = vtanh.pop %v535
    %v538 = vtanh.pop %v536
    %v539 = vmul.f32 %v537, 0.5
    %v540 = vmul.f32 %v538, 0.5
    %v541 = vadd.f32 %v539, 0.5
    %v542 = vadd.f32 %v540, 0.5
    %v543 = vmul.f32 %v528, 0.5
    %v544 = vmul.f32 %v532, 0.5
    %v545 = vtanh.pop %v543
    %v546 = vtanh.pop %v544
    %v547 = vmul.f32 %v545, 0.5
    %v548 = vmul.f32 %v546, 0.5
    %v549 = vadd.f32 %v547, 0.5
    %v550 = vadd.f32 %v548, 0.5
    %v551 = vtanh.pop %v529
    %v552 = vtanh.pop %v533
    %v553 = vmul.f32 %v530, 0.5
    %v554 = vmul.f32 %v534, 0.5
    %v555 = vtanh.pop %v553
    %v556 = vtanh.pop %v554
    %v557 = vmul.f32 %v555, 0.5
    %v558 = vmul.f32 %v556, 0.5
    %v559 = vadd.f32 %v557, 0.5
    %v560 = vadd.f32 %v558, 0.5
    %v562 = vrot.slane %v267, 1
    %v565 = vmul.f32 %v549, %v267
    %v566 = vmul.f32 %v550, %v562
    %v567 = vmul.f32 %v541, %v551
    %v568 = vmul.f32 %v542, %v552
    %v569 = vadd.f32 %v565, %v567
    %v570 = vadd.f32 %v566, %v568
    %v571 = vtanh.pop %v569
    %v572 = vtanh.pop %v570
    %v573 = vmul.f32 %v559, %v571
    %v574 = vmul.f32 %v560, %v572
    %s575 = smul.u32 0, 16
    %p576 = scmp.lt.s32.totalorder %s575, 8
    %s577 = scalar_select %p576, 1, 0
    %v578 = vstv %s577
    %vm579 = vcmp.eq.s32.totalorder %v578, 1
    %v580 = vsel %vm579, %v569, %v267
    %v581 = vsel %vm579, %v570, %v562
    %v583 = vrot.slane %v266, 1
    %v586 = vsel %vm579, %v573, %v266
    %v587 = vsel %vm579, %v574, %v583
    %v588 = vpack.c.bf16 %v586, %v586
    %v589 = vpack.c.bf16 %v587, %v587
    %v592 = vunpack.c.l.b16 %v588
    %v593 = vunpack.c.l.b16 %v589
    %v594 = vrot.slane %v593, 7
    %vm595 = vcmask 1041409
    %v596 = vsel %vm595, %v594, %v592
    %v597 = vpack.c.b16 %v596, %v596
    %599 = vmatprep.subr.bf16.mxu0 %v366
    %600 = vmatpush1.bf16.msra.mxu0 %v365
    %601 = vmatprep.subr.bf16.mxu0 %v370
    %602 = vmatpush1.bf16.msra.mxu0 %v369
    %603 = vmatprep.subr.bf16.mxu0 %v374
    %604 = vmatpush1.bf16.msra.mxu0 %v373
    %605 = vmatprep.subr.bf16.mxu0 %v378
    %606 = vmatpush1.bf16.msra.mxu0 %v377
    %607 = vmatprep.subr.bf16.mxu0 %v382
    %608 = vmatpush1.bf16.msra.mxu0 %v381
    %609 = vmatprep.subr.bf16.mxu0 %v386
    %610 = vmatpush1.bf16.msra.mxu0 %v385
    %611 = vmatprep.subr.bf16.mxu0 %v390
    %612 = vmatpush1.bf16.msra.mxu0 %v389
    %613 = vmatprep.subr.bf16.mxu0 %v394
    %614 = vmatpush1.bf16.msra.mxu0 %v393
    %615 = vmatprep.subr.bf16.mxu0 0
    %616 = vmatpush1.bf16.msra.mxu0 0
    %617 = vmatprep.subr.bf16.mxu0 0
    %618 = vmatpush1.bf16.msra.mxu0 0
    %619 = vmatprep.subr.bf16.mxu0 0
    %620 = vmatpush1.bf16.msra.mxu0 0
    %621 = vmatprep.subr.bf16.mxu0 0
    %622 = vmatpush1.bf16.msra.mxu0 0
    %623 = vmatprep.subr.bf16.mxu0 0
    %624 = vmatpush1.bf16.msra.mxu0 0
    %625 = vmatprep.subr.bf16.mxu0 0
    %626 = vmatpush1.bf16.msra.mxu0 0
    %627 = vmatprep.subr.bf16.mxu0 0
    %628 = vmatpush1.bf16.msra.mxu0 0
    %629 = vmatprep.subr.bf16.mxu0 0
    %630 = vmatpush1.bf16.msra.mxu0 0
    %631 = vmatprep.mubr.bf16.mxu0 0
    %632 = vmatmul.mubr.bf16.gmra.mrb[0].mxu0 %v597
    %v633 = vpop.f32.mrb[0].mxu0
    %v634 = vadd.f32 0.0, %v633
    %v635 = vpop.f32.mrb[0].mxu0
    %v636 = vadd.f32 0.0, %v635
    %v637 = vpop.f32.mrb[0].mxu0
    %v638 = vpop.f32.mrb[0].mxu0
    %639 = vdwg.mxu0
    %640 = vmatprep.subr.bf16.mxu0 %v368
    %641 = vmatpush1.bf16.msra.mxu0 %v367
    %642 = vmatprep.subr.bf16.mxu0 %v372
    %643 = vmatpush1.bf16.msra.mxu0 %v371
    %644 = vmatprep.subr.bf16.mxu0 %v376
    %645 = vmatpush1.bf16.msra.mxu0 %v375
    %646 = vmatprep.subr.bf16.mxu0 %v380
    %647 = vmatpush1.bf16.msra.mxu0 %v379
    %648 = vmatprep.subr.bf16.mxu0 %v384
    %649 = vmatpush1.bf16.msra.mxu0 %v383
    %650 = vmatprep.subr.bf16.mxu0 %v388
    %651 = vmatpush1.bf16.msra.mxu0 %v387
    %652 = vmatprep.subr.bf16.mxu0 %v392
    %653 = vmatpush1.bf16.msra.mxu0 %v391
    %654 = vmatprep.subr.bf16.mxu0 %v396
    %655 = vmatpush1.bf16.msra.mxu0 %v395
    %656 = vmatprep.subr.bf16.mxu0 0
    %657 = vmatpush1.bf16.msra.mxu0 0
    %658 = vmatprep.subr.bf16.mxu0 0
    %659 = vmatpush1.bf16.msra.mxu0 0
    %660 = vmatprep.subr.bf16.mxu0 0
    %661 = vmatpush1.bf16.msra.mxu0 0
    %662 = vmatprep.subr.bf16.mxu0 0
    %663 = vmatpush1.bf16.msra.mxu0 0
    %664 = vmatprep.subr.bf16.mxu0 0
    %665 = vmatpush1.bf16.msra.mxu0 0
    %666 = vmatprep.subr.bf16.mxu0 0
    %667 = vmatpush1.bf16.msra.mxu0 0
    %668 = vmatprep.subr.bf16.mxu0 0
    %669 = vmatpush1.bf16.msra.mxu0 0
    %670 = vmatprep.subr.bf16.mxu0 0
    %671 = vmatpush1.bf16.msra.mxu0 0
    %672 = vmatprep.mubr.bf16.mxu0 0
    %673 = vmatmul.mubr.bf16.gmra.mrb[0].mxu0 %v597
    %v674 = vpop.f32.mrb[0].mxu0
    %v675 = vadd.f32 0.0, %v674
    %v676 = vpop.f32.mrb[0].mxu0
    %v677 = vadd.f32 0.0, %v676
    %v678 = vpop.f32.mrb[0].mxu0
    %v679 = vpop.f32.mrb[0].mxu0
    %680 = vdwg.mxu0
    %v685 = vrot.slane %v634, 7
    %v686 = vrot.slane %v636, 7
    %v687 = vrot.slane %v675, 7
    %v688 = vrot.slane %v677, 7
    %v697 = vadd.f32 %v218, %v685
    %v698 = vadd.f32 %v219, %v686
    %v699 = vadd.f32 %v220, %v687
    %v700 = vadd.f32 %v221, %v688
    %v701 = vadd.f32 %v226, %v634
    %v702 = vadd.f32 %v227, %v636
    %v703 = vadd.f32 %v228, %v675
    %v704 = vadd.f32 %v229, %v677
    %v705 = vmul.f32 %v697, 0.5
    %v706 = vmul.f32 %v701, 0.5
    %v707 = vtanh.pop %v705
    %v708 = vtanh.pop %v706
    %v709 = vmul.f32 %v707, 0.5
    %v710 = vmul.f32 %v708, 0.5
    %v711 = vadd.f32 %v709, 0.5
    %v712 = vadd.f32 %v710, 0.5
    %v713 = vmul.f32 %v698, 0.5
    %v714 = vmul.f32 %v702, 0.5
    %v715 = vtanh.pop %v713
    %v716 = vtanh.pop %v714
    %v717 = vmul.f32 %v715, 0.5
    %v718 = vmul.f32 %v716, 0.5
    %v719 = vadd.f32 %v717, 0.5
    %v720 = vadd.f32 %v718, 0.5
    %v721 = vtanh.pop %v699
    %v722 = vtanh.pop %v703
    %v723 = vmul.f32 %v700, 0.5
    %v724 = vmul.f32 %v704, 0.5
    %v725 = vtanh.pop %v723
    %v726 = vtanh.pop %v724
    %v727 = vmul.f32 %v725, 0.5
    %v728 = vmul.f32 %v726, 0.5
    %v729 = vadd.f32 %v727, 0.5
    %v730 = vadd.f32 %v728, 0.5
    %v733 = vrot.slane %v580, 7
    %v734 = vrot.slane %v581, 7
    %v737 = vmul.f32 %v719, %v733
    %v738 = vmul.f32 %v720, %v734
    %v739 = vmul.f32 %v711, %v721
    %v740 = vmul.f32 %v712, %v722
    %v741 = vadd.f32 %v737, %v739
    %v742 = vadd.f32 %v738, %v740
    %v743 = vtanh.pop %v741
    %v744 = vtanh.pop %v742
    %v745 = vmul.f32 %v729, %v743
    %v746 = vmul.f32 %v730, %v744
    %s747 = sadd.s32 %s575, 1
    %p748 = scmp.lt.s32.totalorder %s747, 8
    %s749 = scalar_select %p748, 1, 0
    %v750 = vstv %s749
    %vm751 = vcmp.eq.s32.totalorder %v750, 1
    %v752 = vsel %vm751, %v741, %v733
    %v753 = vsel %vm751, %v742, %v734
    %v756 = vrot.slane %v586, 7
    %v757 = vrot.slane %v587, 7
    %v760 = vsel %vm751, %v745, %v756
    %v761 = vsel %vm751, %v746, %v757
    %v762 = vpack.c.bf16 %v760, %v760
    %v763 = vpack.c.bf16 %v761, %v761
    %v766 = vunpack.c.l.b16 %v762
    %v767 = vunpack.c.l.b16 %v763
    %v768 = vrot.slane %v766, 1
    %v769 = vsel %vm595, %v767, %v768
    %v770 = vpack.c.b16 %v769, %v769
    %772 = vmatprep.subr.bf16.mxu0 %v366
    %773 = vmatpush1.bf16.msra.mxu0 %v365
    %774 = vmatprep.subr.bf16.mxu0 %v370
    %775 = vmatpush1.bf16.msra.mxu0 %v369
    %776 = vmatprep.subr.bf16.mxu0 %v374
    %777 = vmatpush1.bf16.msra.mxu0 %v373
    %778 = vmatprep.subr.bf16.mxu0 %v378
    %779 = vmatpush1.bf16.msra.mxu0 %v377
    %780 = vmatprep.subr.bf16.mxu0 %v382
    %781 = vmatpush1.bf16.msra.mxu0 %v381
    %782 = vmatprep.subr.bf16.mxu0 %v386
    %783 = vmatpush1.bf16.msra.mxu0 %v385
    %784 = vmatprep.subr.bf16.mxu0 %v390
    %785 = vmatpush1.bf16.msra.mxu0 %v389
    %786 = vmatprep.subr.bf16.mxu0 %v394
    %787 = vmatpush1.bf16.msra.mxu0 %v393
    %788 = vmatprep.subr.bf16.mxu0 0
    %789 = vmatpush1.bf16.msra.mxu0 0
    %790 = vmatprep.subr.bf16.mxu0 0
    %791 = vmatpush1.bf16.msra.mxu0 0
    %792 = vmatprep.subr.bf16.mxu0 0
    %793 = vmatpush1.bf16.msra.mxu0 0
    %794 = vmatprep.subr.bf16.mxu0 0
    %795 = vmatpush1.bf16.msra.mxu0 0
    %796 = vmatprep.subr.bf16.mxu0 0
    %797 = vmatpush1.bf16.msra.mxu0 0
    %798 = vmatprep.subr.bf16.mxu0 0
    %799 = vmatpush1.bf16.msra.mxu0 0
    %800 = vmatprep.subr.bf16.mxu0 0
    %801 = vmatpush1.bf16.msra.mxu0 0
    %802 = vmatprep.subr.bf16.mxu0 0
    %803 = vmatpush1.bf16.msra.mxu0 0
    %804 = vmatprep.mubr.bf16.mxu0 0
    %805 = vmatmul.mubr.bf16.gmra.mrb[0].mxu0 %v770
    %v806 = vpop.f32.mrb[0].mxu0
    %v807 = vadd.f32 0.0, %v806
    %v808 = vpop.f32.mrb[0].mxu0
    %v809 = vadd.f32 0.0, %v808
    %v810 = vpop.f32.mrb[0].mxu0
    %v811 = vpop.f32.mrb[0].mxu0
    %812 = vdwg.mxu0
    %813 = vmatprep.subr.bf16.mxu0 %v368
    %814 = vmatpush1.bf16.msra.mxu0 %v367
    %815 = vmatprep.subr.bf16.mxu0 %v372
    %816 = vmatpush1.bf16.msra.mxu0 %v371
    %817 = vmatprep.subr.bf16.mxu0 %v376
    %818 = vmatpush1.bf16.msra.mxu0 %v375
    %819 = vmatprep.subr.bf16.mxu0 %v380
    %820 = vmatpush1.bf16.msra.mxu0 %v379
    %821 = vmatprep.subr.bf16.mxu0 %v384
    %822 = vmatpush1.bf16.msra.mxu0 %v383
    %823 = vmatprep.subr.bf16.mxu0 %v388
    %824 = vmatpush1.bf16.msra.mxu0 %v387
    %825 = vmatprep.subr.bf16.mxu0 %v392
    %826 = vmatpush1.bf16.msra.mxu0 %v391
    %827 = vmatprep.subr.bf16.mxu0 %v396
    %828 = vmatpush1.bf16.msra.mxu0 %v395
    %829 = vmatprep.subr.bf16.mxu0 0
    %830 = vmatpush1.bf16.msra.mxu0 0
    %831 = vmatprep.subr.bf16.mxu0 0
    %832 = vmatpush1.bf16.msra.mxu0 0
    %833 = vmatprep.subr.bf16.mxu0 0
    %834 = vmatpush1.bf16.msra.mxu0 0
    %835 = vmatprep.subr.bf16.mxu0 0
    %836 = vmatpush1.bf16.msra.mxu0 0
    %837 = vmatprep.subr.bf16.mxu0 0
    %838 = vmatpush1.bf16.msra.mxu0 0
    %839 = vmatprep.subr.bf16.mxu0 0
    %840 = vmatpush1.bf16.msra.mxu0 0
    %841 = vmatprep.subr.bf16.mxu0 0
    %842 = vmatpush1.bf16.msra.mxu0 0
    %843 = vmatprep.subr.bf16.mxu0 0
    %844 = vmatpush1.bf16.msra.mxu0 0
    %845 = vmatprep.mubr.bf16.mxu0 0
    %846 = vmatmul.mubr.bf16.gmra.mrb[0].mxu0 %v770
    %v847 = vpop.f32.mrb[0].mxu0
    %v848 = vadd.f32 0.0, %v847
    %v849 = vpop.f32.mrb[0].mxu0
    %v850 = vadd.f32 0.0, %v849
    %v851 = vpop.f32.mrb[0].mxu0
    %v852 = vpop.f32.mrb[0].mxu0
    %853 = vdwg.mxu0
    %v858 = vrot.slane %v807, 6
    %v859 = vrot.slane %v809, 6
    %v860 = vrot.slane %v848, 6
    %v861 = vrot.slane %v850, 6
    %v862 = vrot.slane %v807, 7
    %v863 = vrot.slane %v809, 7
    %v864 = vrot.slane %v848, 7
    %v865 = vrot.slane %v850, 7
    %v874 = vadd.f32 %v218, %v858
    %v875 = vadd.f32 %v219, %v859
    %v876 = vadd.f32 %v220, %v860
    %v877 = vadd.f32 %v221, %v861
    %v878 = vadd.f32 %v226, %v862
    %v879 = vadd.f32 %v227, %v863
    %v880 = vadd.f32 %v228, %v864
    %v881 = vadd.f32 %v229, %v865
    %v882 = vmul.f32 %v874, 0.5
    %v883 = vmul.f32 %v878, 0.5
    %v884 = vtanh.pop %v882
    %v885 = vtanh.pop %v883
    %v886 = vmul.f32 %v884, 0.5
    %v887 = vmul.f32 %v885, 0.5
    %v888 = vadd.f32 %v886, 0.5
    %v889 = vadd.f32 %v887, 0.5
    %v890 = vmul.f32 %v875, 0.5
    %v891 = vmul.f32 %v879, 0.5
    %v892 = vtanh.pop %v890
    %v893 = vtanh.pop %v891
    %v894 = vmul.f32 %v892, 0.5
    %v895 = vmul.f32 %v893, 0.5
    %v896 = vadd.f32 %v894, 0.5
    %v897 = vadd.f32 %v895, 0.5
    %v898 = vtanh.pop %v876
    %v899 = vtanh.pop %v880
    %v900 = vmul.f32 %v877, 0.5
    %v901 = vmul.f32 %v881, 0.5
    %v902 = vtanh.pop %v900
    %v903 = vtanh.pop %v901
    %v904 = vmul.f32 %v902, 0.5
    %v905 = vmul.f32 %v903, 0.5
    %v906 = vadd.f32 %v904, 0.5
    %v907 = vadd.f32 %v905, 0.5
    %v910 = vrot.slane %v752, 7
    %v911 = vrot.slane %v753, 7
    %v914 = vmul.f32 %v896, %v910
    %v915 = vmul.f32 %v897, %v911
    %v916 = vmul.f32 %v888, %v898
    %v917 = vmul.f32 %v889, %v899
    %v918 = vadd.f32 %v914, %v916
    %v919 = vadd.f32 %v915, %v917
    %v920 = vtanh.pop %v918
    %v921 = vtanh.pop %v919
    %v922 = vmul.f32 %v906, %v920
    %v923 = vmul.f32 %v907, %v921
    %s924 = sadd.s32 %s575, 2
    %p925 = scmp.lt.s32.totalorder %s924, 8
    %s926 = scalar_select %p925, 1, 0
    %v927 = vstv %s926
    %vm928 = vcmp.eq.s32.totalorder %v927, 1
    %v929 = vsel %vm928, %v918, %v910
    %v930 = vsel %vm928, %v919, %v911
    %v933 = vrot.slane %v760, 7
    %v934 = vrot.slane %v761, 7
    %v937 = vsel %vm928, %v922, %v933
    %v938 = vsel %vm928, %v923, %v934
    %v939 = vpack.c.bf16 %v937, %v937
    %v940 = vpack.c.bf16 %v938, %v938
    %v943 = vunpack.c.l.b16 %v939
    %v944 = vunpack.c.l.b16 %v940
    %v945 = vrot.slane %v943, 2
    %v946 = vrot.slane %v944, 1
    %v947 = vsel %vm595, %v946, %v945
    %v948 = vpack.c.b16 %v947, %v947
    %950 = vmatprep.subr.bf16.mxu0 %v366
    %951 = vmatpush1.bf16.msra.mxu0 %v365
    %952 = vmatprep.subr.bf16.mxu0 %v370
    %953 = vmatpush1.bf16.msra.mxu0 %v369
    %954 = vmatprep.subr.bf16.mxu0 %v374
    %955 = vmatpush1.bf16.msra.mxu0 %v373
    %956 = vmatprep.subr.bf16.mxu0 %v378
    %957 = vmatpush1.bf16.msra.mxu0 %v377
    %958 = vmatprep.subr.bf16.mxu0 %v382
    %959 = vmatpush1.bf16.msra.mxu0 %v381
    %960 = vmatprep.subr.bf16.mxu0 %v386
    %961 = vmatpush1.bf16.msra.mxu0 %v385
    %962 = vmatprep.subr.bf16.mxu0 %v390
    %963 = vmatpush1.bf16.msra.mxu0 %v389
    %964 = vmatprep.subr.bf16.mxu0 %v394
    %965 = vmatpush1.bf16.msra.mxu0 %v393
    %966 = vmatprep.subr.bf16.mxu0 0
    %967 = vmatpush1.bf16.msra.mxu0 0
    %968 = vmatprep.subr.bf16.mxu0 0
    %969 = vmatpush1.bf16.msra.mxu0 0
    %970 = vmatprep.subr.bf16.mxu0 0
    %971 = vmatpush1.bf16.msra.mxu0 0
    %972 = vmatprep.subr.bf16.mxu0 0
    %973 = vmatpush1.bf16.msra.mxu0 0
    %974 = vmatprep.subr.bf16.mxu0 0
    %975 = vmatpush1.bf16.msra.mxu0 0
    %976 = vmatprep.subr.bf16.mxu0 0
    %977 = vmatpush1.bf16.msra.mxu0 0
    %978 = vmatprep.subr.bf16.mxu0 0
    %979 = vmatpush1.bf16.msra.mxu0 0
    %980 = vmatprep.subr.bf16.mxu0 0
    %981 = vmatpush1.bf16.msra.mxu0 0
    %982 = vmatprep.mubr.bf16.mxu0 0
    %983 = vmatmul.mubr.bf16.gmra.mrb[0].mxu0 %v948
    %v984 = vpop.f32.mrb[0].mxu0
    %v985 = vadd.f32 0.0, %v984
    %v986 = vpop.f32.mrb[0].mxu0
    %v987 = vadd.f32 0.0, %v986
    %v988 = vpop.f32.mrb[0].mxu0
    %v989 = vpop.f32.mrb[0].mxu0
    %990 = vdwg.mxu0
    %991 = vmatprep.subr.bf16.mxu0 %v368
    %992 = vmatpush1.bf16.msra.mxu0 %v367
    %993 = vmatprep.subr.bf16.mxu0 %v372
    %994 = vmatpush1.bf16.msra.mxu0 %v371
    %995 = vmatprep.subr.bf16.mxu0 %v376
    %996 = vmatpush1.bf16.msra.mxu0 %v375
    %997 = vmatprep.subr.bf16.mxu0 %v380
    %998 = vmatpush1.bf16.msra.mxu0 %v379
    %999 = vmatprep.subr.bf16.mxu0 %v384
    %1000 = vmatpush1.bf16.msra.mxu0 %v383
    %1001 = vmatprep.subr.bf16.mxu0 %v388
    %1002 = vmatpush1.bf16.msra.mxu0 %v387
    %1003 = vmatprep.subr.bf16.mxu0 %v392
    %1004 = vmatpush1.bf16.msra.mxu0 %v391
    %1005 = vmatprep.subr.bf16.mxu0 %v396
    %1006 = vmatpush1.bf16.msra.mxu0 %v395
    %1007 = vmatprep.subr.bf16.mxu0 0
    %1008 = vmatpush1.bf16.msra.mxu0 0
    %1009 = vmatprep.subr.bf16.mxu0 0
    %1010 = vmatpush1.bf16.msra.mxu0 0
    %1011 = vmatprep.subr.bf16.mxu0 0
    %1012 = vmatpush1.bf16.msra.mxu0 0
    %1013 = vmatprep.subr.bf16.mxu0 0
    %1014 = vmatpush1.bf16.msra.mxu0 0
    %1015 = vmatprep.subr.bf16.mxu0 0
    %1016 = vmatpush1.bf16.msra.mxu0 0
    %1017 = vmatprep.subr.bf16.mxu0 0
    %1018 = vmatpush1.bf16.msra.mxu0 0
    %1019 = vmatprep.subr.bf16.mxu0 0
    %1020 = vmatpush1.bf16.msra.mxu0 0
    %1021 = vmatprep.subr.bf16.mxu0 0
    %1022 = vmatpush1.bf16.msra.mxu0 0
    %1023 = vmatprep.mubr.bf16.mxu0 0
    %1024 = vmatmul.mubr.bf16.gmra.mrb[0].mxu0 %v948
    %v1025 = vpop.f32.mrb[0].mxu0
    %v1026 = vadd.f32 0.0, %v1025
    %v1027 = vpop.f32.mrb[0].mxu0
    %v1028 = vadd.f32 0.0, %v1027
    %v1029 = vpop.f32.mrb[0].mxu0
    %v1030 = vpop.f32.mrb[0].mxu0
    %1031 = vdwg.mxu0
    %v1036 = vrot.slane %v985, 5
    %v1037 = vrot.slane %v987, 5
    %v1038 = vrot.slane %v1026, 5
    %v1039 = vrot.slane %v1028, 5
    %v1040 = vrot.slane %v985, 6
    %v1041 = vrot.slane %v987, 6
    %v1042 = vrot.slane %v1026, 6
    %v1043 = vrot.slane %v1028, 6
    %v1052 = vadd.f32 %v218, %v1036
    %v1053 = vadd.f32 %v219, %v1037
    %v1054 = vadd.f32 %v220, %v1038
    %v1055 = vadd.f32 %v221, %v1039
    %v1056 = vadd.f32 %v226, %v1040
    %v1057 = vadd.f32 %v227, %v1041
    %v1058 = vadd.f32 %v228, %v1042
    %v1059 = vadd.f32 %v229, %v1043
    %v1060 = vmul.f32 %v1052, 0.5
    %v1061 = vmul.f32 %v1056, 0.5
    %v1062 = vtanh.pop %v1060
    %v1063 = vtanh.pop %v1061
    %v1064 = vmul.f32 %v1062, 0.5
    %v1065 = vmul.f32 %v1063, 0.5
    %v1066 = vadd.f32 %v1064, 0.5
    %v1067 = vadd.f32 %v1065, 0.5
    %v1068 = vmul.f32 %v1053, 0.5
    %v1069 = vmul.f32 %v1057, 0.5
    %v1070 = vtanh.pop %v1068
    %v1071 = vtanh.pop %v1069
    %v1072 = vmul.f32 %v1070, 0.5
    %v1073 = vmul.f32 %v1071, 0.5
    %v1074 = vadd.f32 %v1072, 0.5
    %v1075 = vadd.f32 %v1073, 0.5
    %v1076 = vtanh.pop %v1054
    %v1077 = vtanh.pop %v1058
    %v1078 = vmul.f32 %v1055, 0.5
    %v1079 = vmul.f32 %v1059, 0.5
    %v1080 = vtanh.pop %v1078
    %v1081 = vtanh.pop %v1079
    %v1082 = vmul.f32 %v1080, 0.5
    %v1083 = vmul.f32 %v1081, 0.5
    %v1084 = vadd.f32 %v1082, 0.5
    %v1085 = vadd.f32 %v1083, 0.5
    %v1088 = vrot.slane %v929, 7
    %v1089 = vrot.slane %v930, 7
    %v1092 = vmul.f32 %v1074, %v1088
    %v1093 = vmul.f32 %v1075, %v1089
    %v1094 = vmul.f32 %v1066, %v1076
    %v1095 = vmul.f32 %v1067, %v1077
    %v1096 = vadd.f32 %v1092, %v1094
    %v1097 = vadd.f32 %v1093, %v1095
    %v1098 = vtanh.pop %v1096
    %v1099 = vtanh.pop %v1097
    %v1100 = vmul.f32 %v1084, %v1098
    %v1101 = vmul.f32 %v1085, %v1099
    %s1102 = sadd.s32 %s575, 3
    %p1103 = scmp.lt.s32.totalorder %s1102, 8
    %s1104 = scalar_select %p1103, 1, 0
    %v1105 = vstv %s1104
    %vm1106 = vcmp.eq.s32.totalorder %v1105, 1
    %v1107 = vsel %vm1106, %v1096, %v1088
    %v1108 = vsel %vm1106, %v1097, %v1089
    %v1111 = vrot.slane %v937, 7
    %v1112 = vrot.slane %v938, 7
    %v1115 = vsel %vm1106, %v1100, %v1111
    %v1116 = vsel %vm1106, %v1101, %v1112
    %v1117 = vpack.c.bf16 %v1115, %v1115
    %v1118 = vpack.c.bf16 %v1116, %v1116
    %v1121 = vunpack.c.l.b16 %v1117
    %v1122 = vunpack.c.l.b16 %v1118
    %v1123 = vrot.slane %v1121, 3
    %v1124 = vrot.slane %v1122, 2
    %v1125 = vsel %vm595, %v1124, %v1123
    %v1126 = vpack.c.b16 %v1125, %v1125
    %1128 = vmatprep.subr.bf16.mxu0 %v366
    %1129 = vmatpush1.bf16.msra.mxu0 %v365
    %1130 = vmatprep.subr.bf16.mxu0 %v370
    %1131 = vmatpush1.bf16.msra.mxu0 %v369
    %1132 = vmatprep.subr.bf16.mxu0 %v374
    %1133 = vmatpush1.bf16.msra.mxu0 %v373
    %1134 = vmatprep.subr.bf16.mxu0 %v378
    %1135 = vmatpush1.bf16.msra.mxu0 %v377
    %1136 = vmatprep.subr.bf16.mxu0 %v382
    %1137 = vmatpush1.bf16.msra.mxu0 %v381
    %1138 = vmatprep.subr.bf16.mxu0 %v386
    %1139 = vmatpush1.bf16.msra.mxu0 %v385
    %1140 = vmatprep.subr.bf16.mxu0 %v390
    %1141 = vmatpush1.bf16.msra.mxu0 %v389
    %1142 = vmatprep.subr.bf16.mxu0 %v394
    %1143 = vmatpush1.bf16.msra.mxu0 %v393
    %1144 = vmatprep.subr.bf16.mxu0 0
    %1145 = vmatpush1.bf16.msra.mxu0 0
    %1146 = vmatprep.subr.bf16.mxu0 0
    %1147 = vmatpush1.bf16.msra.mxu0 0
    %1148 = vmatprep.subr.bf16.mxu0 0
    %1149 = vmatpush1.bf16.msra.mxu0 0
    %1150 = vmatprep.subr.bf16.mxu0 0
    %1151 = vmatpush1.bf16.msra.mxu0 0
    %1152 = vmatprep.subr.bf16.mxu0 0
    %1153 = vmatpush1.bf16.msra.mxu0 0
    %1154 = vmatprep.subr.bf16.mxu0 0
    %1155 = vmatpush1.bf16.msra.mxu0 0
    %1156 = vmatprep.subr.bf16.mxu0 0
    %1157 = vmatpush1.bf16.msra.mxu0 0
    %1158 = vmatprep.subr.bf16.mxu0 0
    %1159 = vmatpush1.bf16.msra.mxu0 0
    %1160 = vmatprep.mubr.bf16.mxu0 0
    %1161 = vmatmul.mubr.bf16.gmra.mrb[0].mxu0 %v1126
    %v1162 = vpop.f32.mrb[0].mxu0
    %v1163 = vadd.f32 0.0, %v1162
    %v1164 = vpop.f32.mrb[0].mxu0
    %v1165 = vadd.f32 0.0, %v1164
    %v1166 = vpop.f32.mrb[0].mxu0
    %v1167 = vpop.f32.mrb[0].mxu0
    %1168 = vdwg.mxu0
    %1169 = vmatprep.subr.bf16.mxu0 %v368
    %1170 = vmatpush1.bf16.msra.mxu0 %v367
    %1171 = vmatprep.subr.bf16.mxu0 %v372
    %1172 = vmatpush1.bf16.msra.mxu0 %v371
    %1173 = vmatprep.subr.bf16.mxu0 %v376
    %1174 = vmatpush1.bf16.msra.mxu0 %v375
    %1175 = vmatprep.subr.bf16.mxu0 %v380
    %1176 = vmatpush1.bf16.msra.mxu0 %v379
    %1177 = vmatprep.subr.bf16.mxu0 %v384
    %1178 = vmatpush1.bf16.msra.mxu0 %v383
    %1179 = vmatprep.subr.bf16.mxu0 %v388
    %1180 = vmatpush1.bf16.msra.mxu0 %v387
    %1181 = vmatprep.subr.bf16.mxu0 %v392
    %1182 = vmatpush1.bf16.msra.mxu0 %v391
    %1183 = vmatprep.subr.bf16.mxu0 %v396
    %1184 = vmatpush1.bf16.msra.mxu0 %v395
    %1185 = vmatprep.subr.bf16.mxu0 0
    %1186 = vmatpush1.bf16.msra.mxu0 0
    %1187 = vmatprep.subr.bf16.mxu0 0
    %1188 = vmatpush1.bf16.msra.mxu0 0
    %1189 = vmatprep.subr.bf16.mxu0 0
    %1190 = vmatpush1.bf16.msra.mxu0 0
    %1191 = vmatprep.subr.bf16.mxu0 0
    %1192 = vmatpush1.bf16.msra.mxu0 0
    %1193 = vmatprep.subr.bf16.mxu0 0
    %1194 = vmatpush1.bf16.msra.mxu0 0
    %1195 = vmatprep.subr.bf16.mxu0 0
    %1196 = vmatpush1.bf16.msra.mxu0 0
    %1197 = vmatprep.subr.bf16.mxu0 0
    %1198 = vmatpush1.bf16.msra.mxu0 0
    %1199 = vmatprep.subr.bf16.mxu0 0
    %1200 = vmatpush1.bf16.msra.mxu0 0
    %1201 = vmatprep.mubr.bf16.mxu0 0
    %1202 = vmatmul.mubr.bf16.gmra.mrb[0].mxu0 %v1126
    %v1203 = vpop.f32.mrb[0].mxu0
    %v1204 = vadd.f32 0.0, %v1203
    %v1205 = vpop.f32.mrb[0].mxu0
    %v1206 = vadd.f32 0.0, %v1205
    %v1207 = vpop.f32.mrb[0].mxu0
    %v1208 = vpop.f32.mrb[0].mxu0
    %1209 = vdwg.mxu0
    %v1214 = vrot.slane %v1163, 4
    %v1215 = vrot.slane %v1165, 4
    %v1216 = vrot.slane %v1204, 4
    %v1217 = vrot.slane %v1206, 4
    %v1218 = vrot.slane %v1163, 5
    %v1219 = vrot.slane %v1165, 5
    %v1220 = vrot.slane %v1204, 5
    %v1221 = vrot.slane %v1206, 5
    %v1230 = vadd.f32 %v218, %v1214
    %v1231 = vadd.f32 %v219, %v1215
    %v1232 = vadd.f32 %v220, %v1216
    %v1233 = vadd.f32 %v221, %v1217
    %v1234 = vadd.f32 %v226, %v1218
    %v1235 = vadd.f32 %v227, %v1219
    %v1236 = vadd.f32 %v228, %v1220
    %v1237 = vadd.f32 %v229, %v1221
    %v1238 = vmul.f32 %v1230, 0.5
    %v1239 = vmul.f32 %v1234, 0.5
    %v1240 = vtanh.pop %v1238
    %v1241 = vtanh.pop %v1239
    %v1242 = vmul.f32 %v1240, 0.5
    %v1243 = vmul.f32 %v1241, 0.5
    %v1244 = vadd.f32 %v1242, 0.5
    %v1245 = vadd.f32 %v1243, 0.5
    %v1246 = vmul.f32 %v1231, 0.5
    %v1247 = vmul.f32 %v1235, 0.5
    %v1248 = vtanh.pop %v1246
    %v1249 = vtanh.pop %v1247
    %v1250 = vmul.f32 %v1248, 0.5
    %v1251 = vmul.f32 %v1249, 0.5
    %v1252 = vadd.f32 %v1250, 0.5
    %v1253 = vadd.f32 %v1251, 0.5
    %v1254 = vtanh.pop %v1232
    %v1255 = vtanh.pop %v1236
    %v1256 = vmul.f32 %v1233, 0.5
    %v1257 = vmul.f32 %v1237, 0.5
    %v1258 = vtanh.pop %v1256
    %v1259 = vtanh.pop %v1257
    %v1260 = vmul.f32 %v1258, 0.5
    %v1261 = vmul.f32 %v1259, 0.5
    %v1262 = vadd.f32 %v1260, 0.5
    %v1263 = vadd.f32 %v1261, 0.5
    %v1266 = vrot.slane %v1107, 7
    %v1267 = vrot.slane %v1108, 7
    %v1270 = vmul.f32 %v1252, %v1266
    %v1271 = vmul.f32 %v1253, %v1267
    %v1272 = vmul.f32 %v1244, %v1254
    %v1273 = vmul.f32 %v1245, %v1255
    %v1274 = vadd.f32 %v1270, %v1272
    %v1275 = vadd.f32 %v1271, %v1273
    %v1276 = vtanh.pop %v1274
    %v1277 = vtanh.pop %v1275
    %v1278 = vmul.f32 %v1262, %v1276
    %v1279 = vmul.f32 %v1263, %v1277
    %s1280 = sadd.s32 %s575, 4
    %p1281 = scmp.lt.s32.totalorder %s1280, 8
    %s1282 = scalar_select %p1281, 1, 0
    %v1283 = vstv %s1282
    %vm1284 = vcmp.eq.s32.totalorder %v1283, 1
    %v1285 = vsel %vm1284, %v1274, %v1266
    %v1286 = vsel %vm1284, %v1275, %v1267
    %v1289 = vrot.slane %v1115, 7
    %v1290 = vrot.slane %v1116, 7
    %v1293 = vsel %vm1284, %v1278, %v1289
    %v1294 = vsel %vm1284, %v1279, %v1290
    %v1295 = vpack.c.bf16 %v1293, %v1293
    %v1296 = vpack.c.bf16 %v1294, %v1294
    %v1299 = vunpack.c.l.b16 %v1295
    %v1300 = vunpack.c.l.b16 %v1296
    %v1301 = vrot.slane %v1299, 4
    %v1302 = vrot.slane %v1300, 3
    %v1303 = vsel %vm595, %v1302, %v1301
    %v1304 = vpack.c.b16 %v1303, %v1303
    %1306 = vmatprep.subr.bf16.mxu0 %v366
    %1307 = vmatpush1.bf16.msra.mxu0 %v365
    %1308 = vmatprep.subr.bf16.mxu0 %v370
    %1309 = vmatpush1.bf16.msra.mxu0 %v369
    %1310 = vmatprep.subr.bf16.mxu0 %v374
    %1311 = vmatpush1.bf16.msra.mxu0 %v373
    %1312 = vmatprep.subr.bf16.mxu0 %v378
    %1313 = vmatpush1.bf16.msra.mxu0 %v377
    %1314 = vmatprep.subr.bf16.mxu0 %v382
    %1315 = vmatpush1.bf16.msra.mxu0 %v381
    %1316 = vmatprep.subr.bf16.mxu0 %v386
    %1317 = vmatpush1.bf16.msra.mxu0 %v385
    %1318 = vmatprep.subr.bf16.mxu0 %v390
    %1319 = vmatpush1.bf16.msra.mxu0 %v389
    %1320 = vmatprep.subr.bf16.mxu0 %v394
    %1321 = vmatpush1.bf16.msra.mxu0 %v393
    %1322 = vmatprep.subr.bf16.mxu0 0
    %1323 = vmatpush1.bf16.msra.mxu0 0
    %1324 = vmatprep.subr.bf16.mxu0 0
    %1325 = vmatpush1.bf16.msra.mxu0 0
    %1326 = vmatprep.subr.bf16.mxu0 0
    %1327 = vmatpush1.bf16.msra.mxu0 0
    %1328 = vmatprep.subr.bf16.mxu0 0
    %1329 = vmatpush1.bf16.msra.mxu0 0
    %1330 = vmatprep.subr.bf16.mxu0 0
    %1331 = vmatpush1.bf16.msra.mxu0 0
    %1332 = vmatprep.subr.bf16.mxu0 0
    %1333 = vmatpush1.bf16.msra.mxu0 0
    %1334 = vmatprep.subr.bf16.mxu0 0
    %1335 = vmatpush1.bf16.msra.mxu0 0
    %1336 = vmatprep.subr.bf16.mxu0 0
    %1337 = vmatpush1.bf16.msra.mxu0 0
    %1338 = vmatprep.mubr.bf16.mxu0 0
    %1339 = vmatmul.mubr.bf16.gmra.mrb[0].mxu0 %v1304
    %v1340 = vpop.f32.mrb[0].mxu0
    %v1341 = vadd.f32 0.0, %v1340
    %v1342 = vpop.f32.mrb[0].mxu0
    %v1343 = vadd.f32 0.0, %v1342
    %v1344 = vpop.f32.mrb[0].mxu0
    %v1345 = vpop.f32.mrb[0].mxu0
    %1346 = vdwg.mxu0
    %1347 = vmatprep.subr.bf16.mxu0 %v368
    %1348 = vmatpush1.bf16.msra.mxu0 %v367
    %1349 = vmatprep.subr.bf16.mxu0 %v372
    %1350 = vmatpush1.bf16.msra.mxu0 %v371
    %1351 = vmatprep.subr.bf16.mxu0 %v376
    %1352 = vmatpush1.bf16.msra.mxu0 %v375
    %1353 = vmatprep.subr.bf16.mxu0 %v380
    %1354 = vmatpush1.bf16.msra.mxu0 %v379
    %1355 = vmatprep.subr.bf16.mxu0 %v384
    %1356 = vmatpush1.bf16.msra.mxu0 %v383
    %1357 = vmatprep.subr.bf16.mxu0 %v388
    %1358 = vmatpush1.bf16.msra.mxu0 %v387
    %1359 = vmatprep.subr.bf16.mxu0 %v392
    %1360 = vmatpush1.bf16.msra.mxu0 %v391
    %1361 = vmatprep.subr.bf16.mxu0 %v396
    %1362 = vmatpush1.bf16.msra.mxu0 %v395
    %1363 = vmatprep.subr.bf16.mxu0 0
    %1364 = vmatpush1.bf16.msra.mxu0 0
    %1365 = vmatprep.subr.bf16.mxu0 0
    %1366 = vmatpush1.bf16.msra.mxu0 0
    %1367 = vmatprep.subr.bf16.mxu0 0
    %1368 = vmatpush1.bf16.msra.mxu0 0
    %1369 = vmatprep.subr.bf16.mxu0 0
    %1370 = vmatpush1.bf16.msra.mxu0 0
    %1371 = vmatprep.subr.bf16.mxu0 0
    %1372 = vmatpush1.bf16.msra.mxu0 0
    %1373 = vmatprep.subr.bf16.mxu0 0
    %1374 = vmatpush1.bf16.msra.mxu0 0
    %1375 = vmatprep.subr.bf16.mxu0 0
    %1376 = vmatpush1.bf16.msra.mxu0 0
    %1377 = vmatprep.subr.bf16.mxu0 0
    %1378 = vmatpush1.bf16.msra.mxu0 0
    %1379 = vmatprep.mubr.bf16.mxu0 0
    %1380 = vmatmul.mubr.bf16.gmra.mrb[0].mxu0 %v1304
    %v1381 = vpop.f32.mrb[0].mxu0
    %v1382 = vadd.f32 0.0, %v1381
    %v1383 = vpop.f32.mrb[0].mxu0
    %v1384 = vadd.f32 0.0, %v1383
    %v1385 = vpop.f32.mrb[0].mxu0
    %v1386 = vpop.f32.mrb[0].mxu0
    %1387 = vdwg.mxu0
    %v1392 = vrot.slane %v1341, 3
    %v1393 = vrot.slane %v1343, 3
    %v1394 = vrot.slane %v1382, 3
    %v1395 = vrot.slane %v1384, 3
    %v1396 = vrot.slane %v1341, 4
    %v1397 = vrot.slane %v1343, 4
    %v1398 = vrot.slane %v1382, 4
    %v1399 = vrot.slane %v1384, 4
    %v1408 = vadd.f32 %v218, %v1392
    %v1409 = vadd.f32 %v219, %v1393
    %v1410 = vadd.f32 %v220, %v1394
    %v1411 = vadd.f32 %v221, %v1395
    %v1412 = vadd.f32 %v226, %v1396
    %v1413 = vadd.f32 %v227, %v1397
    %v1414 = vadd.f32 %v228, %v1398
    %v1415 = vadd.f32 %v229, %v1399
    %v1416 = vmul.f32 %v1408, 0.5
    %v1417 = vmul.f32 %v1412, 0.5
    %v1418 = vtanh.pop %v1416
    %v1419 = vtanh.pop %v1417
    %v1420 = vmul.f32 %v1418, 0.5
    %v1421 = vmul.f32 %v1419, 0.5
    %v1422 = vadd.f32 %v1420, 0.5
    %v1423 = vadd.f32 %v1421, 0.5
    %v1424 = vmul.f32 %v1409, 0.5
    %v1425 = vmul.f32 %v1413, 0.5
    %v1426 = vtanh.pop %v1424
    %v1427 = vtanh.pop %v1425
    %v1428 = vmul.f32 %v1426, 0.5
    %v1429 = vmul.f32 %v1427, 0.5
    %v1430 = vadd.f32 %v1428, 0.5
    %v1431 = vadd.f32 %v1429, 0.5
    %v1432 = vtanh.pop %v1410
    %v1433 = vtanh.pop %v1414
    %v1434 = vmul.f32 %v1411, 0.5
    %v1435 = vmul.f32 %v1415, 0.5
    %v1436 = vtanh.pop %v1434
    %v1437 = vtanh.pop %v1435
    %v1438 = vmul.f32 %v1436, 0.5
    %v1439 = vmul.f32 %v1437, 0.5
    %v1440 = vadd.f32 %v1438, 0.5
    %v1441 = vadd.f32 %v1439, 0.5
    %v1444 = vrot.slane %v1285, 7
    %v1445 = vrot.slane %v1286, 7
    %v1448 = vmul.f32 %v1430, %v1444
    %v1449 = vmul.f32 %v1431, %v1445
    %v1450 = vmul.f32 %v1422, %v1432
    %v1451 = vmul.f32 %v1423, %v1433
    %v1452 = vadd.f32 %v1448, %v1450
    %v1453 = vadd.f32 %v1449, %v1451
    %v1454 = vtanh.pop %v1452
    %v1455 = vtanh.pop %v1453
    %v1456 = vmul.f32 %v1440, %v1454
    %v1457 = vmul.f32 %v1441, %v1455
    %s1458 = sadd.s32 %s575, 5
    %p1459 = scmp.lt.s32.totalorder %s1458, 8
    %s1460 = scalar_select %p1459, 1, 0
    %v1461 = vstv %s1460
    %vm1462 = vcmp.eq.s32.totalorder %v1461, 1
    %v1463 = vsel %vm1462, %v1452, %v1444
    %v1464 = vsel %vm1462, %v1453, %v1445
    %v1467 = vrot.slane %v1293, 7
    %v1468 = vrot.slane %v1294, 7
    %v1471 = vsel %vm1462, %v1456, %v1467
    %v1472 = vsel %vm1462, %v1457, %v1468
    %v1473 = vpack.c.bf16 %v1471, %v1471
    %v1474 = vpack.c.bf16 %v1472, %v1472
    %v1477 = vunpack.c.l.b16 %v1473
    %v1478 = vunpack.c.l.b16 %v1474
    %v1479 = vrot.slane %v1477, 5
    %v1480 = vrot.slane %v1478, 4
    %v1481 = vsel %vm595, %v1480, %v1479
    %v1482 = vpack.c.b16 %v1481, %v1481
    %1484 = vmatprep.subr.bf16.mxu0 %v366
    %1485 = vmatpush1.bf16.msra.mxu0 %v365
    %1486 = vmatprep.subr.bf16.mxu0 %v370
    %1487 = vmatpush1.bf16.msra.mxu0 %v369
    %1488 = vmatprep.subr.bf16.mxu0 %v374
    %1489 = vmatpush1.bf16.msra.mxu0 %v373
    %1490 = vmatprep.subr.bf16.mxu0 %v378
    %1491 = vmatpush1.bf16.msra.mxu0 %v377
    %1492 = vmatprep.subr.bf16.mxu0 %v382
    %1493 = vmatpush1.bf16.msra.mxu0 %v381
    %1494 = vmatprep.subr.bf16.mxu0 %v386
    %1495 = vmatpush1.bf16.msra.mxu0 %v385
    %1496 = vmatprep.subr.bf16.mxu0 %v390
    %1497 = vmatpush1.bf16.msra.mxu0 %v389
    %1498 = vmatprep.subr.bf16.mxu0 %v394
    %1499 = vmatpush1.bf16.msra.mxu0 %v393
    %1500 = vmatprep.subr.bf16.mxu0 0
    %1501 = vmatpush1.bf16.msra.mxu0 0
    %1502 = vmatprep.subr.bf16.mxu0 0
    %1503 = vmatpush1.bf16.msra.mxu0 0
    %1504 = vmatprep.subr.bf16.mxu0 0
    %1505 = vmatpush1.bf16.msra.mxu0 0
    %1506 = vmatprep.subr.bf16.mxu0 0
    %1507 = vmatpush1.bf16.msra.mxu0 0
    %1508 = vmatprep.subr.bf16.mxu0 0
    %1509 = vmatpush1.bf16.msra.mxu0 0
    %1510 = vmatprep.subr.bf16.mxu0 0
    %1511 = vmatpush1.bf16.msra.mxu0 0
    %1512 = vmatprep.subr.bf16.mxu0 0
    %1513 = vmatpush1.bf16.msra.mxu0 0
    %1514 = vmatprep.subr.bf16.mxu0 0
    %1515 = vmatpush1.bf16.msra.mxu0 0
    %1516 = vmatprep.mubr.bf16.mxu0 0
    %1517 = vmatmul.mubr.bf16.gmra.mrb[0].mxu0 %v1482
    %v1518 = vpop.f32.mrb[0].mxu0
    %v1519 = vadd.f32 0.0, %v1518
    %v1520 = vpop.f32.mrb[0].mxu0
    %v1521 = vadd.f32 0.0, %v1520
    %v1522 = vpop.f32.mrb[0].mxu0
    %v1523 = vpop.f32.mrb[0].mxu0
    %1524 = vdwg.mxu0
    %1525 = vmatprep.subr.bf16.mxu0 %v368
    %1526 = vmatpush1.bf16.msra.mxu0 %v367
    %1527 = vmatprep.subr.bf16.mxu0 %v372
    %1528 = vmatpush1.bf16.msra.mxu0 %v371
    %1529 = vmatprep.subr.bf16.mxu0 %v376
    %1530 = vmatpush1.bf16.msra.mxu0 %v375
    %1531 = vmatprep.subr.bf16.mxu0 %v380
    %1532 = vmatpush1.bf16.msra.mxu0 %v379
    %1533 = vmatprep.subr.bf16.mxu0 %v384
    %1534 = vmatpush1.bf16.msra.mxu0 %v383
    %1535 = vmatprep.subr.bf16.mxu0 %v388
    %1536 = vmatpush1.bf16.msra.mxu0 %v387
    %1537 = vmatprep.subr.bf16.mxu0 %v392
    %1538 = vmatpush1.bf16.msra.mxu0 %v391
    %1539 = vmatprep.subr.bf16.mxu0 %v396
    %1540 = vmatpush1.bf16.msra.mxu0 %v395
    %1541 = vmatprep.subr.bf16.mxu0 0
    %1542 = vmatpush1.bf16.msra.mxu0 0
    %1543 = vmatprep.subr.bf16.mxu0 0
    %1544 = vmatpush1.bf16.msra.mxu0 0
    %1545 = vmatprep.subr.bf16.mxu0 0
    %1546 = vmatpush1.bf16.msra.mxu0 0
    %1547 = vmatprep.subr.bf16.mxu0 0
    %1548 = vmatpush1.bf16.msra.mxu0 0
    %1549 = vmatprep.subr.bf16.mxu0 0
    %1550 = vmatpush1.bf16.msra.mxu0 0
    %1551 = vmatprep.subr.bf16.mxu0 0
    %1552 = vmatpush1.bf16.msra.mxu0 0
    %1553 = vmatprep.subr.bf16.mxu0 0
    %1554 = vmatpush1.bf16.msra.mxu0 0
    %1555 = vmatprep.subr.bf16.mxu0 0
    %1556 = vmatpush1.bf16.msra.mxu0 0
    %1557 = vmatprep.mubr.bf16.mxu0 0
    %1558 = vmatmul.mubr.bf16.gmra.mrb[0].mxu0 %v1482
    %v1559 = vpop.f32.mrb[0].mxu0
    %v1560 = vadd.f32 0.0, %v1559
    %v1561 = vpop.f32.mrb[0].mxu0
    %v1562 = vadd.f32 0.0, %v1561
    %v1563 = vpop.f32.mrb[0].mxu0
    %v1564 = vpop.f32.mrb[0].mxu0
    %1565 = vdwg.mxu0
    %v1570 = vrot.slane %v1519, 2
    %v1571 = vrot.slane %v1521, 2
    %v1572 = vrot.slane %v1560, 2
    %v1573 = vrot.slane %v1562, 2
    %v1574 = vrot.slane %v1519, 3
    %v1575 = vrot.slane %v1521, 3
    %v1576 = vrot.slane %v1560, 3
    %v1577 = vrot.slane %v1562, 3
    %v1586 = vadd.f32 %v218, %v1570
    %v1587 = vadd.f32 %v219, %v1571
    %v1588 = vadd.f32 %v220, %v1572
    %v1589 = vadd.f32 %v221, %v1573
    %v1590 = vadd.f32 %v226, %v1574
    %v1591 = vadd.f32 %v227, %v1575
    %v1592 = vadd.f32 %v228, %v1576
    %v1593 = vadd.f32 %v229, %v1577
    %v1594 = vmul.f32 %v1586, 0.5
    %v1595 = vmul.f32 %v1590, 0.5
    %v1596 = vtanh.pop %v1594
    %v1597 = vtanh.pop %v1595
    %v1598 = vmul.f32 %v1596, 0.5
    %v1599 = vmul.f32 %v1597, 0.5
    %v1600 = vadd.f32 %v1598, 0.5
    %v1601 = vadd.f32 %v1599, 0.5
    %v1602 = vmul.f32 %v1587, 0.5
    %v1603 = vmul.f32 %v1591, 0.5
    %v1604 = vtanh.pop %v1602
    %v1605 = vtanh.pop %v1603
    %v1606 = vmul.f32 %v1604, 0.5
    %v1607 = vmul.f32 %v1605, 0.5
    %v1608 = vadd.f32 %v1606, 0.5
    %v1609 = vadd.f32 %v1607, 0.5
    %v1610 = vtanh.pop %v1588
    %v1611 = vtanh.pop %v1592
    %v1612 = vmul.f32 %v1589, 0.5
    %v1613 = vmul.f32 %v1593, 0.5
    %v1614 = vtanh.pop %v1612
    %v1615 = vtanh.pop %v1613
    %v1616 = vmul.f32 %v1614, 0.5
    %v1617 = vmul.f32 %v1615, 0.5
    %v1618 = vadd.f32 %v1616, 0.5
    %v1619 = vadd.f32 %v1617, 0.5
    %v1622 = vrot.slane %v1463, 7
    %v1623 = vrot.slane %v1464, 7
    %v1626 = vmul.f32 %v1608, %v1622
    %v1627 = vmul.f32 %v1609, %v1623
    %v1628 = vmul.f32 %v1600, %v1610
    %v1629 = vmul.f32 %v1601, %v1611
    %v1630 = vadd.f32 %v1626, %v1628
    %v1631 = vadd.f32 %v1627, %v1629
    %v1632 = vtanh.pop %v1630
    %v1633 = vtanh.pop %v1631
    %v1634 = vmul.f32 %v1618, %v1632
    %v1635 = vmul.f32 %v1619, %v1633
    %s1636 = sadd.s32 %s575, 6
    %p1637 = scmp.lt.s32.totalorder %s1636, 8
    %s1638 = scalar_select %p1637, 1, 0
    %v1639 = vstv %s1638
    %vm1640 = vcmp.eq.s32.totalorder %v1639, 1
    %v1641 = vsel %vm1640, %v1630, %v1622
    %v1642 = vsel %vm1640, %v1631, %v1623
    %v1645 = vrot.slane %v1471, 7
    %v1646 = vrot.slane %v1472, 7
    %v1649 = vsel %vm1640, %v1634, %v1645
    %v1650 = vsel %vm1640, %v1635, %v1646
    %v1651 = vpack.c.bf16 %v1649, %v1649
    %v1652 = vpack.c.bf16 %v1650, %v1650
    %v1655 = vunpack.c.l.b16 %v1651
    %v1656 = vunpack.c.l.b16 %v1652
    %v1657 = vrot.slane %v1655, 6
    %v1658 = vrot.slane %v1656, 5
    %v1659 = vsel %vm595, %v1658, %v1657
    %v1660 = vpack.c.b16 %v1659, %v1659
    %1662 = vmatprep.subr.bf16.mxu0 %v366
    %1663 = vmatpush1.bf16.msra.mxu0 %v365
    %1664 = vmatprep.subr.bf16.mxu0 %v370
    %1665 = vmatpush1.bf16.msra.mxu0 %v369
    %1666 = vmatprep.subr.bf16.mxu0 %v374
    %1667 = vmatpush1.bf16.msra.mxu0 %v373
    %1668 = vmatprep.subr.bf16.mxu0 %v378
    %1669 = vmatpush1.bf16.msra.mxu0 %v377
    %1670 = vmatprep.subr.bf16.mxu0 %v382
    %1671 = vmatpush1.bf16.msra.mxu0 %v381
    %1672 = vmatprep.subr.bf16.mxu0 %v386
    %1673 = vmatpush1.bf16.msra.mxu0 %v385
    %1674 = vmatprep.subr.bf16.mxu0 %v390
    %1675 = vmatpush1.bf16.msra.mxu0 %v389
    %1676 = vmatprep.subr.bf16.mxu0 %v394
    %1677 = vmatpush1.bf16.msra.mxu0 %v393
    %1678 = vmatprep.subr.bf16.mxu0 0
    %1679 = vmatpush1.bf16.msra.mxu0 0
    %1680 = vmatprep.subr.bf16.mxu0 0
    %1681 = vmatpush1.bf16.msra.mxu0 0
    %1682 = vmatprep.subr.bf16.mxu0 0
    %1683 = vmatpush1.bf16.msra.mxu0 0
    %1684 = vmatprep.subr.bf16.mxu0 0
    %1685 = vmatpush1.bf16.msra.mxu0 0
    %1686 = vmatprep.subr.bf16.mxu0 0
    %1687 = vmatpush1.bf16.msra.mxu0 0
    %1688 = vmatprep.subr.bf16.mxu0 0
    %1689 = vmatpush1.bf16.msra.mxu0 0
    %1690 = vmatprep.subr.bf16.mxu0 0
    %1691 = vmatpush1.bf16.msra.mxu0 0
    %1692 = vmatprep.subr.bf16.mxu0 0
    %1693 = vmatpush1.bf16.msra.mxu0 0
    %1694 = vmatprep.mubr.bf16.mxu0 0
    %1695 = vmatmul.mubr.bf16.gmra.mrb[0].mxu0 %v1660
    %v1696 = vpop.f32.mrb[0].mxu0
    %v1697 = vadd.f32 0.0, %v1696
    %v1698 = vpop.f32.mrb[0].mxu0
    %v1699 = vadd.f32 0.0, %v1698
    %v1700 = vpop.f32.mrb[0].mxu0
    %v1701 = vpop.f32.mrb[0].mxu0
    %1702 = vdwg.mxu0
    %1703 = vmatprep.subr.bf16.mxu0 %v368
    %1704 = vmatpush1.bf16.msra.mxu0 %v367
    %1705 = vmatprep.subr.bf16.mxu0 %v372
    %1706 = vmatpush1.bf16.msra.mxu0 %v371
    %1707 = vmatprep.subr.bf16.mxu0 %v376
    %1708 = vmatpush1.bf16.msra.mxu0 %v375
    %1709 = vmatprep.subr.bf16.mxu0 %v380
    %1710 = vmatpush1.bf16.msra.mxu0 %v379
    %1711 = vmatprep.subr.bf16.mxu0 %v384
    %1712 = vmatpush1.bf16.msra.mxu0 %v383
    %1713 = vmatprep.subr.bf16.mxu0 %v388
    %1714 = vmatpush1.bf16.msra.mxu0 %v387
    %1715 = vmatprep.subr.bf16.mxu0 %v392
    %1716 = vmatpush1.bf16.msra.mxu0 %v391
    %1717 = vmatprep.subr.bf16.mxu0 %v396
    %1718 = vmatpush1.bf16.msra.mxu0 %v395
    %1719 = vmatprep.subr.bf16.mxu0 0
    %1720 = vmatpush1.bf16.msra.mxu0 0
    %1721 = vmatprep.subr.bf16.mxu0 0
    %1722 = vmatpush1.bf16.msra.mxu0 0
    %1723 = vmatprep.subr.bf16.mxu0 0
    %1724 = vmatpush1.bf16.msra.mxu0 0
    %1725 = vmatprep.subr.bf16.mxu0 0
    %1726 = vmatpush1.bf16.msra.mxu0 0
    %1727 = vmatprep.subr.bf16.mxu0 0
    %1728 = vmatpush1.bf16.msra.mxu0 0
    %1729 = vmatprep.subr.bf16.mxu0 0
    %1730 = vmatpush1.bf16.msra.mxu0 0
    %1731 = vmatprep.subr.bf16.mxu0 0
    %1732 = vmatpush1.bf16.msra.mxu0 0
    %1733 = vmatprep.subr.bf16.mxu0 0
    %1734 = vmatpush1.bf16.msra.mxu0 0
    %1735 = vmatprep.mubr.bf16.mxu0 0
    %1736 = vmatmul.mubr.bf16.gmra.mrb[0].mxu0 %v1660
    %v1737 = vpop.f32.mrb[0].mxu0
    %v1738 = vadd.f32 0.0, %v1737
    %v1739 = vpop.f32.mrb[0].mxu0
    %v1740 = vadd.f32 0.0, %v1739
    %v1741 = vpop.f32.mrb[0].mxu0
    %v1742 = vpop.f32.mrb[0].mxu0
    %1743 = vdwg.mxu0
    %v1748 = vrot.slane %v1697, 1
    %v1749 = vrot.slane %v1699, 1
    %v1750 = vrot.slane %v1738, 1
    %v1751 = vrot.slane %v1740, 1
    %v1752 = vrot.slane %v1697, 2
    %v1753 = vrot.slane %v1699, 2
    %v1754 = vrot.slane %v1738, 2
    %v1755 = vrot.slane %v1740, 2
    %v1764 = vadd.f32 %v218, %v1748
    %v1765 = vadd.f32 %v219, %v1749
    %v1766 = vadd.f32 %v220, %v1750
    %v1767 = vadd.f32 %v221, %v1751
    %v1768 = vadd.f32 %v226, %v1752
    %v1769 = vadd.f32 %v227, %v1753
    %v1770 = vadd.f32 %v228, %v1754
    %v1771 = vadd.f32 %v229, %v1755
    %v1772 = vmul.f32 %v1764, 0.5
    %v1773 = vmul.f32 %v1768, 0.5
    %v1774 = vtanh.pop %v1772
    %v1775 = vtanh.pop %v1773
    %v1776 = vmul.f32 %v1774, 0.5
    %v1777 = vmul.f32 %v1775, 0.5
    %v1778 = vadd.f32 %v1776, 0.5
    %v1779 = vadd.f32 %v1777, 0.5
    %v1780 = vmul.f32 %v1765, 0.5
    %v1781 = vmul.f32 %v1769, 0.5
    %v1782 = vtanh.pop %v1780
    %v1783 = vtanh.pop %v1781
    %v1784 = vmul.f32 %v1782, 0.5
    %v1785 = vmul.f32 %v1783, 0.5
    %v1786 = vadd.f32 %v1784, 0.5
    %v1787 = vadd.f32 %v1785, 0.5
    %v1788 = vtanh.pop %v1766
    %v1789 = vtanh.pop %v1770
    %v1790 = vmul.f32 %v1767, 0.5
    %v1791 = vmul.f32 %v1771, 0.5
    %v1792 = vtanh.pop %v1790
    %v1793 = vtanh.pop %v1791
    %v1794 = vmul.f32 %v1792, 0.5
    %v1795 = vmul.f32 %v1793, 0.5
    %v1796 = vadd.f32 %v1794, 0.5
    %v1797 = vadd.f32 %v1795, 0.5
    %v1800 = vrot.slane %v1641, 7
    %v1801 = vrot.slane %v1642, 7
    %v1804 = vmul.f32 %v1786, %v1800
    %v1805 = vmul.f32 %v1787, %v1801
    %v1806 = vmul.f32 %v1778, %v1788
    %v1807 = vmul.f32 %v1779, %v1789
    %v1808 = vadd.f32 %v1804, %v1806
    %v1809 = vadd.f32 %v1805, %v1807
    %v1810 = vtanh.pop %v1808
    %v1811 = vtanh.pop %v1809
    %v1812 = vmul.f32 %v1796, %v1810
    %v1813 = vmul.f32 %v1797, %v1811
    %s1814 = sadd.s32 %s575, 7
    %p1815 = scmp.lt.s32.totalorder %s1814, 8
    %s1816 = scalar_select %p1815, 1, 0
    %v1817 = vstv %s1816
    %vm1818 = vcmp.eq.s32.totalorder %v1817, 1
    %v1819 = vsel %vm1818, %v1808, %v1800
    %v1820 = vsel %vm1818, %v1809, %v1801
    %v1823 = vrot.slane %v1649, 7
    %v1824 = vrot.slane %v1650, 7
    %v1827 = vsel %vm1818, %v1812, %v1823
    %v1828 = vsel %vm1818, %v1813, %v1824
    %v1829 = vpack.c.bf16 %v1827, %v1827
    %v1830 = vpack.c.bf16 %v1828, %v1828
    %v1833 = vunpack.c.l.b16 %v1829
    %v1834 = vunpack.c.l.b16 %v1830
    %v1835 = vrot.slane %v1833, 7
    %v1836 = vrot.slane %v1834, 6
    %v1837 = vsel %vm595, %v1836, %v1835
    %v1838 = vpack.c.b16 %v1837, %v1837
    %1840 = vmatprep.subr.bf16.mxu0 %v366
    %1841 = vmatpush1.bf16.msra.mxu0 %v365
    %1842 = vmatprep.subr.bf16.mxu0 %v370
    %1843 = vmatpush1.bf16.msra.mxu0 %v369
    %1844 = vmatprep.subr.bf16.mxu0 %v374
    %1845 = vmatpush1.bf16.msra.mxu0 %v373
    %1846 = vmatprep.subr.bf16.mxu0 %v378
    %1847 = vmatpush1.bf16.msra.mxu0 %v377
    %1848 = vmatprep.subr.bf16.mxu0 %v382
    %1849 = vmatpush1.bf16.msra.mxu0 %v381
    %1850 = vmatprep.subr.bf16.mxu0 %v386
    %1851 = vmatpush1.bf16.msra.mxu0 %v385
    %1852 = vmatprep.subr.bf16.mxu0 %v390
    %1853 = vmatpush1.bf16.msra.mxu0 %v389
    %1854 = vmatprep.subr.bf16.mxu0 %v394
    %1855 = vmatpush1.bf16.msra.mxu0 %v393
    %1856 = vmatprep.subr.bf16.mxu0 0
    %1857 = vmatpush1.bf16.msra.mxu0 0
    %1858 = vmatprep.subr.bf16.mxu0 0
    %1859 = vmatpush1.bf16.msra.mxu0 0
    %1860 = vmatprep.subr.bf16.mxu0 0
    %1861 = vmatpush1.bf16.msra.mxu0 0
    %1862 = vmatprep.subr.bf16.mxu0 0
    %1863 = vmatpush1.bf16.msra.mxu0 0
    %1864 = vmatprep.subr.bf16.mxu0 0
    %1865 = vmatpush1.bf16.msra.mxu0 0
    %1866 = vmatprep.subr.bf16.mxu0 0
    %1867 = vmatpush1.bf16.msra.mxu0 0
    %1868 = vmatprep.subr.bf16.mxu0 0
    %1869 = vmatpush1.bf16.msra.mxu0 0
    %1870 = vmatprep.subr.bf16.mxu0 0
    %1871 = vmatpush1.bf16.msra.mxu0 0
    %1872 = vmatprep.mubr.bf16.mxu0 0
    %1873 = vmatmul.mubr.bf16.gmra.mrb[0].mxu0 %v1838
    %v1874 = vpop.f32.mrb[0].mxu0
    %v1875 = vadd.f32 0.0, %v1874
    %v1876 = vpop.f32.mrb[0].mxu0
    %v1877 = vadd.f32 0.0, %v1876
    %v1878 = vpop.f32.mrb[0].mxu0
    %v1879 = vpop.f32.mrb[0].mxu0
    %1880 = vdwg.mxu0
    %1881 = vmatprep.subr.bf16.mxu0 %v368
    %1882 = vmatpush1.bf16.msra.mxu0 %v367
    %1883 = vmatprep.subr.bf16.mxu0 %v372
    %1884 = vmatpush1.bf16.msra.mxu0 %v371
    %1885 = vmatprep.subr.bf16.mxu0 %v376
    %1886 = vmatpush1.bf16.msra.mxu0 %v375
    %1887 = vmatprep.subr.bf16.mxu0 %v380
    %1888 = vmatpush1.bf16.msra.mxu0 %v379
    %1889 = vmatprep.subr.bf16.mxu0 %v384
    %1890 = vmatpush1.bf16.msra.mxu0 %v383
    %1891 = vmatprep.subr.bf16.mxu0 %v388
    %1892 = vmatpush1.bf16.msra.mxu0 %v387
    %1893 = vmatprep.subr.bf16.mxu0 %v392
    %1894 = vmatpush1.bf16.msra.mxu0 %v391
    %1895 = vmatprep.subr.bf16.mxu0 %v396
    %1896 = vmatpush1.bf16.msra.mxu0 %v395
    %1897 = vmatprep.subr.bf16.mxu0 0
    %1898 = vmatpush1.bf16.msra.mxu0 0
    %1899 = vmatprep.subr.bf16.mxu0 0
    %1900 = vmatpush1.bf16.msra.mxu0 0
    %1901 = vmatprep.subr.bf16.mxu0 0
    %1902 = vmatpush1.bf16.msra.mxu0 0
    %1903 = vmatprep.subr.bf16.mxu0 0
    %1904 = vmatpush1.bf16.msra.mxu0 0
    %1905 = vmatprep.subr.bf16.mxu0 0
    %1906 = vmatpush1.bf16.msra.mxu0 0
    %1907 = vmatprep.subr.bf16.mxu0 0
    %1908 = vmatpush1.bf16.msra.mxu0 0
    %1909 = vmatprep.subr.bf16.mxu0 0
    %1910 = vmatpush1.bf16.msra.mxu0 0
    %1911 = vmatprep.subr.bf16.mxu0 0
    %1912 = vmatpush1.bf16.msra.mxu0 0
    %1913 = vmatprep.mubr.bf16.mxu0 0
    %1914 = vmatmul.mubr.bf16.gmra.mrb[0].mxu0 %v1838
    %v1915 = vpop.f32.mrb[0].mxu0
    %v1916 = vadd.f32 0.0, %v1915
    %v1917 = vpop.f32.mrb[0].mxu0
    %v1918 = vadd.f32 0.0, %v1917
    %v1919 = vpop.f32.mrb[0].mxu0
    %v1920 = vpop.f32.mrb[0].mxu0
    %1921 = vdwg.mxu0
    %v1926 = vrot.slane %v1875, 1
    %v1927 = vrot.slane %v1877, 1
    %v1928 = vrot.slane %v1916, 1
    %v1929 = vrot.slane %v1918, 1
    %v1938 = vadd.f32 %v222, %v1875
    %v1939 = vadd.f32 %v223, %v1877
    %v1940 = vadd.f32 %v224, %v1916
    %v1941 = vadd.f32 %v225, %v1918
    %v1942 = vadd.f32 %v230, %v1926
    %v1943 = vadd.f32 %v231, %v1927
    %v1944 = vadd.f32 %v232, %v1928
    %v1945 = vadd.f32 %v233, %v1929
    %v1946 = vmul.f32 %v1938, 0.5
    %v1947 = vmul.f32 %v1942, 0.5
    %v1948 = vtanh.pop %v1946
    %v1949 = vtanh.pop %v1947
    %v1950 = vmul.f32 %v1948, 0.5
    %v1951 = vmul.f32 %v1949, 0.5
    %v1952 = vadd.f32 %v1950, 0.5
    %v1953 = vadd.f32 %v1951, 0.5
    %v1954 = vmul.f32 %v1939, 0.5
    %v1955 = vmul.f32 %v1943, 0.5
    %v1956 = vtanh.pop %v1954
    %v1957 = vtanh.pop %v1955
    %v1958 = vmul.f32 %v1956, 0.5
    %v1959 = vmul.f32 %v1957, 0.5
    %v1960 = vadd.f32 %v1958, 0.5
    %v1961 = vadd.f32 %v1959, 0.5
    %v1962 = vtanh.pop %v1940
    %v1963 = vtanh.pop %v1944
    %v1964 = vmul.f32 %v1941, 0.5
    %v1965 = vmul.f32 %v1945, 0.5
    %v1966 = vtanh.pop %v1964
    %v1967 = vtanh.pop %v1965
    %v1968 = vmul.f32 %v1966, 0.5
    %v1969 = vmul.f32 %v1967, 0.5
    %v1970 = vadd.f32 %v1968, 0.5
    %v1971 = vadd.f32 %v1969, 0.5
    %v1974 = vrot.slane %v1819, 7
    %v1975 = vrot.slane %v1820, 7
    %v1978 = vmul.f32 %v1960, %v1974
    %v1979 = vmul.f32 %v1961, %v1975
    %v1980 = vmul.f32 %v1952, %v1962
    %v1981 = vmul.f32 %v1953, %v1963
    %v1982 = vadd.f32 %v1978, %v1980
    %v1983 = vadd.f32 %v1979, %v1981
    %v1984 = vtanh.pop %v1982
    %v1985 = vtanh.pop %v1983
    %v1986 = vmul.f32 %v1970, %v1984
    %v1987 = vmul.f32 %v1971, %v1985
    %s1988 = sadd.s32 %s575, 8
    %p1989 = scmp.lt.s32.totalorder %s1988, 8
    %s1990 = scalar_select %p1989, 1, 0
    %v1991 = vstv %s1990
    %vm1992 = vcmp.eq.s32.totalorder %v1991, 1
    %v1993 = vsel %vm1992, %v1982, %v1974
    %v1994 = vsel %vm1992, %v1983, %v1975
    %v1997 = vrot.slane %v1827, 7
    %v1998 = vrot.slane %v1828, 7
    %v2001 = vsel %vm1992, %v1986, %v1997
    %v2002 = vsel %vm1992, %v1987, %v1998
    %v2003 = vpack.c.bf16 %v2001, %v2001
    %v2004 = vpack.c.bf16 %v2002, %v2002
    %v2007 = vunpack.c.l.b16 %v2003
    %v2008 = vunpack.c.l.b16 %v2004
    %v2009 = vrot.slane %v2008, 7
    %v2010 = vsel %vm595, %v2009, %v2007
    %v2011 = vpack.c.b16 %v2010, %v2010
    %2013 = vmatprep.subr.bf16.mxu0 %v366
    %2014 = vmatpush1.bf16.msra.mxu0 %v365
    %2015 = vmatprep.subr.bf16.mxu0 %v370
    %2016 = vmatpush1.bf16.msra.mxu0 %v369
    %2017 = vmatprep.subr.bf16.mxu0 %v374
    %2018 = vmatpush1.bf16.msra.mxu0 %v373
    %2019 = vmatprep.subr.bf16.mxu0 %v378
    %2020 = vmatpush1.bf16.msra.mxu0 %v377
    %2021 = vmatprep.subr.bf16.mxu0 %v382
    %2022 = vmatpush1.bf16.msra.mxu0 %v381
    %2023 = vmatprep.subr.bf16.mxu0 %v386
    %2024 = vmatpush1.bf16.msra.mxu0 %v385
    %2025 = vmatprep.subr.bf16.mxu0 %v390
    %2026 = vmatpush1.bf16.msra.mxu0 %v389
    %2027 = vmatprep.subr.bf16.mxu0 %v394
    %2028 = vmatpush1.bf16.msra.mxu0 %v393
    %2029 = vmatprep.subr.bf16.mxu0 0
    %2030 = vmatpush1.bf16.msra.mxu0 0
    %2031 = vmatprep.subr.bf16.mxu0 0
    %2032 = vmatpush1.bf16.msra.mxu0 0
    %2033 = vmatprep.subr.bf16.mxu0 0
    %2034 = vmatpush1.bf16.msra.mxu0 0
    %2035 = vmatprep.subr.bf16.mxu0 0
    %2036 = vmatpush1.bf16.msra.mxu0 0
    %2037 = vmatprep.subr.bf16.mxu0 0
    %2038 = vmatpush1.bf16.msra.mxu0 0
    %2039 = vmatprep.subr.bf16.mxu0 0
    %2040 = vmatpush1.bf16.msra.mxu0 0
    %2041 = vmatprep.subr.bf16.mxu0 0
    %2042 = vmatpush1.bf16.msra.mxu0 0
    %2043 = vmatprep.subr.bf16.mxu0 0
    %2044 = vmatpush1.bf16.msra.mxu0 0
    %2045 = vmatprep.mubr.bf16.mxu0 0
    %2046 = vmatmul.mubr.bf16.gmra.mrb[0].mxu0 %v2011
    %v2047 = vpop.f32.mrb[0].mxu0
    %v2048 = vadd.f32 0.0, %v2047
    %v2049 = vpop.f32.mrb[0].mxu0
    %v2050 = vadd.f32 0.0, %v2049
    %v2051 = vpop.f32.mrb[0].mxu0
    %v2052 = vpop.f32.mrb[0].mxu0
    %2053 = vdwg.mxu0
    %2054 = vmatprep.subr.bf16.mxu0 %v368
    %2055 = vmatpush1.bf16.msra.mxu0 %v367
    %2056 = vmatprep.subr.bf16.mxu0 %v372
    %2057 = vmatpush1.bf16.msra.mxu0 %v371
    %2058 = vmatprep.subr.bf16.mxu0 %v376
    %2059 = vmatpush1.bf16.msra.mxu0 %v375
    %2060 = vmatprep.subr.bf16.mxu0 %v380
    %2061 = vmatpush1.bf16.msra.mxu0 %v379
    %2062 = vmatprep.subr.bf16.mxu0 %v384
    %2063 = vmatpush1.bf16.msra.mxu0 %v383
    %2064 = vmatprep.subr.bf16.mxu0 %v388
    %2065 = vmatpush1.bf16.msra.mxu0 %v387
    %2066 = vmatprep.subr.bf16.mxu0 %v392
    %2067 = vmatpush1.bf16.msra.mxu0 %v391
    %2068 = vmatprep.subr.bf16.mxu0 %v396
    %2069 = vmatpush1.bf16.msra.mxu0 %v395
    %2070 = vmatprep.subr.bf16.mxu0 0
    %2071 = vmatpush1.bf16.msra.mxu0 0
    %2072 = vmatprep.subr.bf16.mxu0 0
    %2073 = vmatpush1.bf16.msra.mxu0 0
    %2074 = vmatprep.subr.bf16.mxu0 0
    %2075 = vmatpush1.bf16.msra.mxu0 0
    %2076 = vmatprep.subr.bf16.mxu0 0
    %2077 = vmatpush1.bf16.msra.mxu0 0
    %2078 = vmatprep.subr.bf16.mxu0 0
    %2079 = vmatpush1.bf16.msra.mxu0 0
    %2080 = vmatprep.subr.bf16.mxu0 0
    %2081 = vmatpush1.bf16.msra.mxu0 0
    %2082 = vmatprep.subr.bf16.mxu0 0
    %2083 = vmatpush1.bf16.msra.mxu0 0
    %2084 = vmatprep.subr.bf16.mxu0 0
    %2085 = vmatpush1.bf16.msra.mxu0 0
    %2086 = vmatprep.mubr.bf16.mxu0 0
    %2087 = vmatmul.mubr.bf16.gmra.mrb[0].mxu0 %v2011
    %v2088 = vpop.f32.mrb[0].mxu0
    %v2089 = vadd.f32 0.0, %v2088
    %v2090 = vpop.f32.mrb[0].mxu0
    %v2091 = vadd.f32 0.0, %v2090
    %v2092 = vpop.f32.mrb[0].mxu0
    %v2093 = vpop.f32.mrb[0].mxu0
    %2094 = vdwg.mxu0
    %v2099 = vrot.slane %v2048, 7
    %v2100 = vrot.slane %v2050, 7
    %v2101 = vrot.slane %v2089, 7
    %v2102 = vrot.slane %v2091, 7
    %v2111 = vadd.f32 %v222, %v2099
    %v2112 = vadd.f32 %v223, %v2100
    %v2113 = vadd.f32 %v224, %v2101
    %v2114 = vadd.f32 %v225, %v2102
    %v2115 = vadd.f32 %v230, %v2048
    %v2116 = vadd.f32 %v231, %v2050
    %v2117 = vadd.f32 %v232, %v2089
    %v2118 = vadd.f32 %v233, %v2091
    %v2119 = vmul.f32 %v2111, 0.5
    %v2120 = vmul.f32 %v2115, 0.5
    %v2121 = vtanh.pop %v2119
    %v2122 = vtanh.pop %v2120
    %v2123 = vmul.f32 %v2121, 0.5
    %v2124 = vmul.f32 %v2122, 0.5
    %v2125 = vadd.f32 %v2123, 0.5
    %v2126 = vadd.f32 %v2124, 0.5
    %v2127 = vmul.f32 %v2112, 0.5
    %v2128 = vmul.f32 %v2116, 0.5
    %v2129 = vtanh.pop %v2127
    %v2130 = vtanh.pop %v2128
    %v2131 = vmul.f32 %v2129, 0.5
    %v2132 = vmul.f32 %v2130, 0.5
    %v2133 = vadd.f32 %v2131, 0.5
    %v2134 = vadd.f32 %v2132, 0.5
    %v2135 = vtanh.pop %v2113
    %v2136 = vtanh.pop %v2117
    %v2137 = vmul.f32 %v2114, 0.5
    %v2138 = vmul.f32 %v2118, 0.5
    %v2139 = vtanh.pop %v2137
    %v2140 = vtanh.pop %v2138
    %v2141 = vmul.f32 %v2139, 0.5
    %v2142 = vmul.f32 %v2140, 0.5
    %v2143 = vadd.f32 %v2141, 0.5
    %v2144 = vadd.f32 %v2142, 0.5
    %v2147 = vrot.slane %v1993, 7
    %v2148 = vrot.slane %v1994, 7
    %v2151 = vmul.f32 %v2133, %v2147
    %v2152 = vmul.f32 %v2134, %v2148
    %v2153 = vmul.f32 %v2125, %v2135
    %v2154 = vmul.f32 %v2126, %v2136
    %v2155 = vadd.f32 %v2151, %v2153
    %v2156 = vadd.f32 %v2152, %v2154
    %v2157 = vtanh.pop %v2155
    %v2158 = vtanh.pop %v2156
    %v2159 = vmul.f32 %v2143, %v2157
    %v2160 = vmul.f32 %v2144, %v2158
    %s2161 = sadd.s32 %s575, 9
    %p2162 = scmp.lt.s32.totalorder %s2161, 8
    %s2163 = scalar_select %p2162, 1, 0
    %v2164 = vstv %s2163
    %vm2165 = vcmp.eq.s32.totalorder %v2164, 1
    %v2166 = vsel %vm2165, %v2155, %v2147
    %v2167 = vsel %vm2165, %v2156, %v2148
    %v2170 = vrot.slane %v2001, 7
    %v2171 = vrot.slane %v2002, 7
    %v2174 = vsel %vm2165, %v2159, %v2170
    %v2175 = vsel %vm2165, %v2160, %v2171
    %v2176 = vpack.c.bf16 %v2174, %v2174
    %v2177 = vpack.c.bf16 %v2175, %v2175
    %v2180 = vunpack.c.l.b16 %v2176
    %v2181 = vunpack.c.l.b16 %v2177
    %v2182 = vrot.slane %v2180, 1
    %v2183 = vsel %vm595, %v2181, %v2182
    %v2184 = vpack.c.b16 %v2183, %v2183
    %2186 = vmatprep.subr.bf16.mxu0 %v366
    %2187 = vmatpush1.bf16.msra.mxu0 %v365
    %2188 = vmatprep.subr.bf16.mxu0 %v370
    %2189 = vmatpush1.bf16.msra.mxu0 %v369
    %2190 = vmatprep.subr.bf16.mxu0 %v374
    %2191 = vmatpush1.bf16.msra.mxu0 %v373
    %2192 = vmatprep.subr.bf16.mxu0 %v378
    %2193 = vmatpush1.bf16.msra.mxu0 %v377
    %2194 = vmatprep.subr.bf16.mxu0 %v382
    %2195 = vmatpush1.bf16.msra.mxu0 %v381
    %2196 = vmatprep.subr.bf16.mxu0 %v386
    %2197 = vmatpush1.bf16.msra.mxu0 %v385
    %2198 = vmatprep.subr.bf16.mxu0 %v390
    %2199 = vmatpush1.bf16.msra.mxu0 %v389
    %2200 = vmatprep.subr.bf16.mxu0 %v394
    %2201 = vmatpush1.bf16.msra.mxu0 %v393
    %2202 = vmatprep.subr.bf16.mxu0 0
    %2203 = vmatpush1.bf16.msra.mxu0 0
    %2204 = vmatprep.subr.bf16.mxu0 0
    %2205 = vmatpush1.bf16.msra.mxu0 0
    %2206 = vmatprep.subr.bf16.mxu0 0
    %2207 = vmatpush1.bf16.msra.mxu0 0
    %2208 = vmatprep.subr.bf16.mxu0 0
    %2209 = vmatpush1.bf16.msra.mxu0 0
    %2210 = vmatprep.subr.bf16.mxu0 0
    %2211 = vmatpush1.bf16.msra.mxu0 0
    %2212 = vmatprep.subr.bf16.mxu0 0
    %2213 = vmatpush1.bf16.msra.mxu0 0
    %2214 = vmatprep.subr.bf16.mxu0 0
    %2215 = vmatpush1.bf16.msra.mxu0 0
    %2216 = vmatprep.subr.bf16.mxu0 0
    %2217 = vmatpush1.bf16.msra.mxu0 0
    %2218 = vmatprep.mubr.bf16.mxu0 0
    %2219 = vmatmul.mubr.bf16.gmra.mrb[0].mxu0 %v2184
    %v2220 = vpop.f32.mrb[0].mxu0
    %v2221 = vadd.f32 0.0, %v2220
    %v2222 = vpop.f32.mrb[0].mxu0
    %v2223 = vadd.f32 0.0, %v2222
    %v2224 = vpop.f32.mrb[0].mxu0
    %v2225 = vpop.f32.mrb[0].mxu0
    %2226 = vdwg.mxu0
    %2227 = vmatprep.subr.bf16.mxu0 %v368
    %2228 = vmatpush1.bf16.msra.mxu0 %v367
    %2229 = vmatprep.subr.bf16.mxu0 %v372
    %2230 = vmatpush1.bf16.msra.mxu0 %v371
    %2231 = vmatprep.subr.bf16.mxu0 %v376
    %2232 = vmatpush1.bf16.msra.mxu0 %v375
    %2233 = vmatprep.subr.bf16.mxu0 %v380
    %2234 = vmatpush1.bf16.msra.mxu0 %v379
    %2235 = vmatprep.subr.bf16.mxu0 %v384
    %2236 = vmatpush1.bf16.msra.mxu0 %v383
    %2237 = vmatprep.subr.bf16.mxu0 %v388
    %2238 = vmatpush1.bf16.msra.mxu0 %v387
    %2239 = vmatprep.subr.bf16.mxu0 %v392
    %2240 = vmatpush1.bf16.msra.mxu0 %v391
    %2241 = vmatprep.subr.bf16.mxu0 %v396
    %2242 = vmatpush1.bf16.msra.mxu0 %v395
    %2243 = vmatprep.subr.bf16.mxu0 0
    %2244 = vmatpush1.bf16.msra.mxu0 0
    %2245 = vmatprep.subr.bf16.mxu0 0
    %2246 = vmatpush1.bf16.msra.mxu0 0
    %2247 = vmatprep.subr.bf16.mxu0 0
    %2248 = vmatpush1.bf16.msra.mxu0 0
    %2249 = vmatprep.subr.bf16.mxu0 0
    %2250 = vmatpush1.bf16.msra.mxu0 0
    %2251 = vmatprep.subr.bf16.mxu0 0
    %2252 = vmatpush1.bf16.msra.mxu0 0
    %2253 = vmatprep.subr.bf16.mxu0 0
    %2254 = vmatpush1.bf16.msra.mxu0 0
    %2255 = vmatprep.subr.bf16.mxu0 0
    %2256 = vmatpush1.bf16.msra.mxu0 0
    %2257 = vmatprep.subr.bf16.mxu0 0
    %2258 = vmatpush1.bf16.msra.mxu0 0
    %2259 = vmatprep.mubr.bf16.mxu0 0
    %2260 = vmatmul.mubr.bf16.gmra.mrb[0].mxu0 %v2184
    %v2261 = vpop.f32.mrb[0].mxu0
    %v2262 = vadd.f32 0.0, %v2261
    %v2263 = vpop.f32.mrb[0].mxu0
    %v2264 = vadd.f32 0.0, %v2263
    %v2265 = vpop.f32.mrb[0].mxu0
    %v2266 = vpop.f32.mrb[0].mxu0
    %2267 = vdwg.mxu0
    %v2272 = vrot.slane %v2221, 6
    %v2273 = vrot.slane %v2223, 6
    %v2274 = vrot.slane %v2262, 6
    %v2275 = vrot.slane %v2264, 6
    %v2276 = vrot.slane %v2221, 7
    %v2277 = vrot.slane %v2223, 7
    %v2278 = vrot.slane %v2262, 7
    %v2279 = vrot.slane %v2264, 7
    %v2288 = vadd.f32 %v222, %v2272
    %v2289 = vadd.f32 %v223, %v2273
    %v2290 = vadd.f32 %v224, %v2274
    %v2291 = vadd.f32 %v225, %v2275
    %v2292 = vadd.f32 %v230, %v2276
    %v2293 = vadd.f32 %v231, %v2277
    %v2294 = vadd.f32 %v232, %v2278
    %v2295 = vadd.f32 %v233, %v2279
    %v2296 = vmul.f32 %v2288, 0.5
    %v2297 = vmul.f32 %v2292, 0.5
    %v2298 = vtanh.pop %v2296
    %v2299 = vtanh.pop %v2297
    %v2300 = vmul.f32 %v2298, 0.5
    %v2301 = vmul.f32 %v2299, 0.5
    %v2302 = vadd.f32 %v2300, 0.5
    %v2303 = vadd.f32 %v2301, 0.5
    %v2304 = vmul.f32 %v2289, 0.5
    %v2305 = vmul.f32 %v2293, 0.5
    %v2306 = vtanh.pop %v2304
    %v2307 = vtanh.pop %v2305
    %v2308 = vmul.f32 %v2306, 0.5
    %v2309 = vmul.f32 %v2307, 0.5
    %v2310 = vadd.f32 %v2308, 0.5
    %v2311 = vadd.f32 %v2309, 0.5
    %v2312 = vtanh.pop %v2290
    %v2313 = vtanh.pop %v2294
    %v2314 = vmul.f32 %v2291, 0.5
    %v2315 = vmul.f32 %v2295, 0.5
    %v2316 = vtanh.pop %v2314
    %v2317 = vtanh.pop %v2315
    %v2318 = vmul.f32 %v2316, 0.5
    %v2319 = vmul.f32 %v2317, 0.5
    %v2320 = vadd.f32 %v2318, 0.5
    %v2321 = vadd.f32 %v2319, 0.5
    %v2324 = vrot.slane %v2166, 7
    %v2325 = vrot.slane %v2167, 7
    %v2328 = vmul.f32 %v2310, %v2324
    %v2329 = vmul.f32 %v2311, %v2325
    %v2330 = vmul.f32 %v2302, %v2312
    %v2331 = vmul.f32 %v2303, %v2313
    %v2332 = vadd.f32 %v2328, %v2330
    %v2333 = vadd.f32 %v2329, %v2331
    %v2334 = vtanh.pop %v2332
    %v2335 = vtanh.pop %v2333
    %v2336 = vmul.f32 %v2320, %v2334
    %v2337 = vmul.f32 %v2321, %v2335
    %s2338 = sadd.s32 %s575, 10
    %p2339 = scmp.lt.s32.totalorder %s2338, 8
    %s2340 = scalar_select %p2339, 1, 0
    %v2341 = vstv %s2340
    %vm2342 = vcmp.eq.s32.totalorder %v2341, 1
    %v2343 = vsel %vm2342, %v2332, %v2324
    %v2344 = vsel %vm2342, %v2333, %v2325
    %v2347 = vrot.slane %v2174, 7
    %v2348 = vrot.slane %v2175, 7
    %v2351 = vsel %vm2342, %v2336, %v2347
    %v2352 = vsel %vm2342, %v2337, %v2348
    %v2353 = vpack.c.bf16 %v2351, %v2351
    %v2354 = vpack.c.bf16 %v2352, %v2352
    %v2357 = vunpack.c.l.b16 %v2353
    %v2358 = vunpack.c.l.b16 %v2354
    %v2359 = vrot.slane %v2357, 2
    %v2360 = vrot.slane %v2358, 1
    %v2361 = vsel %vm595, %v2360, %v2359
    %v2362 = vpack.c.b16 %v2361, %v2361
    %2364 = vmatprep.subr.bf16.mxu0 %v366
    %2365 = vmatpush1.bf16.msra.mxu0 %v365
    %2366 = vmatprep.subr.bf16.mxu0 %v370
    %2367 = vmatpush1.bf16.msra.mxu0 %v369
    %2368 = vmatprep.subr.bf16.mxu0 %v374
    %2369 = vmatpush1.bf16.msra.mxu0 %v373
    %2370 = vmatprep.subr.bf16.mxu0 %v378
    %2371 = vmatpush1.bf16.msra.mxu0 %v377
    %2372 = vmatprep.subr.bf16.mxu0 %v382
    %2373 = vmatpush1.bf16.msra.mxu0 %v381
    %2374 = vmatprep.subr.bf16.mxu0 %v386
    %2375 = vmatpush1.bf16.msra.mxu0 %v385
    %2376 = vmatprep.subr.bf16.mxu0 %v390
    %2377 = vmatpush1.bf16.msra.mxu0 %v389
    %2378 = vmatprep.subr.bf16.mxu0 %v394
    %2379 = vmatpush1.bf16.msra.mxu0 %v393
    %2380 = vmatprep.subr.bf16.mxu0 0
    %2381 = vmatpush1.bf16.msra.mxu0 0
    %2382 = vmatprep.subr.bf16.mxu0 0
    %2383 = vmatpush1.bf16.msra.mxu0 0
    %2384 = vmatprep.subr.bf16.mxu0 0
    %2385 = vmatpush1.bf16.msra.mxu0 0
    %2386 = vmatprep.subr.bf16.mxu0 0
    %2387 = vmatpush1.bf16.msra.mxu0 0
    %2388 = vmatprep.subr.bf16.mxu0 0
    %2389 = vmatpush1.bf16.msra.mxu0 0
    %2390 = vmatprep.subr.bf16.mxu0 0
    %2391 = vmatpush1.bf16.msra.mxu0 0
    %2392 = vmatprep.subr.bf16.mxu0 0
    %2393 = vmatpush1.bf16.msra.mxu0 0
    %2394 = vmatprep.subr.bf16.mxu0 0
    %2395 = vmatpush1.bf16.msra.mxu0 0
    %2396 = vmatprep.mubr.bf16.mxu0 0
    %2397 = vmatmul.mubr.bf16.gmra.mrb[0].mxu0 %v2362
    %v2398 = vpop.f32.mrb[0].mxu0
    %v2399 = vadd.f32 0.0, %v2398
    %v2400 = vpop.f32.mrb[0].mxu0
    %v2401 = vadd.f32 0.0, %v2400
    %v2402 = vpop.f32.mrb[0].mxu0
    %v2403 = vpop.f32.mrb[0].mxu0
    %2404 = vdwg.mxu0
    %2405 = vmatprep.subr.bf16.mxu0 %v368
    %2406 = vmatpush1.bf16.msra.mxu0 %v367
    %2407 = vmatprep.subr.bf16.mxu0 %v372
    %2408 = vmatpush1.bf16.msra.mxu0 %v371
    %2409 = vmatprep.subr.bf16.mxu0 %v376
    %2410 = vmatpush1.bf16.msra.mxu0 %v375
    %2411 = vmatprep.subr.bf16.mxu0 %v380
    %2412 = vmatpush1.bf16.msra.mxu0 %v379
    %2413 = vmatprep.subr.bf16.mxu0 %v384
    %2414 = vmatpush1.bf16.msra.mxu0 %v383
    %2415 = vmatprep.subr.bf16.mxu0 %v388
    %2416 = vmatpush1.bf16.msra.mxu0 %v387
    %2417 = vmatprep.subr.bf16.mxu0 %v392
    %2418 = vmatpush1.bf16.msra.mxu0 %v391
    %2419 = vmatprep.subr.bf16.mxu0 %v396
    %2420 = vmatpush1.bf16.msra.mxu0 %v395
    %2421 = vmatprep.subr.bf16.mxu0 0
    %2422 = vmatpush1.bf16.msra.mxu0 0
    %2423 = vmatprep.subr.bf16.mxu0 0
    %2424 = vmatpush1.bf16.msra.mxu0 0
    %2425 = vmatprep.subr.bf16.mxu0 0
    %2426 = vmatpush1.bf16.msra.mxu0 0
    %2427 = vmatprep.subr.bf16.mxu0 0
    %2428 = vmatpush1.bf16.msra.mxu0 0
    %2429 = vmatprep.subr.bf16.mxu0 0
    %2430 = vmatpush1.bf16.msra.mxu0 0
    %2431 = vmatprep.subr.bf16.mxu0 0
    %2432 = vmatpush1.bf16.msra.mxu0 0
    %2433 = vmatprep.subr.bf16.mxu0 0
    %2434 = vmatpush1.bf16.msra.mxu0 0
    %2435 = vmatprep.subr.bf16.mxu0 0
    %2436 = vmatpush1.bf16.msra.mxu0 0
    %2437 = vmatprep.mubr.bf16.mxu0 0
    %2438 = vmatmul.mubr.bf16.gmra.mrb[0].mxu0 %v2362
    %v2439 = vpop.f32.mrb[0].mxu0
    %v2440 = vadd.f32 0.0, %v2439
    %v2441 = vpop.f32.mrb[0].mxu0
    %v2442 = vadd.f32 0.0, %v2441
    %v2443 = vpop.f32.mrb[0].mxu0
    %v2444 = vpop.f32.mrb[0].mxu0
    %2445 = vdwg.mxu0
    %v2450 = vrot.slane %v2399, 5
    %v2451 = vrot.slane %v2401, 5
    %v2452 = vrot.slane %v2440, 5
    %v2453 = vrot.slane %v2442, 5
    %v2454 = vrot.slane %v2399, 6
    %v2455 = vrot.slane %v2401, 6
    %v2456 = vrot.slane %v2440, 6
    %v2457 = vrot.slane %v2442, 6
    %v2466 = vadd.f32 %v222, %v2450
    %v2467 = vadd.f32 %v223, %v2451
    %v2468 = vadd.f32 %v224, %v2452
    %v2469 = vadd.f32 %v225, %v2453
    %v2470 = vadd.f32 %v230, %v2454
    %v2471 = vadd.f32 %v231, %v2455
    %v2472 = vadd.f32 %v232, %v2456
    %v2473 = vadd.f32 %v233, %v2457
    %v2474 = vmul.f32 %v2466, 0.5
    %v2475 = vmul.f32 %v2470, 0.5
    %v2476 = vtanh.pop %v2474
    %v2477 = vtanh.pop %v2475
    %v2478 = vmul.f32 %v2476, 0.5
    %v2479 = vmul.f32 %v2477, 0.5
    %v2480 = vadd.f32 %v2478, 0.5
    %v2481 = vadd.f32 %v2479, 0.5
    %v2482 = vmul.f32 %v2467, 0.5
    %v2483 = vmul.f32 %v2471, 0.5
    %v2484 = vtanh.pop %v2482
    %v2485 = vtanh.pop %v2483
    %v2486 = vmul.f32 %v2484, 0.5
    %v2487 = vmul.f32 %v2485, 0.5
    %v2488 = vadd.f32 %v2486, 0.5
    %v2489 = vadd.f32 %v2487, 0.5
    %v2490 = vtanh.pop %v2468
    %v2491 = vtanh.pop %v2472
    %v2492 = vmul.f32 %v2469, 0.5
    %v2493 = vmul.f32 %v2473, 0.5
    %v2494 = vtanh.pop %v2492
    %v2495 = vtanh.pop %v2493
    %v2496 = vmul.f32 %v2494, 0.5
    %v2497 = vmul.f32 %v2495, 0.5
    %v2498 = vadd.f32 %v2496, 0.5
    %v2499 = vadd.f32 %v2497, 0.5
    %v2502 = vrot.slane %v2343, 7
    %v2503 = vrot.slane %v2344, 7
    %v2506 = vmul.f32 %v2488, %v2502
    %v2507 = vmul.f32 %v2489, %v2503
    %v2508 = vmul.f32 %v2480, %v2490
    %v2509 = vmul.f32 %v2481, %v2491
    %v2510 = vadd.f32 %v2506, %v2508
    %v2511 = vadd.f32 %v2507, %v2509
    %v2512 = vtanh.pop %v2510
    %v2513 = vtanh.pop %v2511
    %v2514 = vmul.f32 %v2498, %v2512
    %v2515 = vmul.f32 %v2499, %v2513
    %s2516 = sadd.s32 %s575, 11
    %p2517 = scmp.lt.s32.totalorder %s2516, 8
    %s2518 = scalar_select %p2517, 1, 0
    %v2519 = vstv %s2518
    %vm2520 = vcmp.eq.s32.totalorder %v2519, 1
    %v2521 = vsel %vm2520, %v2510, %v2502
    %v2522 = vsel %vm2520, %v2511, %v2503
    %v2525 = vrot.slane %v2351, 7
    %v2526 = vrot.slane %v2352, 7
    %v2529 = vsel %vm2520, %v2514, %v2525
    %v2530 = vsel %vm2520, %v2515, %v2526
    %v2531 = vpack.c.bf16 %v2529, %v2529
    %v2532 = vpack.c.bf16 %v2530, %v2530
    %v2535 = vunpack.c.l.b16 %v2531
    %v2536 = vunpack.c.l.b16 %v2532
    %v2537 = vrot.slane %v2535, 3
    %v2538 = vrot.slane %v2536, 2
    %v2539 = vsel %vm595, %v2538, %v2537
    %v2540 = vpack.c.b16 %v2539, %v2539
    %2542 = vmatprep.subr.bf16.mxu0 %v366
    %2543 = vmatpush1.bf16.msra.mxu0 %v365
    %2544 = vmatprep.subr.bf16.mxu0 %v370
    %2545 = vmatpush1.bf16.msra.mxu0 %v369
    %2546 = vmatprep.subr.bf16.mxu0 %v374
    %2547 = vmatpush1.bf16.msra.mxu0 %v373
    %2548 = vmatprep.subr.bf16.mxu0 %v378
    %2549 = vmatpush1.bf16.msra.mxu0 %v377
    %2550 = vmatprep.subr.bf16.mxu0 %v382
    %2551 = vmatpush1.bf16.msra.mxu0 %v381
    %2552 = vmatprep.subr.bf16.mxu0 %v386
    %2553 = vmatpush1.bf16.msra.mxu0 %v385
    %2554 = vmatprep.subr.bf16.mxu0 %v390
    %2555 = vmatpush1.bf16.msra.mxu0 %v389
    %2556 = vmatprep.subr.bf16.mxu0 %v394
    %2557 = vmatpush1.bf16.msra.mxu0 %v393
    %2558 = vmatprep.subr.bf16.mxu0 0
    %2559 = vmatpush1.bf16.msra.mxu0 0
    %2560 = vmatprep.subr.bf16.mxu0 0
    %2561 = vmatpush1.bf16.msra.mxu0 0
    %2562 = vmatprep.subr.bf16.mxu0 0
    %2563 = vmatpush1.bf16.msra.mxu0 0
    %2564 = vmatprep.subr.bf16.mxu0 0
    %2565 = vmatpush1.bf16.msra.mxu0 0
    %2566 = vmatprep.subr.bf16.mxu0 0
    %2567 = vmatpush1.bf16.msra.mxu0 0
    %2568 = vmatprep.subr.bf16.mxu0 0
    %2569 = vmatpush1.bf16.msra.mxu0 0
    %2570 = vmatprep.subr.bf16.mxu0 0
    %2571 = vmatpush1.bf16.msra.mxu0 0
    %2572 = vmatprep.subr.bf16.mxu0 0
    %2573 = vmatpush1.bf16.msra.mxu0 0
    %2574 = vmatprep.mubr.bf16.mxu0 0
    %2575 = vmatmul.mubr.bf16.gmra.mrb[0].mxu0 %v2540
    %v2576 = vpop.f32.mrb[0].mxu0
    %v2577 = vadd.f32 0.0, %v2576
    %v2578 = vpop.f32.mrb[0].mxu0
    %v2579 = vadd.f32 0.0, %v2578
    %v2580 = vpop.f32.mrb[0].mxu0
    %v2581 = vpop.f32.mrb[0].mxu0
    %2582 = vdwg.mxu0
    %2583 = vmatprep.subr.bf16.mxu0 %v368
    %2584 = vmatpush1.bf16.msra.mxu0 %v367
    %2585 = vmatprep.subr.bf16.mxu0 %v372
    %2586 = vmatpush1.bf16.msra.mxu0 %v371
    %2587 = vmatprep.subr.bf16.mxu0 %v376
    %2588 = vmatpush1.bf16.msra.mxu0 %v375
    %2589 = vmatprep.subr.bf16.mxu0 %v380
    %2590 = vmatpush1.bf16.msra.mxu0 %v379
    %2591 = vmatprep.subr.bf16.mxu0 %v384
    %2592 = vmatpush1.bf16.msra.mxu0 %v383
    %2593 = vmatprep.subr.bf16.mxu0 %v388
    %2594 = vmatpush1.bf16.msra.mxu0 %v387
    %2595 = vmatprep.subr.bf16.mxu0 %v392
    %2596 = vmatpush1.bf16.msra.mxu0 %v391
    %2597 = vmatprep.subr.bf16.mxu0 %v396
    %2598 = vmatpush1.bf16.msra.mxu0 %v395
    %2599 = vmatprep.subr.bf16.mxu0 0
    %2600 = vmatpush1.bf16.msra.mxu0 0
    %2601 = vmatprep.subr.bf16.mxu0 0
    %2602 = vmatpush1.bf16.msra.mxu0 0
    %2603 = vmatprep.subr.bf16.mxu0 0
    %2604 = vmatpush1.bf16.msra.mxu0 0
    %2605 = vmatprep.subr.bf16.mxu0 0
    %2606 = vmatpush1.bf16.msra.mxu0 0
    %2607 = vmatprep.subr.bf16.mxu0 0
    %2608 = vmatpush1.bf16.msra.mxu0 0
    %2609 = vmatprep.subr.bf16.mxu0 0
    %2610 = vmatpush1.bf16.msra.mxu0 0
    %2611 = vmatprep.subr.bf16.mxu0 0
    %2612 = vmatpush1.bf16.msra.mxu0 0
    %2613 = vmatprep.subr.bf16.mxu0 0
    %2614 = vmatpush1.bf16.msra.mxu0 0
    %2615 = vmatprep.mubr.bf16.mxu0 0
    %2616 = vmatmul.mubr.bf16.gmra.mrb[0].mxu0 %v2540
    %v2617 = vpop.f32.mrb[0].mxu0
    %v2618 = vadd.f32 0.0, %v2617
    %v2619 = vpop.f32.mrb[0].mxu0
    %v2620 = vadd.f32 0.0, %v2619
    %v2621 = vpop.f32.mrb[0].mxu0
    %v2622 = vpop.f32.mrb[0].mxu0
    %2623 = vdwg.mxu0
    %v2628 = vrot.slane %v2577, 4
    %v2629 = vrot.slane %v2579, 4
    %v2630 = vrot.slane %v2618, 4
    %v2631 = vrot.slane %v2620, 4
    %v2632 = vrot.slane %v2577, 5
    %v2633 = vrot.slane %v2579, 5
    %v2634 = vrot.slane %v2618, 5
    %v2635 = vrot.slane %v2620, 5
    %v2644 = vadd.f32 %v222, %v2628
    %v2645 = vadd.f32 %v223, %v2629
    %v2646 = vadd.f32 %v224, %v2630
    %v2647 = vadd.f32 %v225, %v2631
    %v2648 = vadd.f32 %v230, %v2632
    %v2649 = vadd.f32 %v231, %v2633
    %v2650 = vadd.f32 %v232, %v2634
    %v2651 = vadd.f32 %v233, %v2635
    %v2652 = vmul.f32 %v2644, 0.5
    %v2653 = vmul.f32 %v2648, 0.5
    %v2654 = vtanh.pop %v2652
    %v2655 = vtanh.pop %v2653
    %v2656 = vmul.f32 %v2654, 0.5
    %v2657 = vmul.f32 %v2655, 0.5
    %v2658 = vadd.f32 %v2656, 0.5
    %v2659 = vadd.f32 %v2657, 0.5
    %v2660 = vmul.f32 %v2645, 0.5
    %v2661 = vmul.f32 %v2649, 0.5
    %v2662 = vtanh.pop %v2660
    %v2663 = vtanh.pop %v2661
    %v2664 = vmul.f32 %v2662, 0.5
    %v2665 = vmul.f32 %v2663, 0.5
    %v2666 = vadd.f32 %v2664, 0.5
    %v2667 = vadd.f32 %v2665, 0.5
    %v2668 = vtanh.pop %v2646
    %v2669 = vtanh.pop %v2650
    %v2670 = vmul.f32 %v2647, 0.5
    %v2671 = vmul.f32 %v2651, 0.5
    %v2672 = vtanh.pop %v2670
    %v2673 = vtanh.pop %v2671
    %v2674 = vmul.f32 %v2672, 0.5
    %v2675 = vmul.f32 %v2673, 0.5
    %v2676 = vadd.f32 %v2674, 0.5
    %v2677 = vadd.f32 %v2675, 0.5
    %v2680 = vrot.slane %v2521, 7
    %v2681 = vrot.slane %v2522, 7
    %v2684 = vmul.f32 %v2666, %v2680
    %v2685 = vmul.f32 %v2667, %v2681
    %v2686 = vmul.f32 %v2658, %v2668
    %v2687 = vmul.f32 %v2659, %v2669
    %v2688 = vadd.f32 %v2684, %v2686
    %v2689 = vadd.f32 %v2685, %v2687
    %v2690 = vtanh.pop %v2688
    %v2691 = vtanh.pop %v2689
    %v2692 = vmul.f32 %v2676, %v2690
    %v2693 = vmul.f32 %v2677, %v2691
    %s2694 = sadd.s32 %s575, 12
    %p2695 = scmp.lt.s32.totalorder %s2694, 8
    %s2696 = scalar_select %p2695, 1, 0
    %v2697 = vstv %s2696
    %vm2698 = vcmp.eq.s32.totalorder %v2697, 1
    %v2699 = vsel %vm2698, %v2688, %v2680
    %v2700 = vsel %vm2698, %v2689, %v2681
    %v2703 = vrot.slane %v2529, 7
    %v2704 = vrot.slane %v2530, 7
    %v2707 = vsel %vm2698, %v2692, %v2703
    %v2708 = vsel %vm2698, %v2693, %v2704
    %v2709 = vpack.c.bf16 %v2707, %v2707
    %v2710 = vpack.c.bf16 %v2708, %v2708
    %v2713 = vunpack.c.l.b16 %v2709
    %v2714 = vunpack.c.l.b16 %v2710
    %v2715 = vrot.slane %v2713, 4
    %v2716 = vrot.slane %v2714, 3
    %v2717 = vsel %vm595, %v2716, %v2715
    %v2718 = vpack.c.b16 %v2717, %v2717
    %2720 = vmatprep.subr.bf16.mxu0 %v366
    %2721 = vmatpush1.bf16.msra.mxu0 %v365
    %2722 = vmatprep.subr.bf16.mxu0 %v370
    %2723 = vmatpush1.bf16.msra.mxu0 %v369
    %2724 = vmatprep.subr.bf16.mxu0 %v374
    %2725 = vmatpush1.bf16.msra.mxu0 %v373
    %2726 = vmatprep.subr.bf16.mxu0 %v378
    %2727 = vmatpush1.bf16.msra.mxu0 %v377
    %2728 = vmatprep.subr.bf16.mxu0 %v382
    %2729 = vmatpush1.bf16.msra.mxu0 %v381
    %2730 = vmatprep.subr.bf16.mxu0 %v386
    %2731 = vmatpush1.bf16.msra.mxu0 %v385
    %2732 = vmatprep.subr.bf16.mxu0 %v390
    %2733 = vmatpush1.bf16.msra.mxu0 %v389
    %2734 = vmatprep.subr.bf16.mxu0 %v394
    %2735 = vmatpush1.bf16.msra.mxu0 %v393
    %2736 = vmatprep.subr.bf16.mxu0 0
    %2737 = vmatpush1.bf16.msra.mxu0 0
    %2738 = vmatprep.subr.bf16.mxu0 0
    %2739 = vmatpush1.bf16.msra.mxu0 0
    %2740 = vmatprep.subr.bf16.mxu0 0
    %2741 = vmatpush1.bf16.msra.mxu0 0
    %2742 = vmatprep.subr.bf16.mxu0 0
    %2743 = vmatpush1.bf16.msra.mxu0 0
    %2744 = vmatprep.subr.bf16.mxu0 0
    %2745 = vmatpush1.bf16.msra.mxu0 0
    %2746 = vmatprep.subr.bf16.mxu0 0
    %2747 = vmatpush1.bf16.msra.mxu0 0
    %2748 = vmatprep.subr.bf16.mxu0 0
    %2749 = vmatpush1.bf16.msra.mxu0 0
    %2750 = vmatprep.subr.bf16.mxu0 0
    %2751 = vmatpush1.bf16.msra.mxu0 0
    %2752 = vmatprep.mubr.bf16.mxu0 0
    %2753 = vmatmul.mubr.bf16.gmra.mrb[0].mxu0 %v2718
    %v2754 = vpop.f32.mrb[0].mxu0
    %v2755 = vadd.f32 0.0, %v2754
    %v2756 = vpop.f32.mrb[0].mxu0
    %v2757 = vadd.f32 0.0, %v2756
    %v2758 = vpop.f32.mrb[0].mxu0
    %v2759 = vpop.f32.mrb[0].mxu0
    %2760 = vdwg.mxu0
    %2761 = vmatprep.subr.bf16.mxu0 %v368
    %2762 = vmatpush1.bf16.msra.mxu0 %v367
    %2763 = vmatprep.subr.bf16.mxu0 %v372
    %2764 = vmatpush1.bf16.msra.mxu0 %v371
    %2765 = vmatprep.subr.bf16.mxu0 %v376
    %2766 = vmatpush1.bf16.msra.mxu0 %v375
    %2767 = vmatprep.subr.bf16.mxu0 %v380
    %2768 = vmatpush1.bf16.msra.mxu0 %v379
    %2769 = vmatprep.subr.bf16.mxu0 %v384
    %2770 = vmatpush1.bf16.msra.mxu0 %v383
    %2771 = vmatprep.subr.bf16.mxu0 %v388
    %2772 = vmatpush1.bf16.msra.mxu0 %v387
    %2773 = vmatprep.subr.bf16.mxu0 %v392
    %2774 = vmatpush1.bf16.msra.mxu0 %v391
    %2775 = vmatprep.subr.bf16.mxu0 %v396
    %2776 = vmatpush1.bf16.msra.mxu0 %v395
    %2777 = vmatprep.subr.bf16.mxu0 0
    %2778 = vmatpush1.bf16.msra.mxu0 0
    %2779 = vmatprep.subr.bf16.mxu0 0
    %2780 = vmatpush1.bf16.msra.mxu0 0
    %2781 = vmatprep.subr.bf16.mxu0 0
    %2782 = vmatpush1.bf16.msra.mxu0 0
    %2783 = vmatprep.subr.bf16.mxu0 0
    %2784 = vmatpush1.bf16.msra.mxu0 0
    %2785 = vmatprep.subr.bf16.mxu0 0
    %2786 = vmatpush1.bf16.msra.mxu0 0
    %2787 = vmatprep.subr.bf16.mxu0 0
    %2788 = vmatpush1.bf16.msra.mxu0 0
    %2789 = vmatprep.subr.bf16.mxu0 0
    %2790 = vmatpush1.bf16.msra.mxu0 0
    %2791 = vmatprep.subr.bf16.mxu0 0
    %2792 = vmatpush1.bf16.msra.mxu0 0
    %2793 = vmatprep.mubr.bf16.mxu0 0
    %2794 = vmatmul.mubr.bf16.gmra.mrb[0].mxu0 %v2718
    %v2795 = vpop.f32.mrb[0].mxu0
    %v2796 = vadd.f32 0.0, %v2795
    %v2797 = vpop.f32.mrb[0].mxu0
    %v2798 = vadd.f32 0.0, %v2797
    %v2799 = vpop.f32.mrb[0].mxu0
    %v2800 = vpop.f32.mrb[0].mxu0
    %2801 = vdwg.mxu0
    %v2806 = vrot.slane %v2755, 3
    %v2807 = vrot.slane %v2757, 3
    %v2808 = vrot.slane %v2796, 3
    %v2809 = vrot.slane %v2798, 3
    %v2810 = vrot.slane %v2755, 4
    %v2811 = vrot.slane %v2757, 4
    %v2812 = vrot.slane %v2796, 4
    %v2813 = vrot.slane %v2798, 4
    %v2822 = vadd.f32 %v222, %v2806
    %v2823 = vadd.f32 %v223, %v2807
    %v2824 = vadd.f32 %v224, %v2808
    %v2825 = vadd.f32 %v225, %v2809
    %v2826 = vadd.f32 %v230, %v2810
    %v2827 = vadd.f32 %v231, %v2811
    %v2828 = vadd.f32 %v232, %v2812
    %v2829 = vadd.f32 %v233, %v2813
    %v2830 = vmul.f32 %v2822, 0.5
    %v2831 = vmul.f32 %v2826, 0.5
    %v2832 = vtanh.pop %v2830
    %v2833 = vtanh.pop %v2831
    %v2834 = vmul.f32 %v2832, 0.5
    %v2835 = vmul.f32 %v2833, 0.5
    %v2836 = vadd.f32 %v2834, 0.5
    %v2837 = vadd.f32 %v2835, 0.5
    %v2838 = vmul.f32 %v2823, 0.5
    %v2839 = vmul.f32 %v2827, 0.5
    %v2840 = vtanh.pop %v2838
    %v2841 = vtanh.pop %v2839
    %v2842 = vmul.f32 %v2840, 0.5
    %v2843 = vmul.f32 %v2841, 0.5
    %v2844 = vadd.f32 %v2842, 0.5
    %v2845 = vadd.f32 %v2843, 0.5
    %v2846 = vtanh.pop %v2824
    %v2847 = vtanh.pop %v2828
    %v2848 = vmul.f32 %v2825, 0.5
    %v2849 = vmul.f32 %v2829, 0.5
    %v2850 = vtanh.pop %v2848
    %v2851 = vtanh.pop %v2849
    %v2852 = vmul.f32 %v2850, 0.5
    %v2853 = vmul.f32 %v2851, 0.5
    %v2854 = vadd.f32 %v2852, 0.5
    %v2855 = vadd.f32 %v2853, 0.5
    %v2858 = vrot.slane %v2699, 7
    %v2859 = vrot.slane %v2700, 7
    %v2862 = vmul.f32 %v2844, %v2858
    %v2863 = vmul.f32 %v2845, %v2859
    %v2864 = vmul.f32 %v2836, %v2846
    %v2865 = vmul.f32 %v2837, %v2847
    %v2866 = vadd.f32 %v2862, %v2864
    %v2867 = vadd.f32 %v2863, %v2865
    %v2868 = vtanh.pop %v2866
    %v2869 = vtanh.pop %v2867
    %v2870 = vmul.f32 %v2854, %v2868
    %v2871 = vmul.f32 %v2855, %v2869
    %s2872 = sadd.s32 %s575, 13
    %p2873 = scmp.lt.s32.totalorder %s2872, 8
    %s2874 = scalar_select %p2873, 1, 0
    %v2875 = vstv %s2874
    %vm2876 = vcmp.eq.s32.totalorder %v2875, 1
    %v2877 = vsel %vm2876, %v2866, %v2858
    %v2878 = vsel %vm2876, %v2867, %v2859
    %v2881 = vrot.slane %v2707, 7
    %v2882 = vrot.slane %v2708, 7
    %v2885 = vsel %vm2876, %v2870, %v2881
    %v2886 = vsel %vm2876, %v2871, %v2882
    %v2887 = vpack.c.bf16 %v2885, %v2885
    %v2888 = vpack.c.bf16 %v2886, %v2886
    %v2891 = vunpack.c.l.b16 %v2887
    %v2892 = vunpack.c.l.b16 %v2888
    %v2893 = vrot.slane %v2891, 5
    %v2894 = vrot.slane %v2892, 4
    %v2895 = vsel %vm595, %v2894, %v2893
    %v2896 = vpack.c.b16 %v2895, %v2895
    %2898 = vmatprep.subr.bf16.mxu0 %v366
    %2899 = vmatpush1.bf16.msra.mxu0 %v365
    %2900 = vmatprep.subr.bf16.mxu0 %v370
    %2901 = vmatpush1.bf16.msra.mxu0 %v369
    %2902 = vmatprep.subr.bf16.mxu0 %v374
    %2903 = vmatpush1.bf16.msra.mxu0 %v373
    %2904 = vmatprep.subr.bf16.mxu0 %v378
    %2905 = vmatpush1.bf16.msra.mxu0 %v377
    %2906 = vmatprep.subr.bf16.mxu0 %v382
    %2907 = vmatpush1.bf16.msra.mxu0 %v381
    %2908 = vmatprep.subr.bf16.mxu0 %v386
    %2909 = vmatpush1.bf16.msra.mxu0 %v385
    %2910 = vmatprep.subr.bf16.mxu0 %v390
    %2911 = vmatpush1.bf16.msra.mxu0 %v389
    %2912 = vmatprep.subr.bf16.mxu0 %v394
    %2913 = vmatpush1.bf16.msra.mxu0 %v393
    %2914 = vmatprep.subr.bf16.mxu0 0
    %2915 = vmatpush1.bf16.msra.mxu0 0
    %2916 = vmatprep.subr.bf16.mxu0 0
    %2917 = vmatpush1.bf16.msra.mxu0 0
    %2918 = vmatprep.subr.bf16.mxu0 0
    %2919 = vmatpush1.bf16.msra.mxu0 0
    %2920 = vmatprep.subr.bf16.mxu0 0
    %2921 = vmatpush1.bf16.msra.mxu0 0
    %2922 = vmatprep.subr.bf16.mxu0 0
    %2923 = vmatpush1.bf16.msra.mxu0 0
    %2924 = vmatprep.subr.bf16.mxu0 0
    %2925 = vmatpush1.bf16.msra.mxu0 0
    %2926 = vmatprep.subr.bf16.mxu0 0
    %2927 = vmatpush1.bf16.msra.mxu0 0
    %2928 = vmatprep.subr.bf16.mxu0 0
    %2929 = vmatpush1.bf16.msra.mxu0 0
    %2930 = vmatprep.mubr.bf16.mxu0 0
    %2931 = vmatmul.mubr.bf16.gmra.mrb[0].mxu0 %v2896
    %v2932 = vpop.f32.mrb[0].mxu0
    %v2933 = vadd.f32 0.0, %v2932
    %v2934 = vpop.f32.mrb[0].mxu0
    %v2935 = vadd.f32 0.0, %v2934
    %v2936 = vpop.f32.mrb[0].mxu0
    %v2937 = vpop.f32.mrb[0].mxu0
    %2938 = vdwg.mxu0
    %2939 = vmatprep.subr.bf16.mxu0 %v368
    %2940 = vmatpush1.bf16.msra.mxu0 %v367
    %2941 = vmatprep.subr.bf16.mxu0 %v372
    %2942 = vmatpush1.bf16.msra.mxu0 %v371
    %2943 = vmatprep.subr.bf16.mxu0 %v376
    %2944 = vmatpush1.bf16.msra.mxu0 %v375
    %2945 = vmatprep.subr.bf16.mxu0 %v380
    %2946 = vmatpush1.bf16.msra.mxu0 %v379
    %2947 = vmatprep.subr.bf16.mxu0 %v384
    %2948 = vmatpush1.bf16.msra.mxu0 %v383
    %2949 = vmatprep.subr.bf16.mxu0 %v388
    %2950 = vmatpush1.bf16.msra.mxu0 %v387
    %2951 = vmatprep.subr.bf16.mxu0 %v392
    %2952 = vmatpush1.bf16.msra.mxu0 %v391
    %2953 = vmatprep.subr.bf16.mxu0 %v396
    %2954 = vmatpush1.bf16.msra.mxu0 %v395
    %2955 = vmatprep.subr.bf16.mxu0 0
    %2956 = vmatpush1.bf16.msra.mxu0 0
    %2957 = vmatprep.subr.bf16.mxu0 0
    %2958 = vmatpush1.bf16.msra.mxu0 0
    %2959 = vmatprep.subr.bf16.mxu0 0
    %2960 = vmatpush1.bf16.msra.mxu0 0
    %2961 = vmatprep.subr.bf16.mxu0 0
    %2962 = vmatpush1.bf16.msra.mxu0 0
    %2963 = vmatprep.subr.bf16.mxu0 0
    %2964 = vmatpush1.bf16.msra.mxu0 0
    %2965 = vmatprep.subr.bf16.mxu0 0
    %2966 = vmatpush1.bf16.msra.mxu0 0
    %2967 = vmatprep.subr.bf16.mxu0 0
    %2968 = vmatpush1.bf16.msra.mxu0 0
    %2969 = vmatprep.subr.bf16.mxu0 0
    %2970 = vmatpush1.bf16.msra.mxu0 0
    %2971 = vmatprep.mubr.bf16.mxu0 0
    %2972 = vmatmul.mubr.bf16.gmra.mrb[0].mxu0 %v2896
    %v2973 = vpop.f32.mrb[0].mxu0
    %v2974 = vadd.f32 0.0, %v2973
    %v2975 = vpop.f32.mrb[0].mxu0
    %v2976 = vadd.f32 0.0, %v2975
    %v2977 = vpop.f32.mrb[0].mxu0
    %v2978 = vpop.f32.mrb[0].mxu0
    %2979 = vdwg.mxu0
    %v2984 = vrot.slane %v2933, 2
    %v2985 = vrot.slane %v2935, 2
    %v2986 = vrot.slane %v2974, 2
    %v2987 = vrot.slane %v2976, 2
    %v2988 = vrot.slane %v2933, 3
    %v2989 = vrot.slane %v2935, 3
    %v2990 = vrot.slane %v2974, 3
    %v2991 = vrot.slane %v2976, 3
    %v3000 = vadd.f32 %v222, %v2984
    %v3001 = vadd.f32 %v223, %v2985
    %v3002 = vadd.f32 %v224, %v2986
    %v3003 = vadd.f32 %v225, %v2987
    %v3004 = vadd.f32 %v230, %v2988
    %v3005 = vadd.f32 %v231, %v2989
    %v3006 = vadd.f32 %v232, %v2990
    %v3007 = vadd.f32 %v233, %v2991
    %v3008 = vmul.f32 %v3000, 0.5
    %v3009 = vmul.f32 %v3004, 0.5
    %v3010 = vtanh.pop %v3008
    %v3011 = vtanh.pop %v3009
    %v3012 = vmul.f32 %v3010, 0.5
    %v3013 = vmul.f32 %v3011, 0.5
    %v3014 = vadd.f32 %v3012, 0.5
    %v3015 = vadd.f32 %v3013, 0.5
    %v3016 = vmul.f32 %v3001, 0.5
    %v3017 = vmul.f32 %v3005, 0.5
    %v3018 = vtanh.pop %v3016
    %v3019 = vtanh.pop %v3017
    %v3020 = vmul.f32 %v3018, 0.5
    %v3021 = vmul.f32 %v3019, 0.5
    %v3022 = vadd.f32 %v3020, 0.5
    %v3023 = vadd.f32 %v3021, 0.5
    %v3024 = vtanh.pop %v3002
    %v3025 = vtanh.pop %v3006
    %v3026 = vmul.f32 %v3003, 0.5
    %v3027 = vmul.f32 %v3007, 0.5
    %v3028 = vtanh.pop %v3026
    %v3029 = vtanh.pop %v3027
    %v3030 = vmul.f32 %v3028, 0.5
    %v3031 = vmul.f32 %v3029, 0.5
    %v3032 = vadd.f32 %v3030, 0.5
    %v3033 = vadd.f32 %v3031, 0.5
    %v3036 = vrot.slane %v2877, 7
    %v3037 = vrot.slane %v2878, 7
    %v3040 = vmul.f32 %v3022, %v3036
    %v3041 = vmul.f32 %v3023, %v3037
    %v3042 = vmul.f32 %v3014, %v3024
    %v3043 = vmul.f32 %v3015, %v3025
    %v3044 = vadd.f32 %v3040, %v3042
    %v3045 = vadd.f32 %v3041, %v3043
    %v3046 = vtanh.pop %v3044
    %v3047 = vtanh.pop %v3045
    %v3048 = vmul.f32 %v3032, %v3046
    %v3049 = vmul.f32 %v3033, %v3047
    %s3050 = sadd.s32 %s575, 14
    %p3051 = scmp.lt.s32.totalorder %s3050, 8
    %s3052 = scalar_select %p3051, 1, 0
    %v3053 = vstv %s3052
    %vm3054 = vcmp.eq.s32.totalorder %v3053, 1
    %v3055 = vsel %vm3054, %v3044, %v3036
    %v3056 = vsel %vm3054, %v3045, %v3037
    %v3059 = vrot.slane %v2885, 7
    %v3060 = vrot.slane %v2886, 7
    %v3063 = vsel %vm3054, %v3048, %v3059
    %v3064 = vsel %vm3054, %v3049, %v3060
    %v3065 = vpack.c.bf16 %v3063, %v3063
    %v3066 = vpack.c.bf16 %v3064, %v3064
    %v3069 = vunpack.c.l.b16 %v3065
    %v3070 = vunpack.c.l.b16 %v3066
    %v3071 = vrot.slane %v3069, 6
    %v3072 = vrot.slane %v3070, 5
    %v3073 = vsel %vm595, %v3072, %v3071
    %v3074 = vpack.c.b16 %v3073, %v3073
    %3076 = vmatprep.subr.bf16.mxu0 %v366
    %3077 = vmatpush1.bf16.msra.mxu0 %v365
    %3078 = vmatprep.subr.bf16.mxu0 %v370
    %3079 = vmatpush1.bf16.msra.mxu0 %v369
    %3080 = vmatprep.subr.bf16.mxu0 %v374
    %3081 = vmatpush1.bf16.msra.mxu0 %v373
    %3082 = vmatprep.subr.bf16.mxu0 %v378
    %3083 = vmatpush1.bf16.msra.mxu0 %v377
    %3084 = vmatprep.subr.bf16.mxu0 %v382
    %3085 = vmatpush1.bf16.msra.mxu0 %v381
    %3086 = vmatprep.subr.bf16.mxu0 %v386
    %3087 = vmatpush1.bf16.msra.mxu0 %v385
    %3088 = vmatprep.subr.bf16.mxu0 %v390
    %3089 = vmatpush1.bf16.msra.mxu0 %v389
    %3090 = vmatprep.subr.bf16.mxu0 %v394
    %3091 = vmatpush1.bf16.msra.mxu0 %v393
    %3092 = vmatprep.subr.bf16.mxu0 0
    %3093 = vmatpush1.bf16.msra.mxu0 0
    %3094 = vmatprep.subr.bf16.mxu0 0
    %3095 = vmatpush1.bf16.msra.mxu0 0
    %3096 = vmatprep.subr.bf16.mxu0 0
    %3097 = vmatpush1.bf16.msra.mxu0 0
    %3098 = vmatprep.subr.bf16.mxu0 0
    %3099 = vmatpush1.bf16.msra.mxu0 0
    %3100 = vmatprep.subr.bf16.mxu0 0
    %3101 = vmatpush1.bf16.msra.mxu0 0
    %3102 = vmatprep.subr.bf16.mxu0 0
    %3103 = vmatpush1.bf16.msra.mxu0 0
    %3104 = vmatprep.subr.bf16.mxu0 0
    %3105 = vmatpush1.bf16.msra.mxu0 0
    %3106 = vmatprep.subr.bf16.mxu0 0
    %3107 = vmatpush1.bf16.msra.mxu0 0
    %3108 = vmatprep.mubr.bf16.mxu0 0
    %3109 = vmatmul.mubr.bf16.gmra.mrb[0].mxu0 %v3074
    %v3110 = vpop.f32.mrb[0].mxu0
    %v3111 = vadd.f32 0.0, %v3110
    %v3112 = vpop.f32.mrb[0].mxu0
    %v3113 = vadd.f32 0.0, %v3112
    %v3114 = vpop.f32.mrb[0].mxu0
    %v3115 = vpop.f32.mrb[0].mxu0
    %3116 = vdwg.mxu0
    %3117 = vmatprep.subr.bf16.mxu0 %v368
    %3118 = vmatpush1.bf16.msra.mxu0 %v367
    %3119 = vmatprep.subr.bf16.mxu0 %v372
    %3120 = vmatpush1.bf16.msra.mxu0 %v371
    %3121 = vmatprep.subr.bf16.mxu0 %v376
    %3122 = vmatpush1.bf16.msra.mxu0 %v375
    %3123 = vmatprep.subr.bf16.mxu0 %v380
    %3124 = vmatpush1.bf16.msra.mxu0 %v379
    %3125 = vmatprep.subr.bf16.mxu0 %v384
    %3126 = vmatpush1.bf16.msra.mxu0 %v383
    %3127 = vmatprep.subr.bf16.mxu0 %v388
    %3128 = vmatpush1.bf16.msra.mxu0 %v387
    %3129 = vmatprep.subr.bf16.mxu0 %v392
    %3130 = vmatpush1.bf16.msra.mxu0 %v391
    %3131 = vmatprep.subr.bf16.mxu0 %v396
    %3132 = vmatpush1.bf16.msra.mxu0 %v395
    %3133 = vmatprep.subr.bf16.mxu0 0
    %3134 = vmatpush1.bf16.msra.mxu0 0
    %3135 = vmatprep.subr.bf16.mxu0 0
    %3136 = vmatpush1.bf16.msra.mxu0 0
    %3137 = vmatprep.subr.bf16.mxu0 0
    %3138 = vmatpush1.bf16.msra.mxu0 0
    %3139 = vmatprep.subr.bf16.mxu0 0
    %3140 = vmatpush1.bf16.msra.mxu0 0
    %3141 = vmatprep.subr.bf16.mxu0 0
    %3142 = vmatpush1.bf16.msra.mxu0 0
    %3143 = vmatprep.subr.bf16.mxu0 0
    %3144 = vmatpush1.bf16.msra.mxu0 0
    %3145 = vmatprep.subr.bf16.mxu0 0
    %3146 = vmatpush1.bf16.msra.mxu0 0
    %3147 = vmatprep.subr.bf16.mxu0 0
    %3148 = vmatpush1.bf16.msra.mxu0 0
    %3149 = vmatprep.mubr.bf16.mxu0 0
    %3150 = vmatmul.mubr.bf16.gmra.mrb[0].mxu0 %v3074
    %v3151 = vpop.f32.mrb[0].mxu0
    %v3152 = vadd.f32 0.0, %v3151
    %v3153 = vpop.f32.mrb[0].mxu0
    %v3154 = vadd.f32 0.0, %v3153
    %v3155 = vpop.f32.mrb[0].mxu0
    %v3156 = vpop.f32.mrb[0].mxu0
    %3157 = vdwg.mxu0
    %v3162 = vrot.slane %v3111, 1
    %v3163 = vrot.slane %v3113, 1
    %v3164 = vrot.slane %v3152, 1
    %v3165 = vrot.slane %v3154, 1
    %v3166 = vrot.slane %v3111, 2
    %v3167 = vrot.slane %v3113, 2
    %v3168 = vrot.slane %v3152, 2
    %v3169 = vrot.slane %v3154, 2
    %v3178 = vadd.f32 %v222, %v3162
    %v3179 = vadd.f32 %v223, %v3163
    %v3180 = vadd.f32 %v224, %v3164
    %v3181 = vadd.f32 %v225, %v3165
    %v3182 = vadd.f32 %v230, %v3166
    %v3183 = vadd.f32 %v231, %v3167
    %v3184 = vadd.f32 %v232, %v3168
    %v3185 = vadd.f32 %v233, %v3169
    %v3186 = vmul.f32 %v3178, 0.5
    %v3187 = vmul.f32 %v3182, 0.5
    %v3188 = vtanh.pop %v3186
    %v3189 = vtanh.pop %v3187
    %v3190 = vmul.f32 %v3188, 0.5
    %v3191 = vmul.f32 %v3189, 0.5
    %v3192 = vadd.f32 %v3190, 0.5
    %v3193 = vadd.f32 %v3191, 0.5
    %v3194 = vmul.f32 %v3179, 0.5
    %v3195 = vmul.f32 %v3183, 0.5
    %v3196 = vtanh.pop %v3194
    %v3197 = vtanh.pop %v3195
    %v3198 = vmul.f32 %v3196, 0.5
    %v3199 = vmul.f32 %v3197, 0.5
    %v3200 = vadd.f32 %v3198, 0.5
    %v3201 = vadd.f32 %v3199, 0.5
    %v3202 = vtanh.pop %v3180
    %v3203 = vtanh.pop %v3184
    %v3204 = vmul.f32 %v3181, 0.5
    %v3205 = vmul.f32 %v3185, 0.5
    %v3206 = vtanh.pop %v3204
    %v3207 = vtanh.pop %v3205
    %v3208 = vmul.f32 %v3206, 0.5
    %v3209 = vmul.f32 %v3207, 0.5
    %v3210 = vadd.f32 %v3208, 0.5
    %v3211 = vadd.f32 %v3209, 0.5
    %v3214 = vrot.slane %v3055, 7
    %v3215 = vrot.slane %v3056, 7
    %v3218 = vmul.f32 %v3200, %v3214
    %v3219 = vmul.f32 %v3201, %v3215
    %v3220 = vmul.f32 %v3192, %v3202
    %v3221 = vmul.f32 %v3193, %v3203
    %v3222 = vadd.f32 %v3218, %v3220
    %v3223 = vadd.f32 %v3219, %v3221
    %v3224 = vtanh.pop %v3222
    %v3225 = vtanh.pop %v3223
    %v3226 = vmul.f32 %v3210, %v3224
    %v3227 = vmul.f32 %v3211, %v3225
    %s3228 = sadd.s32 %s575, 15
    %p3229 = scmp.lt.s32.totalorder %s3228, 8
    %s3230 = scalar_select %p3229, 1, 0
    %v3231 = vstv %s3230
    %vm3232 = vcmp.eq.s32.totalorder %v3231, 1
    %v3233 = vsel %vm3232, %v3222, %v3214
    %v3234 = vsel %vm3232, %v3223, %v3215
    %v3237 = vrot.slane %v3063, 7
    %v3238 = vrot.slane %v3064, 7
    %v3241 = vsel %vm3232, %v3226, %v3237
    %v3242 = vsel %vm3232, %v3227, %v3238
    %v3245 = vrot.slane %v3242, 7
    %3248 = vst [vmem:[#allocation2 - $0x7] sm:$0x80] %v3241
    %3249 = vst [vmem:[#allocation2 + $0x1] sm:$0x1] %v3245
    %v3252 = vrot.slane %v3234, 7
    %3255 = vst [vmem:[#allocation3 - $0x7] sm:$0x80] %v3233
    %3256 = vst [vmem:[#allocation3 + $0x1] sm:$0x1] %v3252
    // Predicated region
    $region34: #{tpu_custom_call.1} parent=1 // pred_check
      %p3257 = pneg %p39
    $region35: #{tpu_custom_call.1} parent=1 // pred_check_branch
      %3259 = sbr.rel (%p3257) target = $region37
    $region36: #{tpu_custom_call.1} parent=1 // pred_region
      %v3260 = vpack.c.bf16 %v3241, %v3241
      %v3261 = vpack.c.bf16 %v3242, %v3242
      %v3262 = vld [vmem:[%s4] sm:$0xf]
      %v3263 = vld [vmem:[%s4 + $0x4] sm:$0xf]
      %v3264 = vld [vmem:[%s4 + $0x8] sm:$0xf]
      %v3265 = vld [vmem:[%s4 + $0xc] sm:$0xf]
      %v3266 = vld [vmem:[%s4 + $0x10] sm:$0xf]
      %v3267 = vld [vmem:[%s4 + $0x14] sm:$0xf]
      %v3268 = vld [vmem:[%s4 + $0x18] sm:$0xf]
      %v3269 = vld [vmem:[%s4 + $0x1c] sm:$0xf]
      %v3270 = vld [vmem:[%s4 + $0x20] sm:$0xf]
      %v3271 = vld [vmem:[%s4 + $0x24] sm:$0xf]
      %v3272 = vld [vmem:[%s4 + $0x28] sm:$0xf]
      %v3273 = vld [vmem:[%s4 + $0x2c] sm:$0xf]
      %v3274 = vld [vmem:[%s4 + $0x30] sm:$0xf]
      %v3275 = vld [vmem:[%s4 + $0x34] sm:$0xf]
      %v3276 = vld [vmem:[%s4 + $0x38] sm:$0xf]
      %v3277 = vld [vmem:[%s4 + $0x3c] sm:$0xf]
      %v3278 = vld [vmem:[%s5] sm:$0x1]
      %v3280 = vlaneseq
      %v3281 = vshrl.u32 %v3280, 7
      %v3282 = vsub.s32 0, %v3281
      %v3283 = vrot.slane %v3278, %v3282
      %v3287 = vunpack.c.l.b16 %v3260
      %v3288 = vunpack.c.l.b16 %v3261
      %v3289 = vrot.slane %v3287, 7
      %v3290 = vrot.slane %v3288, 6
      %v3291 = vsel %vm595, %v3290, %v3289
      %v3292 = vpack.c.b16 %v3291, %v3291
      %v3310 = vunpack.c.l.b16 %v3262
      %v3311 = vunpack.c.l.b16 %v3263
      %v3312 = vunpack.c.l.b16 %v3264
      %v3313 = vunpack.c.l.b16 %v3265
      %v3314 = vunpack.c.l.b16 %v3266
      %v3315 = vunpack.c.l.b16 %v3267
      %v3316 = vunpack.c.l.b16 %v3268
      %v3317 = vunpack.c.l.b16 %v3269
      %v3318 = vunpack.c.l.b16 %v3270
      %v3319 = vunpack.c.l.b16 %v3271
      %v3320 = vunpack.c.l.b16 %v3272
      %v3321 = vunpack.c.l.b16 %v3273
      %v3322 = vunpack.c.l.b16 %v3274
      %v3323 = vunpack.c.l.b16 %v3275
      %v3324 = vunpack.c.l.b16 %v3276
      %v3325 = vunpack.c.l.b16 %v3277
      %v3326 = vpack.c.b16 %v3311, %v3310
      %v3327 = vpack.c.b16 %v3313, %v3312
      %v3328 = vpack.c.b16 %v3315, %v3314
      %v3329 = vpack.c.b16 %v3317, %v3316
      %v3330 = vpack.c.b16 %v3319, %v3318
      %v3331 = vpack.c.b16 %v3321, %v3320
      %v3332 = vpack.c.b16 %v3323, %v3322
      %v3333 = vpack.c.b16 %v3325, %v3324
      %3342 = vmatprep.subr.bf16.mxu0 0
      %3343 = vmatpush1.bf16.msra.mxu0 %v3326
      %3344 = vmatprep.subr.bf16.mxu0 0
      %3345 = vmatpush1.bf16.msra.mxu0 %v3327
      %3346 = vmatprep.subr.bf16.mxu0 0
      %3347 = vmatpush1.bf16.msra.mxu0 %v3328
      %3348 = vmatprep.subr.bf16.mxu0 0
      %3349 = vmatpush1.bf16.msra.mxu0 %v3329
      %3350 = vmatprep.subr.bf16.mxu0 0
      %3351 = vmatpush1.bf16.msra.mxu0 %v3330
      %3352 = vmatprep.subr.bf16.mxu0 0
      %3353 = vmatpush1.bf16.msra.mxu0 %v3331
      %3354 = vmatprep.subr.bf16.mxu0 0
      %3355 = vmatpush1.bf16.msra.mxu0 %v3332
      %3356 = vmatprep.subr.bf16.mxu0 0
      %3357 = vmatpush1.bf16.msra.mxu0 %v3333
      %3358 = vmatprep.subr.bf16.mxu0 0
      %3359 = vmatpush1.bf16.msra.mxu0 0
      %3360 = vmatprep.subr.bf16.mxu0 0
      %3361 = vmatpush1.bf16.msra.mxu0 0
      %3362 = vmatprep.subr.bf16.mxu0 0
      %3363 = vmatpush1.bf16.msra.mxu0 0
      %3364 = vmatprep.subr.bf16.mxu0 0
      %3365 = vmatpush1.bf16.msra.mxu0 0
      %3366 = vmatprep.subr.bf16.mxu0 0
      %3367 = vmatpush1.bf16.msra.mxu0 0
      %3368 = vmatprep.subr.bf16.mxu0 0
      %3369 = vmatpush1.bf16.msra.mxu0 0
      %3370 = vmatprep.subr.bf16.mxu0 0
      %3371 = vmatpush1.bf16.msra.mxu0 0
      %3372 = vmatprep.subr.bf16.mxu0 0
      %3373 = vmatpush1.bf16.msra.mxu0 0
      %3374 = vmatprep.mubr.bf16.mxu0 0
      %3375 = vmatmul.mubr.bf16.gmra.mrb[0].mxu0 %v3292
      %v3376 = vpop.f32.mrb[0].mxu0
      %v3377 = vadd.f32 %v3283, %v3376
      %v3378 = vpop.f32.mrb[0].mxu0
      %v3379 = vpop.f32.mrb[0].mxu0
      %v3380 = vpop.f32.mrb[0].mxu0
      %3381 = vdwg.mxu0
      %v3382 = vmul.f32 %v3377, 0.5
      %v3383 = vtanh.pop %v3382
      %v3384 = vmul.f32 %v3383, 0.5
      %v3385 = vadd.f32 %v3384, 0.5
      %vm3386 = vcmask 25600
      %3387 = vst.msk [vmem:[#allocation7] sm:$0x3] %vm3386, %v3385
    $region37: #{tpu_custom_call.1} parent=1 // pred_fallthru
      _
    // Predicated region
    $region38: #{tpu_custom_call.1} parent=1 // pred_check
      _
    $region39: #{tpu_custom_call.1} parent=1 // pred_check_branch
      %3389 = sbr.rel (0) target = $region41
    $region40: #{tpu_custom_call.1} parent=1 // pred_region
      %s3391 = ssub.s32 32, 32
      %3392 = vsyncadd [#allocation6], %s3391
      %s3394 = sshll.u32 [#allocation7], 4
      %s3395 = int_to_ptr.vmem [resolvable:$true] %s3394
      %3397 = dma.vmem_to_hbm [thread:$0]  %s3395, 32, %s6, [#allocation6]
    $region41: #{tpu_custom_call.1} parent=1 // pred_fallthru
      _
    // Predicated region
    $region42: #{tpu_custom_call.1} parent=1 // pred_check
      _
    $region43: #{tpu_custom_call.1} parent=1 // pred_check_branch
      %3399 = sbr.rel (0) target = $region45
    $region44: #{tpu_custom_call.1} parent=1 // pred_region
      %3400 = dma.done [#allocation6], 32
    $region45: #{tpu_custom_call.1} parent=1 // pred_fallthru
      _
    %3401 = vsyncpa [#allocation5], 1
    %3402 = vsyncpa [#allocation6], 1

</llo_original>
